<compile_context>
chip_gen: v7x
topology: tpu7x:2x2x1
jax: 0.10.0
libtpu: 0.0.40
codegen_flags: <defaults>
</compile_context>

<pallas_src>
import functools

import jax
import jax.numpy as jnp
from jax.experimental import pallas as pl
from jax.experimental.pallas import tpu as pltpu

KSIZE = 7          # spatial-attention kernel size
PAD = KSIZE // 2   # = 3


# ---------------------------------------------------------------------------
# Generation-aware VMEM budgeting.
# ---------------------------------------------------------------------------
def _chip_vmem_bytes():
    try:
        info = pltpu.get_tpu_info()
        for name in ("vmem_capacity_bytes", "vmem_size_bytes", "vmem_bytes"):
            v = getattr(info, name, None)
            if v:
                return int(v)
    except Exception:
        pass
    return 0


def _budgets():
    """(per-block streaming budget, vmem_limit_bytes) for the current chip."""
    cap = _chip_vmem_bytes()
    if cap and cap > (64 << 20):        # v5e / v6e: 128 MiB VMEM per TensorCore
        return 12 << 20, 100 << 20
    if cap:                             # v7x-class: 64 MiB per TensorCore
        return 4 << 20, 48 << 20
    return 4 << 20, 32 << 20            # unknown chip: stay conservative


def _pick_tile_s(S, bytes_per_elem, budget):
    """Largest lane-dense (multiple-of-128) divisor of S whose streamed blocks fit."""
    if S % 128 != 0:
        # TODO(synk): add a C-splitting fallback for huge images with S % 128 != 0.
        return S
    cands = [t for t in range(128, S + 1, 128) if S % t == 0]
    fitting = [t for t in cands if t * bytes_per_elem <= budget]
    return max(fitting) if fitting else cands[0]


def _pick_tile_h(H, W, K, budget):
    """Largest multiple-of-8 divisor of H whose kernel-C working set fits."""
    if H % 8 != 0:
        return H
    resident = 4 * (2 * H * W + 2 * (H + 2 * PAD) * (W + 2 * PAD))  # maps + padded scratch
    per_row = 4 * 2 * 2 * K * W                                     # z in + out, double-buffered
    avail = max(budget - resident, 8 * per_row)
    cands = [t for t in range(8, H + 1, 8) if H % t == 0]
    fitting = [t for t in cands if t * per_row <= avail]
    return max(fitting) if fitting else 8


# ---------------------------------------------------------------------------
# Kernel A: global avg/max pool over S + shared MLP -> channel gate (N, C, 1).
#   grid = (N, S_tiles); the S axis is a reduction ("arbitrary", innermost).
# ---------------------------------------------------------------------------
def _pool_gate_kernel(x_ref, w1t_ref, w2t_ref, gate_ref, sum_sc, max_sc, *, inv_hw):
    s = pl.program_id(1)

    @pl.when(s == 0)
    def _():
        sum_sc[...] = jnp.zeros_like(sum_sc)
        max_sc[...] = jnp.full_like(max_sc, -jnp.inf)

    blk = x_ref[0]                                                    # (C, tile_s)
    sum_sc[...] = sum_sc[...] + jnp.sum(blk, axis=1, keepdims=True)   # (C, 1)
    max_sc[...] = jnp.maximum(max_sc[...], jnp.max(blk, axis=1, keepdims=True))

    @pl.when(s == pl.num_programs(1) - 1)
    def _():
        avg_col = sum_sc[...] * inv_hw                                # (C, 1)
        max_col = max_sc[...]                                         # (C, 1)
        w1t = w1t_ref[...]                                            # (R, C)
        w2t = w2t_ref[...]                                            # (C, R)

        def mlp(col):
            hid = jnp.maximum(
                jnp.dot(w1t, col, preferred_element_type=jnp.float32), 0.0)
            return jnp.dot(w2t, hid, preferred_element_type=jnp.float32)

        gate_ref[0] = jax.nn.sigmoid(mlp(avg_col) + mlp(max_col))     # (C, 1)


def pool_gate(x3, w1t, w2t, tile_s, vmem_limit):
    N, C, S = x3.shape
    R = w1t.shape[0]
    n_s = S // tile_s
    kern = functools.partial(_pool_gate_kernel, inv_hw=1.0 / float(S))
    return pl.pallas_call(
        kern,
        out_shape=jax.ShapeDtypeStruct((N, C, 1), jnp.float32),
        grid=(N, n_s),
        in_specs=[
            pl.BlockSpec((1, C, tile_s), lambda n, s: (n, 0, s)),
            pl.BlockSpec((R, C), lambda n, s: (0, 0)),
            pl.BlockSpec((C, R), lambda n, s: (0, 0)),
        ],
        out_specs=pl.BlockSpec((1, C, 1), lambda n, s: (n, 0, 0)),
        scratch_shapes=[pltpu.VMEM((C, 1), jnp.float32),
                        pltpu.VMEM((C, 1), jnp.float32)],
        compiler_params=pltpu.CompilerParams(
            dimension_semantics=("parallel", "arbitrary"),
            vmem_limit_bytes=vmem_limit),
    )(x3, w1t, w2t)


# ---------------------------------------------------------------------------
# Kernel B: apply channel gate (VMEM only), emit channel-mean / channel-max maps
#           and the 1x1 OutConv projection z = out_w^T @ x_ca (MXU).
# ---------------------------------------------------------------------------
def _gate_maps_proj_kernel(gate_ref, owt_ref, x_ref, avg_ref, max_ref, z_ref, *, inv_c):
    xg = x_ref[0] * gate_ref[0]                                       # (C, tile_s), never hits HBM
    avg_ref[0] = jnp.sum(xg, axis=0, keepdims=True) * inv_c           # (1, tile_s)
    max_ref[0] = jnp.max(xg, axis=0, keepdims=True)                   # (1, tile_s)
    z_ref[0] = jnp.dot(owt_ref[...], xg,                              # (K, tile_s) on the MXU
                       preferred_element_type=jnp.float32)


def gate_maps_proj(x3, gate, out_wt, tile_s, vmem_limit):
    N, C, S = x3.shape
    K = out_wt.shape[0]
    n_s = S // tile_s
    kern = functools.partial(_gate_maps_proj_kernel, inv_c=1.0 / float(C))
    return pl.pallas_call(
        kern,
        out_shape=(jax.ShapeDtypeStruct((N, 1, S), jnp.float32),
                   jax.ShapeDtypeStruct((N, 1, S), jnp.float32),
                   jax.ShapeDtypeStruct((N, K, S), jnp.float32)),
        grid=(N, n_s),
        in_specs=[
            pl.BlockSpec((1, C, 1), lambda n, s: (n, 0, 0)),          # gate, resident per batch
            pl.BlockSpec((K, C), lambda n, s: (0, 0)),                # out_w^T, resident
            pl.BlockSpec((1, C, tile_s), lambda n, s: (n, 0, s)),
        ],
        out_specs=(
            pl.BlockSpec((1, 1, tile_s), lambda n, s: (n, 0, s)),
            pl.BlockSpec((1, 1, tile_s), lambda n, s: (n, 0, s)),
            pl.BlockSpec((1, K, tile_s), lambda n, s: (n, 0, s)),
        ),
        compiler_params=pltpu.CompilerParams(
            dimension_semantics=("parallel", "parallel"),
            vmem_limit_bytes=vmem_limit),
    )(gate, out_wt, x3)


# ---------------------------------------------------------------------------
# Kernel C: 7x7 spatial attention (zero halo built in VMEM scratch, no HBM pad
#           round-trip) + fused OutConv epilogue, writing NCHW output directly.
# ---------------------------------------------------------------------------
def _spatial_outconv_kernel(sa_w_ref, b_ref, z_ref, avg_ref, max_ref, o_ref,
                            pavg_sc, pmax_sc):
    h = pl.program_id(1)
    K = o_ref.shape[1]
    tile_h, W = o_ref.shape[2], o_ref.shape[3]
    H = avg_ref.shape[1]

    # Build the zero-padded maps once per batch element (h axis is "arbitrary",
    # so h == 0 always runs first for each n on its core).
    @pl.when(h == 0)
    def _():
        pavg_sc[...] = jnp.zeros_like(pavg_sc)
        pmax_sc[...] = jnp.zeros_like(pmax_sc)
        pavg_sc[PAD:PAD + H, PAD:PAD + W] = avg_ref[0]
        pmax_sc[PAD:PAD + H, PAD:PAD + W] = max_ref[0]

    row0 = h * tile_h
    if tile_h % 8 == 0:
        row0 = pl.multiple_of(row0, 8)
    win_h = tile_h + 2 * PAD

    # dw (lane offset) outer: only 7 lane-shifted window loads per map; inner dh
    # slices are sublane-only.  Two independent accumulators (one per map).
    acc_a = jnp.zeros((tile_h, W), jnp.float32)
    acc_m = jnp.zeros((tile_h, W), jnp.float32)
    for dw in range(KSIZE):
        wa = pavg_sc[pl.ds(row0, win_h), dw:dw + W]                   # (tile_h+6, W)
        wm = pmax_sc[pl.ds(row0, win_h), dw:dw + W]
        for dh in range(KSIZE):
            acc_a = acc_a + sa_w_ref[(dh * KSIZE + dw) * 2 + 0] * wa[dh:dh + tile_h, :]
            acc_m = acc_m + sa_w_ref[(dh * KSIZE + dw) * 2 + 1] * wm[dh:dh + tile_h, :]

    sa = jax.nn.sigmoid(acc_a + acc_m)                                # spatial gate (tile_h, W)
    for k in range(K):
        o_ref[0, k] = jax.nn.sigmoid(sa * z_ref[0, k] + b_ref[k])


def spatial_outconv(z, avg_map, max_map, sa_w, out_b, tile_h, vmem_limit):
    N, K, H, W = z.shape
    n_h = H // tile_h
    return pl.pallas_call(
        _spatial_outconv_kernel,
        out_shape=jax.ShapeDtypeStruct((N, K, H, W), jnp.float32),
        grid=(N, n_h),
        in_specs=[
            pl.BlockSpec(memory_space=pltpu.MemorySpace.SMEM),        # sa_w (7*7*2,)
            pl.BlockSpec(memory_space=pltpu.MemorySpace.SMEM),        # out_b (K,)
            pl.BlockSpec((1, K, tile_h, W), lambda n, h: (n, 0, h, 0)),
            pl.BlockSpec((1, H, W), lambda n, h: (n, 0, 0)),          # unpadded avg map, resident
            pl.BlockSpec((1, H, W), lambda n, h: (n, 0, 0)),          # unpadded max map, resident
        ],
        out_specs=pl.BlockSpec((1, K, tile_h, W), lambda n, h: (n, 0, h, 0)),
        scratch_shapes=[pltpu.VMEM((H + 2 * PAD, W + 2 * PAD), jnp.float32),
                        pltpu.VMEM((H + 2 * PAD, W + 2 * PAD), jnp.float32)],
        compiler_params=pltpu.CompilerParams(
            dimension_semantics=("parallel", "arbitrary"),
            vmem_limit_bytes=vmem_limit),
    )(sa_w, out_b, z, avg_map, max_map)


# ---------------------------------------------------------------------------
# Full AttNet forward (NCHW in, NCHW out; no wrapper transposes of x).
# ---------------------------------------------------------------------------
@jax.jit
def attnet_forward(x_nchw, params):
    x = x_nchw.astype(jnp.float32)
    N, C, H, W = x.shape
    S = H * W
    K = params["out_w"].shape[1]
    budget, vmem_limit = _budgets()

    tile_s = _pick_tile_s(S, 8 * (C + K + 2), budget)
    x3 = x.reshape(N, C, S)                                           # free view of contiguous NCHW

    gate = pool_gate(x3, params["ca_w1t"], params["ca_w2t"], tile_s, vmem_limit)   # (N, C, 1)
    out_wt = jnp.transpose(params["out_w"])                           # (K, C), tiny
    avg_s, max_s, z_s = gate_maps_proj(x3, gate, out_wt, tile_s, vmem_limit)

    avg_map = avg_s.reshape(N, H, W)                                  # free metadata reshapes
    max_map = max_s.reshape(N, H, W)
    z = z_s.reshape(N, K, H, W)

    tile_h = _pick_tile_h(H, W, K, budget)
    return spatial_outconv(z, avg_map, max_map, params["sa_w"], params["out_b"],
                           tile_h, vmem_limit)


# ---------------------------------------------------------------------------
# Pure-JAX reference (same math, XLA ops) for a sanity check.
# ---------------------------------------------------------------------------
def _reference(x_nchw, p):
    x = jnp.transpose(x_nchw, (0, 2, 3, 1)).astype(jnp.float32)       # NHWC
    avg = jnp.mean(x, axis=(1, 2))
    mx = jnp.max(x, axis=(1, 2))

    def mlp(v):
        return jnp.maximum(v @ p["ca_w1t"].T, 0.0) @ p["ca_w2t"].T

    ca = jax.nn.sigmoid(mlp(avg) + mlp(mx))
    x_ca = x * ca[:, None, None, :]
    maps = jnp.concatenate(
        [jnp.mean(x_ca, axis=3, keepdims=True), jnp.max(x_ca, axis=3, keepdims=True)],
        axis=3)
    w = p["sa_w"].reshape(KSIZE, KSIZE, 2, 1)                         # HWIO
    sa_lin = jax.lax.conv_general_dilated(
        maps, w, (1, 1), "SAME", dimension_numbers=("NHWC", "HWIO", "NHWC"))
    x_sa = x_ca * jax.nn.sigmoid(sa_lin)
    out = jax.nn.sigmoid(jnp.einsum("nhwc,ck->nhwk", x_sa, p["out_w"]) + p["out_b"])
    return jnp.transpose(out, (0, 3, 1, 2))


if __name__ == "__main__":
    # Small shapes: batch=2, n_channels=16 (so the CBAM reduction ratio=4 is
    # non-trivial), spatial=16x16, n_classes=1.
    N, C, H, W = 2, 16, 16, 16
    R = 4            # channel-attention reduction ratio
    K_CLS = 1        # n_classes

    key = jax.random.PRNGKey(0)
    k0, k1, k2, k3, k4, k5 = jax.random.split(key, 6)
    params = {
        # ChannelAttention fc1/fc2 (1x1 convs, bias=False), stored pre-transposed
        # for column-oriented MLP inside the kernel: w1t (R, C), w2t (C, R).
        "ca_w1t": 0.2 * jax.random.normal(k0, (R, C), jnp.float32),
        "ca_w2t": 0.2 * jax.random.normal(k1, (C, R), jnp.float32),
        # SpatialAttention 7x7 conv (1,2,7,7) bias=False -> flat (7,7,2) scalar table.
        "sa_w": (0.2 * jax.random.normal(k2, (KSIZE, KSIZE, 2), jnp.float32)).reshape(-1),
        # OutConv 1x1 conv (bias=True).
        "out_w": 0.2 * jax.random.normal(k3, (C, K_CLS), jnp.float32),
        "out_b": 0.05 * jax.random.normal(k4, (K_CLS,), jnp.float32),
    }
    x = jax.random.normal(k5, (N, C, H, W), jnp.float32)              # PyTorch NCHW input

    out = attnet_forward(x, params)
    out = jax.block_until_ready(out)

    assert out.shape == (N, K_CLS, H, W), out.shape
    ref = _reference(x, params)
    assert float(jnp.max(jnp.abs(out - ref))) < 1e-3

    print("KERNEL_OK")
</pallas_src>

<mosaic_0001>
module attributes {stable_mosaic.version = 11 : i64} {
  func.func @_pool_gate_kernel(%arg0: i32, %arg1: i32, %arg2: memref<1x16x256xf32, #tpu.memory_space<vmem>>, %arg3: memref<4x16xf32, #tpu.memory_space<vmem>>, %arg4: memref<16x4xf32, #tpu.memory_space<vmem>>, %arg5: memref<1x16x1xf32, #tpu.memory_space<vmem>>, %arg6: memref<16x1xf32, #tpu.memory_space<vmem>>, %arg7: memref<16x1xf32, #tpu.memory_space<vmem>>) attributes {dimension_semantics = [#tpu.dimension_semantics<parallel>, #tpu.dimension_semantics<arbitrary>], iteration_bounds = array<i64: 2, 1>, scalar_prefetch = 0 : i64, scratch_operands = 2 : i64, tpu.core_type = #tpu.core_type<tc>, window_params = [{transform_indices = @transform_0, window_bounds = array<i64: 1, 16, 256>}, {pipeline_mode = #tpu.pipeline_mode<synchronous>, transform_indices = @transform_1, window_bounds = array<i64: 4, 16>}, {pipeline_mode = #tpu.pipeline_mode<synchronous>, transform_indices = @transform_2, window_bounds = array<i64: 16, 4>}, {transform_indices = @transform_3, window_bounds = array<i64: 1, 16, 1>}]} {
    %c0_i32 = arith.constant 0 : i32
    %0 = arith.cmpi eq, %arg1, %c0_i32 : i32
    %1 = arith.extui %0 : i1 to i32
    %c0_i32_0 = arith.constant 0 : i32
    %2 = arith.cmpi ne, %1, %c0_i32_0 : i32
    scf.if %2 {
      %cst_14 = arith.constant 0.000000e+00 : f32
      %18 = vector.broadcast %cst_14 : f32 to vector<16x1xf32>
      %c0_15 = arith.constant 0 : index
      %c0_16 = arith.constant 0 : index
      %19 = vector.load %arg6[%c0_15, %c0_16] : memref<16x1xf32, #tpu.memory_space<vmem>>, vector<16x1xf32>
      tpu.vector_store %arg6[%c0_15, %c0_16], %18 {strides = array<i32>} : memref<16x1xf32, #tpu.memory_space<vmem>>, vector<16x1xf32>,
      %cst_17 = arith.constant 0xFF800000 : f32
      %20 = vector.broadcast %cst_17 : f32 to vector<16x1xf32>
      %c0_18 = arith.constant 0 : index
      %c0_19 = arith.constant 0 : index
      %21 = vector.load %arg7[%c0_18, %c0_19] : memref<16x1xf32, #tpu.memory_space<vmem>>, vector<16x1xf32>
      tpu.vector_store %arg7[%c0_18, %c0_19], %20 {strides = array<i32>} : memref<16x1xf32, #tpu.memory_space<vmem>>, vector<16x1xf32>,
    } else {
    }
    %c0 = arith.constant 0 : index
    %c0_1 = arith.constant 0 : index
    %c0_2 = arith.constant 0 : index
    %3 = vector.load %arg2[%c0, %c0_1, %c0_2] : memref<1x16x256xf32, #tpu.memory_space<vmem>>, vector<1x16x256xf32>
    %4 = vector.shape_cast %3 : vector<1x16x256xf32> to vector<16x256xf32>
    %c0_3 = arith.constant 0 : index
    %c0_4 = arith.constant 0 : index
    %5 = vector.load %arg6[%c0_3, %c0_4] : memref<16x1xf32, #tpu.memory_space<vmem>>, vector<16x1xf32>
    %cst = arith.constant dense<0.000000e+00> : vector<16xf32>
    %6 = vector.multi_reduction <add>, %4, %cst [1] : vector<16x256xf32> to vector<16xf32>
    %7 = vector.shape_cast %6 : vector<16xf32> to vector<16x1xf32>
    %8 = arith.addf %5, %7 : vector<16x1xf32>
    %c0_5 = arith.constant 0 : index
    %c0_6 = arith.constant 0 : index
    %9 = vector.load %arg6[%c0_5, %c0_6] : memref<16x1xf32, #tpu.memory_space<vmem>>, vector<16x1xf32>
    tpu.vector_store %arg6[%c0_5, %c0_6], %8 {strides = array<i32>} : memref<16x1xf32, #tpu.memory_space<vmem>>, vector<16x1xf32>,
    %c0_7 = arith.constant 0 : index
    %c0_8 = arith.constant 0 : index
    %10 = vector.load %arg7[%c0_7, %c0_8] : memref<16x1xf32, #tpu.memory_space<vmem>>, vector<16x1xf32>
    %cst_9 = arith.constant dense<0xFF800000> : vector<16xf32>
    %11 = vector.multi_reduction <maximumf>, %4, %cst_9 [1] : vector<16x256xf32> to vector<16xf32>
    %12 = vector.shape_cast %11 : vector<16xf32> to vector<16x1xf32>
    %13 = arith.maximumf %10, %12 : vector<16x1xf32>
    %c0_10 = arith.constant 0 : index
    %c0_11 = arith.constant 0 : index
    %14 = vector.load %arg7[%c0_10, %c0_11] : memref<16x1xf32, #tpu.memory_space<vmem>>, vector<16x1xf32>
    tpu.vector_store %arg7[%c0_10, %c0_11], %13 {strides = array<i32>} : memref<16x1xf32, #tpu.memory_space<vmem>>, vector<16x1xf32>,
    %c0_i32_12 = arith.constant 0 : i32
    %15 = arith.cmpi eq, %arg1, %c0_i32_12 : i32
    %16 = arith.extui %15 : i1 to i32
    %c0_i32_13 = arith.constant 0 : i32
    %17 = arith.cmpi ne, %16, %c0_i32_13 : i32
    scf.if %17 {
      %c0_14 = arith.constant 0 : index
      %c0_15 = arith.constant 0 : index
      %18 = vector.load %arg6[%c0_14, %c0_15] : memref<16x1xf32, #tpu.memory_space<vmem>>, vector<16x1xf32>
      %cst_16 = arith.constant 3.906250e-03 : f32
      %19 = vector.broadcast %cst_16 : f32 to vector<16x1xf32>
      %20 = arith.mulf %18, %19 : vector<16x1xf32>
      %c0_17 = arith.constant 0 : index
      %c0_18 = arith.constant 0 : index
      %21 = vector.load %arg7[%c0_17, %c0_18] : memref<16x1xf32, #tpu.memory_space<vmem>>, vector<16x1xf32>
      %c0_19 = arith.constant 0 : index
      %c0_20 = arith.constant 0 : index
      %22 = vector.load %arg3[%c0_19, %c0_20] : memref<4x16xf32, #tpu.memory_space<vmem>>, vector<4x16xf32>
      %c0_21 = arith.constant 0 : index
      %c0_22 = arith.constant 0 : index
      %23 = vector.load %arg4[%c0_21, %c0_22] : memref<16x4xf32, #tpu.memory_space<vmem>>, vector<16x4xf32>
      %cst_23 = arith.constant dense<0.000000e+00> : vector<4x1xf32>
      %24 = tpu.matmul %22, %20, %cst_23 {dimension_numbers = #tpu.dot_dimension_numbers<[1], [0], [0], [1], [0, 0, 1, 1], [], []>} : vector<4x16xf32>, vector<16x1xf32>, vector<4x1xf32> -> vector<4x1xf32>
      %cst_24 = arith.constant 0.000000e+00 : f32
      %25 = vector.broadcast %cst_24 : f32 to vector<4x1xf32>
      %26 = arith.maximumf %24, %25 : vector<4x1xf32>
      %cst_25 = arith.constant dense<0.000000e+00> : vector<16x1xf32>
      %27 = tpu.matmul %23, %26, %cst_25 {dimension_numbers = #tpu.dot_dimension_numbers<[1], [0], [0], [1], [0, 0, 1, 1], [], []>} : vector<16x4xf32>, vector<4x1xf32>, vector<16x1xf32> -> vector<16x1xf32>
      %cst_26 = arith.constant dense<0.000000e+00> : vector<4x1xf32>
      %28 = tpu.matmul %22, %21, %cst_26 {dimension_numbers = #tpu.dot_dimension_numbers<[1], [0], [0], [1], [0, 0, 1, 1], [], []>} : vector<4x16xf32>, vector<16x1xf32>, vector<4x1xf32> -> vector<4x1xf32>
      %cst_27 = arith.constant 0.000000e+00 : f32
      %29 = vector.broadcast %cst_27 : f32 to vector<4x1xf32>
      %30 = arith.maximumf %28, %29 : vector<4x1xf32>
      %cst_28 = arith.constant dense<0.000000e+00> : vector<16x1xf32>
      %31 = tpu.matmul %23, %30, %cst_28 {dimension_numbers = #tpu.dot_dimension_numbers<[1], [0], [0], [1], [0, 0, 1, 1], [], []>} : vector<16x4xf32>, vector<4x1xf32>, vector<16x1xf32> -> vector<16x1xf32>
      %32 = arith.addf %27, %31 : vector<16x1xf32>
      %33 = arith.negf %32 : vector<16x1xf32>
      %34 = math.exp %33 : vector<16x1xf32>
      %cst_29 = arith.constant 1.000000e+00 : f32
      %35 = vector.broadcast %cst_29 : f32 to vector<16x1xf32>
      %36 = arith.addf %35, %34 : vector<16x1xf32>
      %37 = arith.divf %35, %36 : vector<16x1xf32>
      %c0_30 = arith.constant 0 : index
      %c0_31 = arith.constant 0 : index
      %c0_32 = arith.constant 0 : index
      %38 = vector.load %arg5[%c0_30, %c0_31, %c0_32] : memref<1x16x1xf32, #tpu.memory_space<vmem>>, vector<1x16x1xf32>
      %39 = vector.shape_cast %38 : vector<1x16x1xf32> to vector<16x1xf32>
      %40 = vector.shape_cast %37 : vector<16x1xf32> to vector<1x16x1xf32>
      tpu.vector_store %arg5[%c0_30, %c0_31, %c0_32], %40 {strides = array<i32>} : memref<1x16x1xf32, #tpu.memory_space<vmem>>, vector<1x16x1xf32>,
    } else {
    }
    return
  }
  func.func @transform_0(%arg0: i32, %arg1: i32) -> (i32, i32, i32) {
    %c0_i32 = arith.constant 0 : i32
    %c0_i32_0 = arith.constant 0 : i32
    return %arg0, %c0_i32, %arg1 : i32, i32, i32
  }
  func.func @transform_1(%arg0: i32, %arg1: i32) -> (i32, i32) {
    %c0_i32 = arith.constant 0 : i32
    %c0_i32_0 = arith.constant 0 : i32
    %c0_i32_1 = arith.constant 0 : i32
    return %c0_i32, %c0_i32_0 : i32, i32
  }
  func.func @transform_2(%arg0: i32, %arg1: i32) -> (i32, i32) {
    %c0_i32 = arith.constant 0 : i32
    %c0_i32_0 = arith.constant 0 : i32
    %c0_i32_1 = arith.constant 0 : i32
    return %c0_i32, %c0_i32_0 : i32, i32
  }
  func.func @transform_3(%arg0: i32, %arg1: i32) -> (i32, i32, i32) {
    %c0_i32 = arith.constant 0 : i32
    %c0_i32_0 = arith.constant 0 : i32
    %c0_i32_1 = arith.constant 0 : i32
    return %arg0, %c0_i32, %c0_i32_0 : i32, i32, i32
  }
}

module attributes {stable_mosaic.version = 11 : i64} {
  func.func @_gate_maps_proj_kernel(%arg0: i32, %arg1: i32, %arg2: memref<1x16x1xf32, #tpu.memory_space<vmem>>, %arg3: memref<1x16xf32, #tpu.memory_space<vmem>>, %arg4: memref<1x16x256xf32, #tpu.memory_space<vmem>>, %arg5: memref<1x1x256xf32, #tpu.memory_space<vmem>>, %arg6: memref<1x1x256xf32, #tpu.memory_space<vmem>>, %arg7: memref<1x1x256xf32, #tpu.memory_space<vmem>>) attributes {dimension_semantics = [#tpu.dimension_semantics<parallel>, #tpu.dimension_semantics<parallel>], iteration_bounds = array<i64: 2, 1>, scalar_prefetch = 0 : i64, scratch_operands = 0 : i64, tpu.core_type = #tpu.core_type<tc>, window_params = [{transform_indices = @transform_0, window_bounds = array<i64: 1, 16, 1>}, {pipeline_mode = #tpu.pipeline_mode<synchronous>, transform_indices = @transform_1, window_bounds = array<i64: 1, 16>}, {transform_indices = @transform_2, window_bounds = array<i64: 1, 16, 256>}, {transform_indices = @transform_3, window_bounds = array<i64: 1, 1, 256>}, {transform_indices = @transform_4, window_bounds = array<i64: 1, 1, 256>}, {transform_indices = @transform_5, window_bounds = array<i64: 1, 1, 256>}]} {
    %c0 = arith.constant 0 : index
    %c0_0 = arith.constant 0 : index
    %c0_1 = arith.constant 0 : index
    %0 = vector.load %arg4[%c0, %c0_0, %c0_1] : memref<1x16x256xf32, #tpu.memory_space<vmem>>, vector<1x16x256xf32>
    %1 = vector.shape_cast %0 : vector<1x16x256xf32> to vector<16x256xf32>
    %c0_2 = arith.constant 0 : index
    %c0_3 = arith.constant 0 : index
    %c0_4 = arith.constant 0 : index
    %2 = vector.load %arg2[%c0_2, %c0_3, %c0_4] : memref<1x16x1xf32, #tpu.memory_space<vmem>>, vector<1x16x1xf32>
    %3 = vector.shape_cast %2 : vector<1x16x1xf32> to vector<16x1xf32>
    %4 = vector.broadcast %3 : vector<16x1xf32> to vector<16x256xf32>
    %5 = arith.mulf %1, %4 : vector<16x256xf32>
    %cst = arith.constant dense<0.000000e+00> : vector<256xf32>
    %6 = vector.multi_reduction <add>, %5, %cst [0] : vector<16x256xf32> to vector<256xf32>
    %7 = vector.shape_cast %6 : vector<256xf32> to vector<1x256xf32>
    %cst_5 = arith.constant 6.250000e-02 : f32
    %8 = vector.broadcast %cst_5 : f32 to vector<1x256xf32>
    %9 = arith.mulf %7, %8 : vector<1x256xf32>
    %c0_6 = arith.constant 0 : index
    %c0_7 = arith.constant 0 : index
    %c0_8 = arith.constant 0 : index
    %10 = vector.load %arg5[%c0_6, %c0_7, %c0_8] : memref<1x1x256xf32, #tpu.memory_space<vmem>>, vector<1x1x256xf32>
    %11 = vector.shape_cast %10 : vector<1x1x256xf32> to vector<1x256xf32>
    %12 = vector.shape_cast %9 : vector<1x256xf32> to vector<1x1x256xf32>
    tpu.vector_store %arg5[%c0_6, %c0_7, %c0_8], %12 {strides = array<i32>} : memref<1x1x256xf32, #tpu.memory_space<vmem>>, vector<1x1x256xf32>,
    %cst_9 = arith.constant dense<0xFF800000> : vector<256xf32>
    %13 = vector.multi_reduction <maximumf>, %5, %cst_9 [0] : vector<16x256xf32> to vector<256xf32>
    %14 = vector.shape_cast %13 : vector<256xf32> to vector<1x256xf32>
    %c0_10 = arith.constant 0 : index
    %c0_11 = arith.constant 0 : index
    %c0_12 = arith.constant 0 : index
    %15 = vector.load %arg6[%c0_10, %c0_11, %c0_12] : memref<1x1x256xf32, #tpu.memory_space<vmem>>, vector<1x1x256xf32>
    %16 = vector.shape_cast %15 : vector<1x1x256xf32> to vector<1x256xf32>
    %17 = vector.shape_cast %14 : vector<1x256xf32> to vector<1x1x256xf32>
    tpu.vector_store %arg6[%c0_10, %c0_11, %c0_12], %17 {strides = array<i32>} : memref<1x1x256xf32, #tpu.memory_space<vmem>>, vector<1x1x256xf32>,
    %c0_13 = arith.constant 0 : index
    %c0_14 = arith.constant 0 : index
    %18 = vector.load %arg3[%c0_13, %c0_14] : memref<1x16xf32, #tpu.memory_space<vmem>>, vector<1x16xf32>
    %cst_15 = arith.constant dense<0.000000e+00> : vector<1x256xf32>
    %19 = tpu.matmul %18, %5, %cst_15 {dimension_numbers = #tpu.dot_dimension_numbers<[1], [0], [0], [1], [0, 0, 1, 1], [], []>} : vector<1x16xf32>, vector<16x256xf32>, vector<1x256xf32> -> vector<1x256xf32>
    %c0_16 = arith.constant 0 : index
    %c0_17 = arith.constant 0 : index
    %c0_18 = arith.constant 0 : index
    %20 = vector.load %arg7[%c0_16, %c0_17, %c0_18] : memref<1x1x256xf32, #tpu.memory_space<vmem>>, vector<1x1x256xf32>
    %21 = vector.shape_cast %20 : vector<1x1x256xf32> to vector<1x256xf32>
    %22 = vector.shape_cast %19 : vector<1x256xf32> to vector<1x1x256xf32>
    tpu.vector_store %arg7[%c0_16, %c0_17, %c0_18], %22 {strides = array<i32>} : memref<1x1x256xf32, #tpu.memory_space<vmem>>, vector<1x1x256xf32>,
    return
  }
  func.func @transform_0(%arg0: i32, %arg1: i32) -> (i32, i32, i32) {
    %c0_i32 = arith.constant 0 : i32
    %c0_i32_0 = arith.constant 0 : i32
    %c0_i32_1 = arith.constant 0 : i32
    return %arg0, %c0_i32, %c0_i32_0 : i32, i32, i32
  }
  func.func @transform_1(%arg0: i32, %arg1: i32) -> (i32, i32) {
    %c0_i32 = arith.constant 0 : i32
    %c0_i32_0 = arith.constant 0 : i32
    %c0_i32_1 = arith.constant 0 : i32
    return %c0_i32, %c0_i32_0 : i32, i32
  }
  func.func @transform_2(%arg0: i32, %arg1: i32) -> (i32, i32, i32) {
    %c0_i32 = arith.constant 0 : i32
    %c0_i32_0 = arith.constant 0 : i32
    return %arg0, %c0_i32, %arg1 : i32, i32, i32
  }
  func.func @transform_3(%arg0: i32, %arg1: i32) -> (i32, i32, i32) {
    %c0_i32 = arith.constant 0 : i32
    %c0_i32_0 = arith.constant 0 : i32
    return %arg0, %c0_i32, %arg1 : i32, i32, i32
  }
  func.func @transform_4(%arg0: i32, %arg1: i32) -> (i32, i32, i32) {
    %c0_i32 = arith.constant 0 : i32
    %c0_i32_0 = arith.constant 0 : i32
    return %arg0, %c0_i32, %arg1 : i32, i32, i32
  }
  func.func @transform_5(%arg0: i32, %arg1: i32) -> (i32, i32, i32) {
    %c0_i32 = arith.constant 0 : i32
    %c0_i32_0 = arith.constant 0 : i32
    return %arg0, %c0_i32, %arg1 : i32, i32, i32
  }
}

module attributes {stable_mosaic.version = 11 : i64} {
  func.func @_spatial_outconv_kernel(%arg0: i32, %arg1: i32, %arg2: memref<98xf32, #tpu.memory_space<smem>>, %arg3: memref<1xf32, #tpu.memory_space<smem>>, %arg4: memref<1x1x16x16xf32, #tpu.memory_space<vmem>>, %arg5: memref<1x16x16xf32, #tpu.memory_space<vmem>>, %arg6: memref<1x16x16xf32, #tpu.memory_space<vmem>>, %arg7: memref<1x1x16x16xf32, #tpu.memory_space<vmem>>, %arg8: memref<22x22xf32, #tpu.memory_space<vmem>>, %arg9: memref<22x22xf32, #tpu.memory_space<vmem>>) attributes {dimension_semantics = [#tpu.dimension_semantics<parallel>, #tpu.dimension_semantics<arbitrary>], iteration_bounds = array<i64: 2, 1>, scalar_prefetch = 0 : i64, scratch_operands = 2 : i64, tpu.core_type = #tpu.core_type<tc>, window_params = [{transform_indices = @transform_0, window_bounds = array<i64: 98>}, {transform_indices = @transform_1, window_bounds = array<i64: 1>}, {transform_indices = @transform_2, window_bounds = array<i64: 1, 1, 16, 16>}, {transform_indices = @transform_3, window_bounds = array<i64: 1, 16, 16>}, {transform_indices = @transform_4, window_bounds = array<i64: 1, 16, 16>}, {transform_indices = @transform_5, window_bounds = array<i64: 1, 1, 16, 16>}]} {
    %c0_i32 = arith.constant 0 : i32
    %0 = arith.cmpi eq, %arg1, %c0_i32 : i32
    %1 = arith.extui %0 : i1 to i32
    %c0_i32_0 = arith.constant 0 : i32
    %2 = arith.cmpi ne, %1, %c0_i32_0 : i32
    scf.if %2 {
      %cst_27 = arith.constant 0.000000e+00 : f32
      %545 = vector.broadcast %cst_27 : f32 to vector<22x22xf32>
      %c0_28 = arith.constant 0 : index
      %c0_29 = arith.constant 0 : index
      %546 = vector.load %arg8[%c0_28, %c0_29] : memref<22x22xf32, #tpu.memory_space<vmem>>, vector<22x22xf32>
      tpu.vector_store %arg8[%c0_28, %c0_29], %545 {strides = array<i32>} : memref<22x22xf32, #tpu.memory_space<vmem>>, vector<22x22xf32>,
      %cst_30 = arith.constant 0.000000e+00 : f32
      %547 = vector.broadcast %cst_30 : f32 to vector<22x22xf32>
      %c0_31 = arith.constant 0 : index
      %c0_32 = arith.constant 0 : index
      %548 = vector.load %arg9[%c0_31, %c0_32] : memref<22x22xf32, #tpu.memory_space<vmem>>, vector<22x22xf32>
      tpu.vector_store %arg9[%c0_31, %c0_32], %547 {strides = array<i32>} : memref<22x22xf32, #tpu.memory_space<vmem>>, vector<22x22xf32>,
      %c0_33 = arith.constant 0 : index
      %c0_34 = arith.constant 0 : index
      %c0_35 = arith.constant 0 : index
      %549 = vector.load %arg5[%c0_33, %c0_34, %c0_35] : memref<1x16x16xf32, #tpu.memory_space<vmem>>, vector<1x16x16xf32>
      %550 = vector.shape_cast %549 : vector<1x16x16xf32> to vector<16x16xf32>
      %c3_36 = arith.constant 3 : index
      %c3_37 = arith.constant 3 : index
      %551 = vector.load %arg8[%c3_36, %c3_37] : memref<22x22xf32, #tpu.memory_space<vmem>>, vector<16x16xf32>
      tpu.vector_store %arg8[%c3_36, %c3_37], %550 {strides = array<i32>} : memref<22x22xf32, #tpu.memory_space<vmem>>, vector<16x16xf32>,
      %c0_38 = arith.constant 0 : index
      %c0_39 = arith.constant 0 : index
      %c0_40 = arith.constant 0 : index
      %552 = vector.load %arg6[%c0_38, %c0_39, %c0_40] : memref<1x16x16xf32, #tpu.memory_space<vmem>>, vector<1x16x16xf32>
      %553 = vector.shape_cast %552 : vector<1x16x16xf32> to vector<16x16xf32>
      %c3_41 = arith.constant 3 : index
      %c3_42 = arith.constant 3 : index
      %554 = vector.load %arg9[%c3_41, %c3_42] : memref<22x22xf32, #tpu.memory_space<vmem>>, vector<16x16xf32>
      tpu.vector_store %arg9[%c3_41, %c3_42], %553 {strides = array<i32>} : memref<22x22xf32, #tpu.memory_space<vmem>>, vector<16x16xf32>,
    } else {
    }
    %c16_i32 = arith.constant 16 : i32
    %3 = arith.muli %arg1, %c16_i32 : i32
    %4 = tpu.assume_multiple %3, 8 : i32
    %cst = arith.constant 0.000000e+00 : f32
    %5 = vector.broadcast %cst : f32 to vector<16x16xf32>
    %cst_1 = arith.constant 0.000000e+00 : f32
    %6 = vector.broadcast %cst_1 : f32 to vector<16x16xf32>
    %7 = arith.index_cast %4 : i32 to index
    %c0 = arith.constant 0 : index
    %8 = vector.load %arg8[%7, %c0] : memref<22x22xf32, #tpu.memory_space<vmem>>, vector<22x16xf32>
    %9 = arith.index_cast %4 : i32 to index
    %c0_2 = arith.constant 0 : index
    %10 = vector.load %arg9[%9, %c0_2] : memref<22x22xf32, #tpu.memory_space<vmem>>, vector<22x16xf32>
    %c0_3 = arith.constant 0 : index
    %11 = memref.load %arg2[%c0_3] : memref<98xf32, #tpu.memory_space<smem>>
    %12 = vector.extract_strided_slice %8 {offsets = [0, 0], sizes = [16, 16], strides = [1, 1]} : vector<22x16xf32> to vector<16x16xf32>
    %13 = vector.broadcast %11 : f32 to vector<16x16xf32>
    %14 = arith.mulf %13, %12 : vector<16x16xf32>
    %15 = arith.addf %5, %14 : vector<16x16xf32>
    %c1 = arith.constant 1 : index
    %16 = memref.load %arg2[%c1] : memref<98xf32, #tpu.memory_space<smem>>
    %17 = vector.extract_strided_slice %10 {offsets = [0, 0], sizes = [16, 16], strides = [1, 1]} : vector<22x16xf32> to vector<16x16xf32>
    %18 = vector.broadcast %16 : f32 to vector<16x16xf32>
    %19 = arith.mulf %18, %17 : vector<16x16xf32>
    %20 = arith.addf %6, %19 : vector<16x16xf32>
    %c14 = arith.constant 14 : index
    %21 = memref.load %arg2[%c14] : memref<98xf32, #tpu.memory_space<smem>>
    %22 = vector.extract_strided_slice %8 {offsets = [1, 0], sizes = [16, 16], strides = [1, 1]} : vector<22x16xf32> to vector<16x16xf32>
    %23 = vector.broadcast %21 : f32 to vector<16x16xf32>
    %24 = arith.mulf %23, %22 : vector<16x16xf32>
    %25 = arith.addf %15, %24 : vector<16x16xf32>
    %c15 = arith.constant 15 : index
    %26 = memref.load %arg2[%c15] : memref<98xf32, #tpu.memory_space<smem>>
    %27 = vector.extract_strided_slice %10 {offsets = [1, 0], sizes = [16, 16], strides = [1, 1]} : vector<22x16xf32> to vector<16x16xf32>
    %28 = vector.broadcast %26 : f32 to vector<16x16xf32>
    %29 = arith.mulf %28, %27 : vector<16x16xf32>
    %30 = arith.addf %20, %29 : vector<16x16xf32>
    %c28 = arith.constant 28 : index
    %31 = memref.load %arg2[%c28] : memref<98xf32, #tpu.memory_space<smem>>
    %32 = vector.extract_strided_slice %8 {offsets = [2, 0], sizes = [16, 16], strides = [1, 1]} : vector<22x16xf32> to vector<16x16xf32>
    %33 = vector.broadcast %31 : f32 to vector<16x16xf32>
    %34 = arith.mulf %33, %32 : vector<16x16xf32>
    %35 = arith.addf %25, %34 : vector<16x16xf32>
    %c29 = arith.constant 29 : index
    %36 = memref.load %arg2[%c29] : memref<98xf32, #tpu.memory_space<smem>>
    %37 = vector.extract_strided_slice %10 {offsets = [2, 0], sizes = [16, 16], strides = [1, 1]} : vector<22x16xf32> to vector<16x16xf32>
    %38 = vector.broadcast %36 : f32 to vector<16x16xf32>
    %39 = arith.mulf %38, %37 : vector<16x16xf32>
    %40 = arith.addf %30, %39 : vector<16x16xf32>
    %c42 = arith.constant 42 : index
    %41 = memref.load %arg2[%c42] : memref<98xf32, #tpu.memory_space<smem>>
    %42 = vector.extract_strided_slice %8 {offsets = [3, 0], sizes = [16, 16], strides = [1, 1]} : vector<22x16xf32> to vector<16x16xf32>
    %43 = vector.broadcast %41 : f32 to vector<16x16xf32>
    %44 = arith.mulf %43, %42 : vector<16x16xf32>
    %45 = arith.addf %35, %44 : vector<16x16xf32>
    %c43 = arith.constant 43 : index
    %46 = memref.load %arg2[%c43] : memref<98xf32, #tpu.memory_space<smem>>
    %47 = vector.extract_strided_slice %10 {offsets = [3, 0], sizes = [16, 16], strides = [1, 1]} : vector<22x16xf32> to vector<16x16xf32>
    %48 = vector.broadcast %46 : f32 to vector<16x16xf32>
    %49 = arith.mulf %48, %47 : vector<16x16xf32>
    %50 = arith.addf %40, %49 : vector<16x16xf32>
    %c56 = arith.constant 56 : index
    %51 = memref.load %arg2[%c56] : memref<98xf32, #tpu.memory_space<smem>>
    %52 = vector.extract_strided_slice %8 {offsets = [4, 0], sizes = [16, 16], strides = [1, 1]} : vector<22x16xf32> to vector<16x16xf32>
    %53 = vector.broadcast %51 : f32 to vector<16x16xf32>
    %54 = arith.mulf %53, %52 : vector<16x16xf32>
    %55 = arith.addf %45, %54 : vector<16x16xf32>
    %c57 = arith.constant 57 : index
    %56 = memref.load %arg2[%c57] : memref<98xf32, #tpu.memory_space<smem>>
    %57 = vector.extract_strided_slice %10 {offsets = [4, 0], sizes = [16, 16], strides = [1, 1]} : vector<22x16xf32> to vector<16x16xf32>
    %58 = vector.broadcast %56 : f32 to vector<16x16xf32>
    %59 = arith.mulf %58, %57 : vector<16x16xf32>
    %60 = arith.addf %50, %59 : vector<16x16xf32>
    %c70 = arith.constant 70 : index
    %61 = memref.load %arg2[%c70] : memref<98xf32, #tpu.memory_space<smem>>
    %62 = vector.extract_strided_slice %8 {offsets = [5, 0], sizes = [16, 16], strides = [1, 1]} : vector<22x16xf32> to vector<16x16xf32>
    %63 = vector.broadcast %61 : f32 to vector<16x16xf32>
    %64 = arith.mulf %63, %62 : vector<16x16xf32>
    %65 = arith.addf %55, %64 : vector<16x16xf32>
    %c71 = arith.constant 71 : index
    %66 = memref.load %arg2[%c71] : memref<98xf32, #tpu.memory_space<smem>>
    %67 = vector.extract_strided_slice %10 {offsets = [5, 0], sizes = [16, 16], strides = [1, 1]} : vector<22x16xf32> to vector<16x16xf32>
    %68 = vector.broadcast %66 : f32 to vector<16x16xf32>
    %69 = arith.mulf %68, %67 : vector<16x16xf32>
    %70 = arith.addf %60, %69 : vector<16x16xf32>
    %c84 = arith.constant 84 : index
    %71 = memref.load %arg2[%c84] : memref<98xf32, #tpu.memory_space<smem>>
    %72 = vector.extract_strided_slice %8 {offsets = [6, 0], sizes = [16, 16], strides = [1, 1]} : vector<22x16xf32> to vector<16x16xf32>
    %73 = vector.broadcast %71 : f32 to vector<16x16xf32>
    %74 = arith.mulf %73, %72 : vector<16x16xf32>
    %75 = arith.addf %65, %74 : vector<16x16xf32>
    %c85 = arith.constant 85 : index
    %76 = memref.load %arg2[%c85] : memref<98xf32, #tpu.memory_space<smem>>
    %77 = vector.extract_strided_slice %10 {offsets = [6, 0], sizes = [16, 16], strides = [1, 1]} : vector<22x16xf32> to vector<16x16xf32>
    %78 = vector.broadcast %76 : f32 to vector<16x16xf32>
    %79 = arith.mulf %78, %77 : vector<16x16xf32>
    %80 = arith.addf %70, %79 : vector<16x16xf32>
    %81 = arith.index_cast %4 : i32 to index
    %c1_4 = arith.constant 1 : index
    %82 = vector.load %arg8[%81, %c1_4] : memref<22x22xf32, #tpu.memory_space<vmem>>, vector<22x16xf32>
    %83 = arith.index_cast %4 : i32 to index
    %c1_5 = arith.constant 1 : index
    %84 = vector.load %arg9[%83, %c1_5] : memref<22x22xf32, #tpu.memory_space<vmem>>, vector<22x16xf32>
    %c2 = arith.constant 2 : index
    %85 = memref.load %arg2[%c2] : memref<98xf32, #tpu.memory_space<smem>>
    %86 = vector.extract_strided_slice %82 {offsets = [0, 0], sizes = [16, 16], strides = [1, 1]} : vector<22x16xf32> to vector<16x16xf32>
    %87 = vector.broadcast %85 : f32 to vector<16x16xf32>
    %88 = arith.mulf %87, %86 : vector<16x16xf32>
    %89 = arith.addf %75, %88 : vector<16x16xf32>
    %c3 = arith.constant 3 : index
    %90 = memref.load %arg2[%c3] : memref<98xf32, #tpu.memory_space<smem>>
    %91 = vector.extract_strided_slice %84 {offsets = [0, 0], sizes = [16, 16], strides = [1, 1]} : vector<22x16xf32> to vector<16x16xf32>
    %92 = vector.broadcast %90 : f32 to vector<16x16xf32>
    %93 = arith.mulf %92, %91 : vector<16x16xf32>
    %94 = arith.addf %80, %93 : vector<16x16xf32>
    %c16 = arith.constant 16 : index
    %95 = memref.load %arg2[%c16] : memref<98xf32, #tpu.memory_space<smem>>
    %96 = vector.extract_strided_slice %82 {offsets = [1, 0], sizes = [16, 16], strides = [1, 1]} : vector<22x16xf32> to vector<16x16xf32>
    %97 = vector.broadcast %95 : f32 to vector<16x16xf32>
    %98 = arith.mulf %97, %96 : vector<16x16xf32>
    %99 = arith.addf %89, %98 : vector<16x16xf32>
    %c17 = arith.constant 17 : index
    %100 = memref.load %arg2[%c17] : memref<98xf32, #tpu.memory_space<smem>>
    %101 = vector.extract_strided_slice %84 {offsets = [1, 0], sizes = [16, 16], strides = [1, 1]} : vector<22x16xf32> to vector<16x16xf32>
    %102 = vector.broadcast %100 : f32 to vector<16x16xf32>
    %103 = arith.mulf %102, %101 : vector<16x16xf32>
    %104 = arith.addf %94, %103 : vector<16x16xf32>
    %c30 = arith.constant 30 : index
    %105 = memref.load %arg2[%c30] : memref<98xf32, #tpu.memory_space<smem>>
    %106 = vector.extract_strided_slice %82 {offsets = [2, 0], sizes = [16, 16], strides = [1, 1]} : vector<22x16xf32> to vector<16x16xf32>
    %107 = vector.broadcast %105 : f32 to vector<16x16xf32>
    %108 = arith.mulf %107, %106 : vector<16x16xf32>
    %109 = arith.addf %99, %108 : vector<16x16xf32>
    %c31 = arith.constant 31 : index
    %110 = memref.load %arg2[%c31] : memref<98xf32, #tpu.memory_space<smem>>
    %111 = vector.extract_strided_slice %84 {offsets = [2, 0], sizes = [16, 16], strides = [1, 1]} : vector<22x16xf32> to vector<16x16xf32>
    %112 = vector.broadcast %110 : f32 to vector<16x16xf32>
    %113 = arith.mulf %112, %111 : vector<16x16xf32>
    %114 = arith.addf %104, %113 : vector<16x16xf32>
    %c44 = arith.constant 44 : index
    %115 = memref.load %arg2[%c44] : memref<98xf32, #tpu.memory_space<smem>>
    %116 = vector.extract_strided_slice %82 {offsets = [3, 0], sizes = [16, 16], strides = [1, 1]} : vector<22x16xf32> to vector<16x16xf32>
    %117 = vector.broadcast %115 : f32 to vector<16x16xf32>
    %118 = arith.mulf %117, %116 : vector<16x16xf32>
    %119 = arith.addf %109, %118 : vector<16x16xf32>
    %c45 = arith.constant 45 : index
    %120 = memref.load %arg2[%c45] : memref<98xf32, #tpu.memory_space<smem>>
    %121 = vector.extract_strided_slice %84 {offsets = [3, 0], sizes = [16, 16], strides = [1, 1]} : vector<22x16xf32> to vector<16x16xf32>
    %122 = vector.broadcast %120 : f32 to vector<16x16xf32>
    %123 = arith.mulf %122, %121 : vector<16x16xf32>
    %124 = arith.addf %114, %123 : vector<16x16xf32>
    %c58 = arith.constant 58 : index
    %125 = memref.load %arg2[%c58] : memref<98xf32, #tpu.memory_space<smem>>
    %126 = vector.extract_strided_slice %82 {offsets = [4, 0], sizes = [16, 16], strides = [1, 1]} : vector<22x16xf32> to vector<16x16xf32>
    %127 = vector.broadcast %125 : f32 to vector<16x16xf32>
    %128 = arith.mulf %127, %126 : vector<16x16xf32>
    %129 = arith.addf %119, %128 : vector<16x16xf32>
    %c59 = arith.constant 59 : index
    %130 = memref.load %arg2[%c59] : memref<98xf32, #tpu.memory_space<smem>>
    %131 = vector.extract_strided_slice %84 {offsets = [4, 0], sizes = [16, 16], strides = [1, 1]} : vector<22x16xf32> to vector<16x16xf32>
    %132 = vector.broadcast %130 : f32 to vector<16x16xf32>
    %133 = arith.mulf %132, %131 : vector<16x16xf32>
    %134 = arith.addf %124, %133 : vector<16x16xf32>
    %c72 = arith.constant 72 : index
    %135 = memref.load %arg2[%c72] : memref<98xf32, #tpu.memory_space<smem>>
    %136 = vector.extract_strided_slice %82 {offsets = [5, 0], sizes = [16, 16], strides = [1, 1]} : vector<22x16xf32> to vector<16x16xf32>
    %137 = vector.broadcast %135 : f32 to vector<16x16xf32>
    %138 = arith.mulf %137, %136 : vector<16x16xf32>
    %139 = arith.addf %129, %138 : vector<16x16xf32>
    %c73 = arith.constant 73 : index
    %140 = memref.load %arg2[%c73] : memref<98xf32, #tpu.memory_space<smem>>
    %141 = vector.extract_strided_slice %84 {offsets = [5, 0], sizes = [16, 16], strides = [1, 1]} : vector<22x16xf32> to vector<16x16xf32>
    %142 = vector.broadcast %140 : f32 to vector<16x16xf32>
    %143 = arith.mulf %142, %141 : vector<16x16xf32>
    %144 = arith.addf %134, %143 : vector<16x16xf32>
    %c86 = arith.constant 86 : index
    %145 = memref.load %arg2[%c86] : memref<98xf32, #tpu.memory_space<smem>>
    %146 = vector.extract_strided_slice %82 {offsets = [6, 0], sizes = [16, 16], strides = [1, 1]} : vector<22x16xf32> to vector<16x16xf32>
    %147 = vector.broadcast %145 : f32 to vector<16x16xf32>
    %148 = arith.mulf %147, %146 : vector<16x16xf32>
    %149 = arith.addf %139, %148 : vector<16x16xf32>
    %c87 = arith.constant 87 : index
    %150 = memref.load %arg2[%c87] : memref<98xf32, #tpu.memory_space<smem>>
    %151 = vector.extract_strided_slice %84 {offsets = [6, 0], sizes = [16, 16], strides = [1, 1]} : vector<22x16xf32> to vector<16x16xf32>
    %152 = vector.broadcast %150 : f32 to vector<16x16xf32>
    %153 = arith.mulf %152, %151 : vector<16x16xf32>
    %154 = arith.addf %144, %153 : vector<16x16xf32>
    %155 = arith.index_cast %4 : i32 to index
    %c2_6 = arith.constant 2 : index
    %156 = vector.load %arg8[%155, %c2_6] : memref<22x22xf32, #tpu.memory_space<vmem>>, vector<22x16xf32>
    %157 = arith.index_cast %4 : i32 to index
    %c2_7 = arith.constant 2 : index
    %158 = vector.load %arg9[%157, %c2_7] : memref<22x22xf32, #tpu.memory_space<vmem>>, vector<22x16xf32>
    %c4 = arith.constant 4 : index
    %159 = memref.load %arg2[%c4] : memref<98xf32, #tpu.memory_space<smem>>
    %160 = vector.extract_strided_slice %156 {offsets = [0, 0], sizes = [16, 16], strides = [1, 1]} : vector<22x16xf32> to vector<16x16xf32>
    %161 = vector.broadcast %159 : f32 to vector<16x16xf32>
    %162 = arith.mulf %161, %160 : vector<16x16xf32>
    %163 = arith.addf %149, %162 : vector<16x16xf32>
    %c5 = arith.constant 5 : index
    %164 = memref.load %arg2[%c5] : memref<98xf32, #tpu.memory_space<smem>>
    %165 = vector.extract_strided_slice %158 {offsets = [0, 0], sizes = [16, 16], strides = [1, 1]} : vector<22x16xf32> to vector<16x16xf32>
    %166 = vector.broadcast %164 : f32 to vector<16x16xf32>
    %167 = arith.mulf %166, %165 : vector<16x16xf32>
    %168 = arith.addf %154, %167 : vector<16x16xf32>
    %c18 = arith.constant 18 : index
    %169 = memref.load %arg2[%c18] : memref<98xf32, #tpu.memory_space<smem>>
    %170 = vector.extract_strided_slice %156 {offsets = [1, 0], sizes = [16, 16], strides = [1, 1]} : vector<22x16xf32> to vector<16x16xf32>
    %171 = vector.broadcast %169 : f32 to vector<16x16xf32>
    %172 = arith.mulf %171, %170 : vector<16x16xf32>
    %173 = arith.addf %163, %172 : vector<16x16xf32>
    %c19 = arith.constant 19 : index
    %174 = memref.load %arg2[%c19] : memref<98xf32, #tpu.memory_space<smem>>
    %175 = vector.extract_strided_slice %158 {offsets = [1, 0], sizes = [16, 16], strides = [1, 1]} : vector<22x16xf32> to vector<16x16xf32>
    %176 = vector.broadcast %174 : f32 to vector<16x16xf32>
    %177 = arith.mulf %176, %175 : vector<16x16xf32>
    %178 = arith.addf %168, %177 : vector<16x16xf32>
    %c32 = arith.constant 32 : index
    %179 = memref.load %arg2[%c32] : memref<98xf32, #tpu.memory_space<smem>>
    %180 = vector.extract_strided_slice %156 {offsets = [2, 0], sizes = [16, 16], strides = [1, 1]} : vector<22x16xf32> to vector<16x16xf32>
    %181 = vector.broadcast %179 : f32 to vector<16x16xf32>
    %182 = arith.mulf %181, %180 : vector<16x16xf32>
    %183 = arith.addf %173, %182 : vector<16x16xf32>
    %c33 = arith.constant 33 : index
    %184 = memref.load %arg2[%c33] : memref<98xf32, #tpu.memory_space<smem>>
    %185 = vector.extract_strided_slice %158 {offsets = [2, 0], sizes = [16, 16], strides = [1, 1]} : vector<22x16xf32> to vector<16x16xf32>
    %186 = vector.broadcast %184 : f32 to vector<16x16xf32>
    %187 = arith.mulf %186, %185 : vector<16x16xf32>
    %188 = arith.addf %178, %187 : vector<16x16xf32>
    %c46 = arith.constant 46 : index
    %189 = memref.load %arg2[%c46] : memref<98xf32, #tpu.memory_space<smem>>
    %190 = vector.extract_strided_slice %156 {offsets = [3, 0], sizes = [16, 16], strides = [1, 1]} : vector<22x16xf32> to vector<16x16xf32>
    %191 = vector.broadcast %189 : f32 to vector<16x16xf32>
    %192 = arith.mulf %191, %190 : vector<16x16xf32>
    %193 = arith.addf %183, %192 : vector<16x16xf32>
    %c47 = arith.constant 47 : index
    %194 = memref.load %arg2[%c47] : memref<98xf32, #tpu.memory_space<smem>>
    %195 = vector.extract_strided_slice %158 {offsets = [3, 0], sizes = [16, 16], strides = [1, 1]} : vector<22x16xf32> to vector<16x16xf32>
    %196 = vector.broadcast %194 : f32 to vector<16x16xf32>
    %197 = arith.mulf %196, %195 : vector<16x16xf32>
    %198 = arith.addf %188, %197 : vector<16x16xf32>
    %c60 = arith.constant 60 : index
    %199 = memref.load %arg2[%c60] : memref<98xf32, #tpu.memory_space<smem>>
    %200 = vector.extract_strided_slice %156 {offsets = [4, 0], sizes = [16, 16], strides = [1, 1]} : vector<22x16xf32> to vector<16x16xf32>
    %201 = vector.broadcast %199 : f32 to vector<16x16xf32>
    %202 = arith.mulf %201, %200 : vector<16x16xf32>
    %203 = arith.addf %193, %202 : vector<16x16xf32>
    %c61 = arith.constant 61 : index
    %204 = memref.load %arg2[%c61] : memref<98xf32, #tpu.memory_space<smem>>
    %205 = vector.extract_strided_slice %158 {offsets = [4, 0], sizes = [16, 16], strides = [1, 1]} : vector<22x16xf32> to vector<16x16xf32>
    %206 = vector.broadcast %204 : f32 to vector<16x16xf32>
    %207 = arith.mulf %206, %205 : vector<16x16xf32>
    %208 = arith.addf %198, %207 : vector<16x16xf32>
    %c74 = arith.constant 74 : index
    %209 = memref.load %arg2[%c74] : memref<98xf32, #tpu.memory_space<smem>>
    %210 = vector.extract_strided_slice %156 {offsets = [5, 0], sizes = [16, 16], strides = [1, 1]} : vector<22x16xf32> to vector<16x16xf32>
    %211 = vector.broadcast %209 : f32 to vector<16x16xf32>
    %212 = arith.mulf %211, %210 : vector<16x16xf32>
    %213 = arith.addf %203, %212 : vector<16x16xf32>
    %c75 = arith.constant 75 : index
    %214 = memref.load %arg2[%c75] : memref<98xf32, #tpu.memory_space<smem>>
    %215 = vector.extract_strided_slice %158 {offsets = [5, 0], sizes = [16, 16], strides = [1, 1]} : vector<22x16xf32> to vector<16x16xf32>
    %216 = vector.broadcast %214 : f32 to vector<16x16xf32>
    %217 = arith.mulf %216, %215 : vector<16x16xf32>
    %218 = arith.addf %208, %217 : vector<16x16xf32>
    %c88 = arith.constant 88 : index
    %219 = memref.load %arg2[%c88] : memref<98xf32, #tpu.memory_space<smem>>
    %220 = vector.extract_strided_slice %156 {offsets = [6, 0], sizes = [16, 16], strides = [1, 1]} : vector<22x16xf32> to vector<16x16xf32>
    %221 = vector.broadcast %219 : f32 to vector<16x16xf32>
    %222 = arith.mulf %221, %220 : vector<16x16xf32>
    %223 = arith.addf %213, %222 : vector<16x16xf32>
    %c89 = arith.constant 89 : index
    %224 = memref.load %arg2[%c89] : memref<98xf32, #tpu.memory_space<smem>>
    %225 = vector.extract_strided_slice %158 {offsets = [6, 0], sizes = [16, 16], strides = [1, 1]} : vector<22x16xf32> to vector<16x16xf32>
    %226 = vector.broadcast %224 : f32 to vector<16x16xf32>
    %227 = arith.mulf %226, %225 : vector<16x16xf32>
    %228 = arith.addf %218, %227 : vector<16x16xf32>
    %229 = arith.index_cast %4 : i32 to index
    %c3_8 = arith.constant 3 : index
    %230 = vector.load %arg8[%229, %c3_8] : memref<22x22xf32, #tpu.memory_space<vmem>>, vector<22x16xf32>
    %231 = arith.index_cast %4 : i32 to index
    %c3_9 = arith.constant 3 : index
    %232 = vector.load %arg9[%231, %c3_9] : memref<22x22xf32, #tpu.memory_space<vmem>>, vector<22x16xf32>
    %c6 = arith.constant 6 : index
    %233 = memref.load %arg2[%c6] : memref<98xf32, #tpu.memory_space<smem>>
    %234 = vector.extract_strided_slice %230 {offsets = [0, 0], sizes = [16, 16], strides = [1, 1]} : vector<22x16xf32> to vector<16x16xf32>
    %235 = vector.broadcast %233 : f32 to vector<16x16xf32>
    %236 = arith.mulf %235, %234 : vector<16x16xf32>
    %237 = arith.addf %223, %236 : vector<16x16xf32>
    %c7 = arith.constant 7 : index
    %238 = memref.load %arg2[%c7] : memref<98xf32, #tpu.memory_space<smem>>
    %239 = vector.extract_strided_slice %232 {offsets = [0, 0], sizes = [16, 16], strides = [1, 1]} : vector<22x16xf32> to vector<16x16xf32>
    %240 = vector.broadcast %238 : f32 to vector<16x16xf32>
    %241 = arith.mulf %240, %239 : vector<16x16xf32>
    %242 = arith.addf %228, %241 : vector<16x16xf32>
    %c20 = arith.constant 20 : index
    %243 = memref.load %arg2[%c20] : memref<98xf32, #tpu.memory_space<smem>>
    %244 = vector.extract_strided_slice %230 {offsets = [1, 0], sizes = [16, 16], strides = [1, 1]} : vector<22x16xf32> to vector<16x16xf32>
    %245 = vector.broadcast %243 : f32 to vector<16x16xf32>
    %246 = arith.mulf %245, %244 : vector<16x16xf32>
    %247 = arith.addf %237, %246 : vector<16x16xf32>
    %c21 = arith.constant 21 : index
    %248 = memref.load %arg2[%c21] : memref<98xf32, #tpu.memory_space<smem>>
    %249 = vector.extract_strided_slice %232 {offsets = [1, 0], sizes = [16, 16], strides = [1, 1]} : vector<22x16xf32> to vector<16x16xf32>
    %250 = vector.broadcast %248 : f32 to vector<16x16xf32>
    %251 = arith.mulf %250, %249 : vector<16x16xf32>
    %252 = arith.addf %242, %251 : vector<16x16xf32>
    %c34 = arith.constant 34 : index
    %253 = memref.load %arg2[%c34] : memref<98xf32, #tpu.memory_space<smem>>
    %254 = vector.extract_strided_slice %230 {offsets = [2, 0], sizes = [16, 16], strides = [1, 1]} : vector<22x16xf32> to vector<16x16xf32>
    %255 = vector.broadcast %253 : f32 to vector<16x16xf32>
    %256 = arith.mulf %255, %254 : vector<16x16xf32>
    %257 = arith.addf %247, %256 : vector<16x16xf32>
    %c35 = arith.constant 35 : index
    %258 = memref.load %arg2[%c35] : memref<98xf32, #tpu.memory_space<smem>>
    %259 = vector.extract_strided_slice %232 {offsets = [2, 0], sizes = [16, 16], strides = [1, 1]} : vector<22x16xf32> to vector<16x16xf32>
    %260 = vector.broadcast %258 : f32 to vector<16x16xf32>
    %261 = arith.mulf %260, %259 : vector<16x16xf32>
    %262 = arith.addf %252, %261 : vector<16x16xf32>
    %c48 = arith.constant 48 : index
    %263 = memref.load %arg2[%c48] : memref<98xf32, #tpu.memory_space<smem>>
    %264 = vector.extract_strided_slice %230 {offsets = [3, 0], sizes = [16, 16], strides = [1, 1]} : vector<22x16xf32> to vector<16x16xf32>
    %265 = vector.broadcast %263 : f32 to vector<16x16xf32>
    %266 = arith.mulf %265, %264 : vector<16x16xf32>
    %267 = arith.addf %257, %266 : vector<16x16xf32>
    %c49 = arith.constant 49 : index
    %268 = memref.load %arg2[%c49] : memref<98xf32, #tpu.memory_space<smem>>
    %269 = vector.extract_strided_slice %232 {offsets = [3, 0], sizes = [16, 16], strides = [1, 1]} : vector<22x16xf32> to vector<16x16xf32>
    %270 = vector.broadcast %268 : f32 to vector<16x16xf32>
    %271 = arith.mulf %270, %269 : vector<16x16xf32>
    %272 = arith.addf %262, %271 : vector<16x16xf32>
    %c62 = arith.constant 62 : index
    %273 = memref.load %arg2[%c62] : memref<98xf32, #tpu.memory_space<smem>>
    %274 = vector.extract_strided_slice %230 {offsets = [4, 0], sizes = [16, 16], strides = [1, 1]} : vector<22x16xf32> to vector<16x16xf32>
    %275 = vector.broadcast %273 : f32 to vector<16x16xf32>
    %276 = arith.mulf %275, %274 : vector<16x16xf32>
    %277 = arith.addf %267, %276 : vector<16x16xf32>
    %c63 = arith.constant 63 : index
    %278 = memref.load %arg2[%c63] : memref<98xf32, #tpu.memory_space<smem>>
    %279 = vector.extract_strided_slice %232 {offsets = [4, 0], sizes = [16, 16], strides = [1, 1]} : vector<22x16xf32> to vector<16x16xf32>
    %280 = vector.broadcast %278 : f32 to vector<16x16xf32>
    %281 = arith.mulf %280, %279 : vector<16x16xf32>
    %282 = arith.addf %272, %281 : vector<16x16xf32>
    %c76 = arith.constant 76 : index
    %283 = memref.load %arg2[%c76] : memref<98xf32, #tpu.memory_space<smem>>
    %284 = vector.extract_strided_slice %230 {offsets = [5, 0], sizes = [16, 16], strides = [1, 1]} : vector<22x16xf32> to vector<16x16xf32>
    %285 = vector.broadcast %283 : f32 to vector<16x16xf32>
    %286 = arith.mulf %285, %284 : vector<16x16xf32>
    %287 = arith.addf %277, %286 : vector<16x16xf32>
    %c77 = arith.constant 77 : index
    %288 = memref.load %arg2[%c77] : memref<98xf32, #tpu.memory_space<smem>>
    %289 = vector.extract_strided_slice %232 {offsets = [5, 0], sizes = [16, 16], strides = [1, 1]} : vector<22x16xf32> to vector<16x16xf32>
    %290 = vector.broadcast %288 : f32 to vector<16x16xf32>
    %291 = arith.mulf %290, %289 : vector<16x16xf32>
    %292 = arith.addf %282, %291 : vector<16x16xf32>
    %c90 = arith.constant 90 : index
    %293 = memref.load %arg2[%c90] : memref<98xf32, #tpu.memory_space<smem>>
    %294 = vector.extract_strided_slice %230 {offsets = [6, 0], sizes = [16, 16], strides = [1, 1]} : vector<22x16xf32> to vector<16x16xf32>
    %295 = vector.broadcast %293 : f32 to vector<16x16xf32>
    %296 = arith.mulf %295, %294 : vector<16x16xf32>
    %297 = arith.addf %287, %296 : vector<16x16xf32>
    %c91 = arith.constant 91 : index
    %298 = memref.load %arg2[%c91] : memref<98xf32, #tpu.memory_space<smem>>
    %299 = vector.extract_strided_slice %232 {offsets = [6, 0], sizes = [16, 16], strides = [1, 1]} : vector<22x16xf32> to vector<16x16xf32>
    %300 = vector.broadcast %298 : f32 to vector<16x16xf32>
    %301 = arith.mulf %300, %299 : vector<16x16xf32>
    %302 = arith.addf %292, %301 : vector<16x16xf32>
    %303 = arith.index_cast %4 : i32 to index
    %c4_10 = arith.constant 4 : index
    %304 = vector.load %arg8[%303, %c4_10] : memref<22x22xf32, #tpu.memory_space<vmem>>, vector<22x16xf32>
    %305 = arith.index_cast %4 : i32 to index
    %c4_11 = arith.constant 4 : index
    %306 = vector.load %arg9[%305, %c4_11] : memref<22x22xf32, #tpu.memory_space<vmem>>, vector<22x16xf32>
    %c8 = arith.constant 8 : index
    %307 = memref.load %arg2[%c8] : memref<98xf32, #tpu.memory_space<smem>>
    %308 = vector.extract_strided_slice %304 {offsets = [0, 0], sizes = [16, 16], strides = [1, 1]} : vector<22x16xf32> to vector<16x16xf32>
    %309 = vector.broadcast %307 : f32 to vector<16x16xf32>
    %310 = arith.mulf %309, %308 : vector<16x16xf32>
    %311 = arith.addf %297, %310 : vector<16x16xf32>
    %c9 = arith.constant 9 : index
    %312 = memref.load %arg2[%c9] : memref<98xf32, #tpu.memory_space<smem>>
    %313 = vector.extract_strided_slice %306 {offsets = [0, 0], sizes = [16, 16], strides = [1, 1]} : vector<22x16xf32> to vector<16x16xf32>
    %314 = vector.broadcast %312 : f32 to vector<16x16xf32>
    %315 = arith.mulf %314, %313 : vector<16x16xf32>
    %316 = arith.addf %302, %315 : vector<16x16xf32>
    %c22 = arith.constant 22 : index
    %317 = memref.load %arg2[%c22] : memref<98xf32, #tpu.memory_space<smem>>
    %318 = vector.extract_strided_slice %304 {offsets = [1, 0], sizes = [16, 16], strides = [1, 1]} : vector<22x16xf32> to vector<16x16xf32>
    %319 = vector.broadcast %317 : f32 to vector<16x16xf32>
    %320 = arith.mulf %319, %318 : vector<16x16xf32>
    %321 = arith.addf %311, %320 : vector<16x16xf32>
    %c23 = arith.constant 23 : index
    %322 = memref.load %arg2[%c23] : memref<98xf32, #tpu.memory_space<smem>>
    %323 = vector.extract_strided_slice %306 {offsets = [1, 0], sizes = [16, 16], strides = [1, 1]} : vector<22x16xf32> to vector<16x16xf32>
    %324 = vector.broadcast %322 : f32 to vector<16x16xf32>
    %325 = arith.mulf %324, %323 : vector<16x16xf32>
    %326 = arith.addf %316, %325 : vector<16x16xf32>
    %c36 = arith.constant 36 : index
    %327 = memref.load %arg2[%c36] : memref<98xf32, #tpu.memory_space<smem>>
    %328 = vector.extract_strided_slice %304 {offsets = [2, 0], sizes = [16, 16], strides = [1, 1]} : vector<22x16xf32> to vector<16x16xf32>
    %329 = vector.broadcast %327 : f32 to vector<16x16xf32>
    %330 = arith.mulf %329, %328 : vector<16x16xf32>
    %331 = arith.addf %321, %330 : vector<16x16xf32>
    %c37 = arith.constant 37 : index
    %332 = memref.load %arg2[%c37] : memref<98xf32, #tpu.memory_space<smem>>
    %333 = vector.extract_strided_slice %306 {offsets = [2, 0], sizes = [16, 16], strides = [1, 1]} : vector<22x16xf32> to vector<16x16xf32>
    %334 = vector.broadcast %332 : f32 to vector<16x16xf32>
    %335 = arith.mulf %334, %333 : vector<16x16xf32>
    %336 = arith.addf %326, %335 : vector<16x16xf32>
    %c50 = arith.constant 50 : index
    %337 = memref.load %arg2[%c50] : memref<98xf32, #tpu.memory_space<smem>>
    %338 = vector.extract_strided_slice %304 {offsets = [3, 0], sizes = [16, 16], strides = [1, 1]} : vector<22x16xf32> to vector<16x16xf32>
    %339 = vector.broadcast %337 : f32 to vector<16x16xf32>
    %340 = arith.mulf %339, %338 : vector<16x16xf32>
    %341 = arith.addf %331, %340 : vector<16x16xf32>
    %c51 = arith.constant 51 : index
    %342 = memref.load %arg2[%c51] : memref<98xf32, #tpu.memory_space<smem>>
    %343 = vector.extract_strided_slice %306 {offsets = [3, 0], sizes = [16, 16], strides = [1, 1]} : vector<22x16xf32> to vector<16x16xf32>
    %344 = vector.broadcast %342 : f32 to vector<16x16xf32>
    %345 = arith.mulf %344, %343 : vector<16x16xf32>
    %346 = arith.addf %336, %345 : vector<16x16xf32>
    %c64 = arith.constant 64 : index
    %347 = memref.load %arg2[%c64] : memref<98xf32, #tpu.memory_space<smem>>
    %348 = vector.extract_strided_slice %304 {offsets = [4, 0], sizes = [16, 16], strides = [1, 1]} : vector<22x16xf32> to vector<16x16xf32>
    %349 = vector.broadcast %347 : f32 to vector<16x16xf32>
    %350 = arith.mulf %349, %348 : vector<16x16xf32>
    %351 = arith.addf %341, %350 : vector<16x16xf32>
    %c65 = arith.constant 65 : index
    %352 = memref.load %arg2[%c65] : memref<98xf32, #tpu.memory_space<smem>>
    %353 = vector.extract_strided_slice %306 {offsets = [4, 0], sizes = [16, 16], strides = [1, 1]} : vector<22x16xf32> to vector<16x16xf32>
    %354 = vector.broadcast %352 : f32 to vector<16x16xf32>
    %355 = arith.mulf %354, %353 : vector<16x16xf32>
    %356 = arith.addf %346, %355 : vector<16x16xf32>
    %c78 = arith.constant 78 : index
    %357 = memref.load %arg2[%c78] : memref<98xf32, #tpu.memory_space<smem>>
    %358 = vector.extract_strided_slice %304 {offsets = [5, 0], sizes = [16, 16], strides = [1, 1]} : vector<22x16xf32> to vector<16x16xf32>
    %359 = vector.broadcast %357 : f32 to vector<16x16xf32>
    %360 = arith.mulf %359, %358 : vector<16x16xf32>
    %361 = arith.addf %351, %360 : vector<16x16xf32>
    %c79 = arith.constant 79 : index
    %362 = memref.load %arg2[%c79] : memref<98xf32, #tpu.memory_space<smem>>
    %363 = vector.extract_strided_slice %306 {offsets = [5, 0], sizes = [16, 16], strides = [1, 1]} : vector<22x16xf32> to vector<16x16xf32>
    %364 = vector.broadcast %362 : f32 to vector<16x16xf32>
    %365 = arith.mulf %364, %363 : vector<16x16xf32>
    %366 = arith.addf %356, %365 : vector<16x16xf32>
    %c92 = arith.constant 92 : index
    %367 = memref.load %arg2[%c92] : memref<98xf32, #tpu.memory_space<smem>>
    %368 = vector.extract_strided_slice %304 {offsets = [6, 0], sizes = [16, 16], strides = [1, 1]} : vector<22x16xf32> to vector<16x16xf32>
    %369 = vector.broadcast %367 : f32 to vector<16x16xf32>
    %370 = arith.mulf %369, %368 : vector<16x16xf32>
    %371 = arith.addf %361, %370 : vector<16x16xf32>
    %c93 = arith.constant 93 : index
    %372 = memref.load %arg2[%c93] : memref<98xf32, #tpu.memory_space<smem>>
    %373 = vector.extract_strided_slice %306 {offsets = [6, 0], sizes = [16, 16], strides = [1, 1]} : vector<22x16xf32> to vector<16x16xf32>
    %374 = vector.broadcast %372 : f32 to vector<16x16xf32>
    %375 = arith.mulf %374, %373 : vector<16x16xf32>
    %376 = arith.addf %366, %375 : vector<16x16xf32>
    %377 = arith.index_cast %4 : i32 to index
    %c5_12 = arith.constant 5 : index
    %378 = vector.load %arg8[%377, %c5_12] : memref<22x22xf32, #tpu.memory_space<vmem>>, vector<22x16xf32>
    %379 = arith.index_cast %4 : i32 to index
    %c5_13 = arith.constant 5 : index
    %380 = vector.load %arg9[%379, %c5_13] : memref<22x22xf32, #tpu.memory_space<vmem>>, vector<22x16xf32>
    %c10 = arith.constant 10 : index
    %381 = memref.load %arg2[%c10] : memref<98xf32, #tpu.memory_space<smem>>
    %382 = vector.extract_strided_slice %378 {offsets = [0, 0], sizes = [16, 16], strides = [1, 1]} : vector<22x16xf32> to vector<16x16xf32>
    %383 = vector.broadcast %381 : f32 to vector<16x16xf32>
    %384 = arith.mulf %383, %382 : vector<16x16xf32>
    %385 = arith.addf %371, %384 : vector<16x16xf32>
    %c11 = arith.constant 11 : index
    %386 = memref.load %arg2[%c11] : memref<98xf32, #tpu.memory_space<smem>>
    %387 = vector.extract_strided_slice %380 {offsets = [0, 0], sizes = [16, 16], strides = [1, 1]} : vector<22x16xf32> to vector<16x16xf32>
    %388 = vector.broadcast %386 : f32 to vector<16x16xf32>
    %389 = arith.mulf %388, %387 : vector<16x16xf32>
    %390 = arith.addf %376, %389 : vector<16x16xf32>
    %c24 = arith.constant 24 : index
    %391 = memref.load %arg2[%c24] : memref<98xf32, #tpu.memory_space<smem>>
    %392 = vector.extract_strided_slice %378 {offsets = [1, 0], sizes = [16, 16], strides = [1, 1]} : vector<22x16xf32> to vector<16x16xf32>
    %393 = vector.broadcast %391 : f32 to vector<16x16xf32>
    %394 = arith.mulf %393, %392 : vector<16x16xf32>
    %395 = arith.addf %385, %394 : vector<16x16xf32>
    %c25 = arith.constant 25 : index
    %396 = memref.load %arg2[%c25] : memref<98xf32, #tpu.memory_space<smem>>
    %397 = vector.extract_strided_slice %380 {offsets = [1, 0], sizes = [16, 16], strides = [1, 1]} : vector<22x16xf32> to vector<16x16xf32>
    %398 = vector.broadcast %396 : f32 to vector<16x16xf32>
    %399 = arith.mulf %398, %397 : vector<16x16xf32>
    %400 = arith.addf %390, %399 : vector<16x16xf32>
    %c38 = arith.constant 38 : index
    %401 = memref.load %arg2[%c38] : memref<98xf32, #tpu.memory_space<smem>>
    %402 = vector.extract_strided_slice %378 {offsets = [2, 0], sizes = [16, 16], strides = [1, 1]} : vector<22x16xf32> to vector<16x16xf32>
    %403 = vector.broadcast %401 : f32 to vector<16x16xf32>
    %404 = arith.mulf %403, %402 : vector<16x16xf32>
    %405 = arith.addf %395, %404 : vector<16x16xf32>
    %c39 = arith.constant 39 : index
    %406 = memref.load %arg2[%c39] : memref<98xf32, #tpu.memory_space<smem>>
    %407 = vector.extract_strided_slice %380 {offsets = [2, 0], sizes = [16, 16], strides = [1, 1]} : vector<22x16xf32> to vector<16x16xf32>
    %408 = vector.broadcast %406 : f32 to vector<16x16xf32>
    %409 = arith.mulf %408, %407 : vector<16x16xf32>
    %410 = arith.addf %400, %409 : vector<16x16xf32>
    %c52 = arith.constant 52 : index
    %411 = memref.load %arg2[%c52] : memref<98xf32, #tpu.memory_space<smem>>
    %412 = vector.extract_strided_slice %378 {offsets = [3, 0], sizes = [16, 16], strides = [1, 1]} : vector<22x16xf32> to vector<16x16xf32>
    %413 = vector.broadcast %411 : f32 to vector<16x16xf32>
    %414 = arith.mulf %413, %412 : vector<16x16xf32>
    %415 = arith.addf %405, %414 : vector<16x16xf32>
    %c53 = arith.constant 53 : index
    %416 = memref.load %arg2[%c53] : memref<98xf32, #tpu.memory_space<smem>>
    %417 = vector.extract_strided_slice %380 {offsets = [3, 0], sizes = [16, 16], strides = [1, 1]} : vector<22x16xf32> to vector<16x16xf32>
    %418 = vector.broadcast %416 : f32 to vector<16x16xf32>
    %419 = arith.mulf %418, %417 : vector<16x16xf32>
    %420 = arith.addf %410, %419 : vector<16x16xf32>
    %c66 = arith.constant 66 : index
    %421 = memref.load %arg2[%c66] : memref<98xf32, #tpu.memory_space<smem>>
    %422 = vector.extract_strided_slice %378 {offsets = [4, 0], sizes = [16, 16], strides = [1, 1]} : vector<22x16xf32> to vector<16x16xf32>
    %423 = vector.broadcast %421 : f32 to vector<16x16xf32>
    %424 = arith.mulf %423, %422 : vector<16x16xf32>
    %425 = arith.addf %415, %424 : vector<16x16xf32>
    %c67 = arith.constant 67 : index
    %426 = memref.load %arg2[%c67] : memref<98xf32, #tpu.memory_space<smem>>
    %427 = vector.extract_strided_slice %380 {offsets = [4, 0], sizes = [16, 16], strides = [1, 1]} : vector<22x16xf32> to vector<16x16xf32>
    %428 = vector.broadcast %426 : f32 to vector<16x16xf32>
    %429 = arith.mulf %428, %427 : vector<16x16xf32>
    %430 = arith.addf %420, %429 : vector<16x16xf32>
    %c80 = arith.constant 80 : index
    %431 = memref.load %arg2[%c80] : memref<98xf32, #tpu.memory_space<smem>>
    %432 = vector.extract_strided_slice %378 {offsets = [5, 0], sizes = [16, 16], strides = [1, 1]} : vector<22x16xf32> to vector<16x16xf32>
    %433 = vector.broadcast %431 : f32 to vector<16x16xf32>
    %434 = arith.mulf %433, %432 : vector<16x16xf32>
    %435 = arith.addf %425, %434 : vector<16x16xf32>
    %c81 = arith.constant 81 : index
    %436 = memref.load %arg2[%c81] : memref<98xf32, #tpu.memory_space<smem>>
    %437 = vector.extract_strided_slice %380 {offsets = [5, 0], sizes = [16, 16], strides = [1, 1]} : vector<22x16xf32> to vector<16x16xf32>
    %438 = vector.broadcast %436 : f32 to vector<16x16xf32>
    %439 = arith.mulf %438, %437 : vector<16x16xf32>
    %440 = arith.addf %430, %439 : vector<16x16xf32>
    %c94 = arith.constant 94 : index
    %441 = memref.load %arg2[%c94] : memref<98xf32, #tpu.memory_space<smem>>
    %442 = vector.extract_strided_slice %378 {offsets = [6, 0], sizes = [16, 16], strides = [1, 1]} : vector<22x16xf32> to vector<16x16xf32>
    %443 = vector.broadcast %441 : f32 to vector<16x16xf32>
    %444 = arith.mulf %443, %442 : vector<16x16xf32>
    %445 = arith.addf %435, %444 : vector<16x16xf32>
    %c95 = arith.constant 95 : index
    %446 = memref.load %arg2[%c95] : memref<98xf32, #tpu.memory_space<smem>>
    %447 = vector.extract_strided_slice %380 {offsets = [6, 0], sizes = [16, 16], strides = [1, 1]} : vector<22x16xf32> to vector<16x16xf32>
    %448 = vector.broadcast %446 : f32 to vector<16x16xf32>
    %449 = arith.mulf %448, %447 : vector<16x16xf32>
    %450 = arith.addf %440, %449 : vector<16x16xf32>
    %451 = arith.index_cast %4 : i32 to index
    %c6_14 = arith.constant 6 : index
    %452 = vector.load %arg8[%451, %c6_14] : memref<22x22xf32, #tpu.memory_space<vmem>>, vector<22x16xf32>
    %453 = arith.index_cast %4 : i32 to index
    %c6_15 = arith.constant 6 : index
    %454 = vector.load %arg9[%453, %c6_15] : memref<22x22xf32, #tpu.memory_space<vmem>>, vector<22x16xf32>
    %c12 = arith.constant 12 : index
    %455 = memref.load %arg2[%c12] : memref<98xf32, #tpu.memory_space<smem>>
    %456 = vector.extract_strided_slice %452 {offsets = [0, 0], sizes = [16, 16], strides = [1, 1]} : vector<22x16xf32> to vector<16x16xf32>
    %457 = vector.broadcast %455 : f32 to vector<16x16xf32>
    %458 = arith.mulf %457, %456 : vector<16x16xf32>
    %459 = arith.addf %445, %458 : vector<16x16xf32>
    %c13 = arith.constant 13 : index
    %460 = memref.load %arg2[%c13] : memref<98xf32, #tpu.memory_space<smem>>
    %461 = vector.extract_strided_slice %454 {offsets = [0, 0], sizes = [16, 16], strides = [1, 1]} : vector<22x16xf32> to vector<16x16xf32>
    %462 = vector.broadcast %460 : f32 to vector<16x16xf32>
    %463 = arith.mulf %462, %461 : vector<16x16xf32>
    %464 = arith.addf %450, %463 : vector<16x16xf32>
    %c26 = arith.constant 26 : index
    %465 = memref.load %arg2[%c26] : memref<98xf32, #tpu.memory_space<smem>>
    %466 = vector.extract_strided_slice %452 {offsets = [1, 0], sizes = [16, 16], strides = [1, 1]} : vector<22x16xf32> to vector<16x16xf32>
    %467 = vector.broadcast %465 : f32 to vector<16x16xf32>
    %468 = arith.mulf %467, %466 : vector<16x16xf32>
    %469 = arith.addf %459, %468 : vector<16x16xf32>
    %c27 = arith.constant 27 : index
    %470 = memref.load %arg2[%c27] : memref<98xf32, #tpu.memory_space<smem>>
    %471 = vector.extract_strided_slice %454 {offsets = [1, 0], sizes = [16, 16], strides = [1, 1]} : vector<22x16xf32> to vector<16x16xf32>
    %472 = vector.broadcast %470 : f32 to vector<16x16xf32>
    %473 = arith.mulf %472, %471 : vector<16x16xf32>
    %474 = arith.addf %464, %473 : vector<16x16xf32>
    %c40 = arith.constant 40 : index
    %475 = memref.load %arg2[%c40] : memref<98xf32, #tpu.memory_space<smem>>
    %476 = vector.extract_strided_slice %452 {offsets = [2, 0], sizes = [16, 16], strides = [1, 1]} : vector<22x16xf32> to vector<16x16xf32>
    %477 = vector.broadcast %475 : f32 to vector<16x16xf32>
    %478 = arith.mulf %477, %476 : vector<16x16xf32>
    %479 = arith.addf %469, %478 : vector<16x16xf32>
    %c41 = arith.constant 41 : index
    %480 = memref.load %arg2[%c41] : memref<98xf32, #tpu.memory_space<smem>>
    %481 = vector.extract_strided_slice %454 {offsets = [2, 0], sizes = [16, 16], strides = [1, 1]} : vector<22x16xf32> to vector<16x16xf32>
    %482 = vector.broadcast %480 : f32 to vector<16x16xf32>
    %483 = arith.mulf %482, %481 : vector<16x16xf32>
    %484 = arith.addf %474, %483 : vector<16x16xf32>
    %c54 = arith.constant 54 : index
    %485 = memref.load %arg2[%c54] : memref<98xf32, #tpu.memory_space<smem>>
    %486 = vector.extract_strided_slice %452 {offsets = [3, 0], sizes = [16, 16], strides = [1, 1]} : vector<22x16xf32> to vector<16x16xf32>
    %487 = vector.broadcast %485 : f32 to vector<16x16xf32>
    %488 = arith.mulf %487, %486 : vector<16x16xf32>
    %489 = arith.addf %479, %488 : vector<16x16xf32>
    %c55 = arith.constant 55 : index
    %490 = memref.load %arg2[%c55] : memref<98xf32, #tpu.memory_space<smem>>
    %491 = vector.extract_strided_slice %454 {offsets = [3, 0], sizes = [16, 16], strides = [1, 1]} : vector<22x16xf32> to vector<16x16xf32>
    %492 = vector.broadcast %490 : f32 to vector<16x16xf32>
    %493 = arith.mulf %492, %491 : vector<16x16xf32>
    %494 = arith.addf %484, %493 : vector<16x16xf32>
    %c68 = arith.constant 68 : index
    %495 = memref.load %arg2[%c68] : memref<98xf32, #tpu.memory_space<smem>>
    %496 = vector.extract_strided_slice %452 {offsets = [4, 0], sizes = [16, 16], strides = [1, 1]} : vector<22x16xf32> to vector<16x16xf32>
    %497 = vector.broadcast %495 : f32 to vector<16x16xf32>
    %498 = arith.mulf %497, %496 : vector<16x16xf32>
    %499 = arith.addf %489, %498 : vector<16x16xf32>
    %c69 = arith.constant 69 : index
    %500 = memref.load %arg2[%c69] : memref<98xf32, #tpu.memory_space<smem>>
    %501 = vector.extract_strided_slice %454 {offsets = [4, 0], sizes = [16, 16], strides = [1, 1]} : vector<22x16xf32> to vector<16x16xf32>
    %502 = vector.broadcast %500 : f32 to vector<16x16xf32>
    %503 = arith.mulf %502, %501 : vector<16x16xf32>
    %504 = arith.addf %494, %503 : vector<16x16xf32>
    %c82 = arith.constant 82 : index
    %505 = memref.load %arg2[%c82] : memref<98xf32, #tpu.memory_space<smem>>
    %506 = vector.extract_strided_slice %452 {offsets = [5, 0], sizes = [16, 16], strides = [1, 1]} : vector<22x16xf32> to vector<16x16xf32>
    %507 = vector.broadcast %505 : f32 to vector<16x16xf32>
    %508 = arith.mulf %507, %506 : vector<16x16xf32>
    %509 = arith.addf %499, %508 : vector<16x16xf32>
    %c83 = arith.constant 83 : index
    %510 = memref.load %arg2[%c83] : memref<98xf32, #tpu.memory_space<smem>>
    %511 = vector.extract_strided_slice %454 {offsets = [5, 0], sizes = [16, 16], strides = [1, 1]} : vector<22x16xf32> to vector<16x16xf32>
    %512 = vector.broadcast %510 : f32 to vector<16x16xf32>
    %513 = arith.mulf %512, %511 : vector<16x16xf32>
    %514 = arith.addf %504, %513 : vector<16x16xf32>
    %c96 = arith.constant 96 : index
    %515 = memref.load %arg2[%c96] : memref<98xf32, #tpu.memory_space<smem>>
    %516 = vector.extract_strided_slice %452 {offsets = [6, 0], sizes = [16, 16], strides = [1, 1]} : vector<22x16xf32> to vector<16x16xf32>
    %517 = vector.broadcast %515 : f32 to vector<16x16xf32>
    %518 = arith.mulf %517, %516 : vector<16x16xf32>
    %519 = arith.addf %509, %518 : vector<16x16xf32>
    %c97 = arith.constant 97 : index
    %520 = memref.load %arg2[%c97] : memref<98xf32, #tpu.memory_space<smem>>
    %521 = vector.extract_strided_slice %454 {offsets = [6, 0], sizes = [16, 16], strides = [1, 1]} : vector<22x16xf32> to vector<16x16xf32>
    %522 = vector.broadcast %520 : f32 to vector<16x16xf32>
    %523 = arith.mulf %522, %521 : vector<16x16xf32>
    %524 = arith.addf %514, %523 : vector<16x16xf32>
    %525 = arith.addf %519, %524 : vector<16x16xf32>
    %526 = arith.negf %525 : vector<16x16xf32>
    %527 = math.exp %526 : vector<16x16xf32>
    %cst_16 = arith.constant 1.000000e+00 : f32
    %528 = vector.broadcast %cst_16 : f32 to vector<16x16xf32>
    %529 = arith.addf %528, %527 : vector<16x16xf32>
    %530 = arith.divf %528, %529 : vector<16x16xf32>
    %c0_17 = arith.constant 0 : index
    %c0_18 = arith.constant 0 : index
    %c0_19 = arith.constant 0 : index
    %c0_20 = arith.constant 0 : index
    %531 = vector.load %arg4[%c0_17, %c0_18, %c0_19, %c0_20] : memref<1x1x16x16xf32, #tpu.memory_space<vmem>>, vector<1x1x16x16xf32>
    %532 = vector.shape_cast %531 : vector<1x1x16x16xf32> to vector<16x16xf32>
    %533 = arith.mulf %530, %532 : vector<16x16xf32>
    %c0_21 = arith.constant 0 : index
    %534 = memref.load %arg3[%c0_21] : memref<1xf32, #tpu.memory_space<smem>>
    %535 = vector.broadcast %534 : f32 to vector<16x16xf32>
    %536 = arith.addf %533, %535 : vector<16x16xf32>
    %537 = arith.negf %536 : vector<16x16xf32>
    %538 = math.exp %537 : vector<16x16xf32>
    %cst_22 = arith.constant 1.000000e+00 : f32
    %539 = vector.broadcast %cst_22 : f32 to vector<16x16xf32>
    %540 = arith.addf %539, %538 : vector<16x16xf32>
    %541 = arith.divf %539, %540 : vector<16x16xf32>
    %c0_23 = arith.constant 0 : index
    %c0_24 = arith.constant 0 : index
    %c0_25 = arith.constant 0 : index
    %c0_26 = arith.constant 0 : index
    %542 = vector.load %arg7[%c0_23, %c0_24, %c0_25, %c0_26] : memref<1x1x16x16xf32, #tpu.memory_space<vmem>>, vector<1x1x16x16xf32>
    %543 = vector.shape_cast %542 : vector<1x1x16x16xf32> to vector<16x16xf32>
    %544 = vector.shape_cast %541 : vector<16x16xf32> to vector<1x1x16x16xf32>
    tpu.vector_store %arg7[%c0_23, %c0_24, %c0_25, %c0_26], %544 {strides = array<i32>} : memref<1x1x16x16xf32, #tpu.memory_space<vmem>>, vector<1x1x16x16xf32>,
    return
  }
  func.func @transform_0(%arg0: i32, %arg1: i32) -> i32 {
    %c0_i32 = arith.constant 0 : i32
    %c0_i32_0 = arith.constant 0 : i32
    return %c0_i32 : i32
  }
  func.func @transform_1(%arg0: i32, %arg1: i32) -> i32 {
    %c0_i32 = arith.constant 0 : i32
    %c0_i32_0 = arith.constant 0 : i32
    return %c0_i32 : i32
  }
  func.func @transform_2(%arg0: i32, %arg1: i32) -> (i32, i32, i32, i32) {
    %c0_i32 = arith.constant 0 : i32
    %c0_i32_0 = arith.constant 0 : i32
    %c0_i32_1 = arith.constant 0 : i32
    return %arg0, %c0_i32, %arg1, %c0_i32_0 : i32, i32, i32, i32
  }
  func.func @transform_3(%arg0: i32, %arg1: i32) -> (i32, i32, i32) {
    %c0_i32 = arith.constant 0 : i32
    %c0_i32_0 = arith.constant 0 : i32
    %c0_i32_1 = arith.constant 0 : i32
    return %arg0, %c0_i32, %c0_i32_0 : i32, i32, i32
  }
  func.func @transform_4(%arg0: i32, %arg1: i32) -> (i32, i32, i32) {
    %c0_i32 = arith.constant 0 : i32
    %c0_i32_0 = arith.constant 0 : i32
    %c0_i32_1 = arith.constant 0 : i32
    return %arg0, %c0_i32, %c0_i32_0 : i32, i32, i32
  }
  func.func @transform_5(%arg0: i32, %arg1: i32) -> (i32, i32, i32, i32) {
    %c0_i32 = arith.constant 0 : i32
    %c0_i32_0 = arith.constant 0 : i32
    %c0_i32_1 = arith.constant 0 : i32
    return %arg0, %c0_i32, %arg1, %c0_i32_0 : i32, i32, i32, i32
  }
}

</mosaic_0001>

<llo_original>
// kernel: attnet_forward.4
$region0: #{attnet_forward.4}
  #allocation0 [shape = 'u32[]', space=smem, size = 0x4, offset = 0x4, fixed_abs, tag = 'smem constant byte address 0x4 - core index']
  #allocation1 [shape = 'u32[144,128]{1,0:T(1,128)}', space=vmem, size = 0x12000, scoped, tag = 'internal scratch']
  %s0 = inlined_call_operand.vmem [shape: f32[2,16,1], index: 0, kind: input, shape index: {}]
  %s1 = inlined_call_operand.vmem [shape: f32[1,16], index: 1, kind: input, shape index: {}]
  %s2 = inlined_call_operand.vmem [shape: f32[2,16,256], index: 2, kind: input, shape index: {}]
  %s3 = inlined_call_operand.vmem [shape: f32[2,1,256], index: 3, kind: output, shape index: {0}]
  %s4 = inlined_call_operand.vmem [shape: f32[2,1,256], index: 4, kind: output, shape index: {1}]
  %s5 = inlined_call_operand.vmem [shape: f32[2,1,256], index: 5, kind: output, shape index: {2}]
  %6 = xla_tuple %s3, %s4, %s5
  %s7 = sld [smem:[#allocation0]]
  $region61: #{attnet_forward.4} parent=0
    _
  %s9 = ssub.s32 1, %s7
  %s10 = scalar_select 0, %s9, %s7
  loop: start=0, step=1, limit=4
  $region2: #{attnet_forward.4} parent=0 // loop_pre_header
    _
  $region3: #{attnet_forward.4} parent=0 // loop_header
    %s12 = sphi 0, %s16
    %p13 = scmp.ge.s32.totalorder %s12, 4
    %s19 = sphi 0, %s31
    %s20 = sphi 0, %s27
    %s21 = sphi 0, %s19
    %s22 = sphi 0, %s20
    %s23 = sphi 0, %s21
    %s24 = sphi 0, %s22
    %s34 = sphi 0, %s36
    %s37 = sphi 0, %s34
    %s38 = sphi 0, %s37
    %s54 = sphi 0, %s38
    %s58 = sphi 0, %s58
    %s60 = sphi 0, %s58
    %s61 = sphi 0, %s60
    %s75 = sphi 0, %s61
    %s83 = sphi 0, %s85
    %s86 = sphi 0, %s83
    %s87 = sphi 0, %s86
    %s103 = sphi 0, %s87
    %s111 = sphi 0, %s113
    %s114 = sphi 0, %s111
    %s115 = sphi 0, %s114
    %s131 = sphi 0, %s115
    %s139 = sphi 0, %s141
    %s142 = sphi 0, %s139
    %s143 = sphi 0, %s142
    %s159 = sphi 0, %s143
    %s167 = sphi 0, %s169
    %s170 = sphi 0, %s167
    %s171 = sphi 0, %s170
    %s187 = sphi 0, %s171
  $region4: #{attnet_forward.4} parent=0 // loop_header_branch
    %15 = sbr.rel (%p13) target = $region8
  $region5: #{attnet_forward.4} parent=0 // loop_body
    %s17 = ssub.s32 %s12, 1
    %s18 = ssub.s32 %s12, 2
    %s25 = sadd.s32 1, %s20
    %p26 = scmp.ge.s32.totalorder %s25, 1
    %s27 = scalar_select %p26, 0, %s25
    %s28 = sadd.s32 1, %s19
    %s29 = scalar_select %p26, %s28, %s19
    %p30 = scmp.ge.s32.totalorder %s29, 2
    %s31 = scalar_select %p30, 0, %s29
    %s32 = ssub.s32 %s19, %s31
    %p33 = scmp.eq.s32.totalorder %s32, 0
    %s35 = sadd.s32 %s34, 1
    %s36 = scalar_select %p33, %s34, %s35
    %p39 = pneg %p33
    %p40 = scmp.eq.s32.totalorder %s12, 1
    %p41 = por %p39, %p40
    %p42 = scmp.ne.s32.totalorder %s34, %s37
    %p43 = scmp.eq.s32.totalorder %s12, 0
    %p44 = por %p42, %p43
    %p45 = scmp.ne.s32.totalorder %s34, %s37
    %p46 = scmp.eq.s32.totalorder %s17, 1
    %p47 = por %p45, %p46
    %p48 = scmp.ne.s32.totalorder %s37, %s38
    %p49 = scmp.eq.s32.totalorder %s17, 0
    %p50 = por %p48, %p49
    %p51 = scmp.ne.s32.totalorder %s37, %s38
    %p52 = scmp.eq.s32.totalorder %s18, 1
    %p53 = por %p51, %p52
    %p55 = scmp.ne.s32.totalorder %s38, %s54
    %p56 = scmp.eq.s32.totalorder %s18, 0
    %p57 = por %p55, %p56
    %s59 = sadd.s32 %s58, 1
    %p62 = scmp.eq.s32.totalorder %s12, 1
    %p63 = scmp.ne.s32.totalorder %s58, %s60
    %p64 = scmp.eq.s32.totalorder %s12, 0
    %p65 = por %p63, %p64
    %p66 = scmp.ne.s32.totalorder %s58, %s60
    %p67 = scmp.eq.s32.totalorder %s17, 1
    %p68 = por %p66, %p67
    %p69 = scmp.ne.s32.totalorder %s60, %s61
    %p70 = scmp.eq.s32.totalorder %s17, 0
    %p71 = por %p69, %p70
    %p72 = scmp.ne.s32.totalorder %s60, %s61
    %p73 = scmp.eq.s32.totalorder %s18, 1
    %p74 = por %p72, %p73
    %p76 = scmp.ne.s32.totalorder %s61, %s75
    %p77 = scmp.eq.s32.totalorder %s18, 0
    %p78 = por %p76, %p77
    %s79 = ssub.s32 %s19, %s31
    %s80 = ssub.s32 %s20, %s27
    %s81 = sor.u32 %s79, %s80
    %p82 = scmp.eq.s32.totalorder %s81, 0
    %s84 = sadd.s32 %s83, 1
    %s85 = scalar_select %p82, %s83, %s84
    %p88 = pneg %p82
    %p89 = scmp.eq.s32.totalorder %s12, 1
    %p90 = por %p88, %p89
    %p91 = scmp.ne.s32.totalorder %s83, %s86
    %p92 = scmp.eq.s32.totalorder %s12, 0
    %p93 = por %p91, %p92
    %p94 = scmp.ne.s32.totalorder %s83, %s86
    %p95 = scmp.eq.s32.totalorder %s17, 1
    %p96 = por %p94, %p95
    %p97 = scmp.ne.s32.totalorder %s86, %s87
    %p98 = scmp.eq.s32.totalorder %s17, 0
    %p99 = por %p97, %p98
    %p100 = scmp.ne.s32.totalorder %s86, %s87
    %p101 = scmp.eq.s32.totalorder %s18, 1
    %p102 = por %p100, %p101
    %p104 = scmp.ne.s32.totalorder %s87, %s103
    %p105 = scmp.eq.s32.totalorder %s18, 0
    %p106 = por %p104, %p105
    %s107 = ssub.s32 %s19, %s31
    %s108 = ssub.s32 %s20, %s27
    %s109 = sor.u32 %s107, %s108
    %p110 = scmp.eq.s32.totalorder %s109, 0
    %s112 = sadd.s32 %s111, 1
    %s113 = scalar_select %p110, %s111, %s112
    %p116 = pneg %p110
    %p117 = scmp.eq.s32.totalorder %s12, 1
    %p118 = por %p116, %p117
    %p119 = scmp.ne.s32.totalorder %s111, %s114
    %p120 = scmp.eq.s32.totalorder %s12, 0
    %p121 = por %p119, %p120
    %p122 = scmp.ne.s32.totalorder %s111, %s114
    %p123 = scmp.eq.s32.totalorder %s17, 1
    %p124 = por %p122, %p123
    %p125 = scmp.ne.s32.totalorder %s114, %s115
    %p126 = scmp.eq.s32.totalorder %s17, 0
    %p127 = por %p125, %p126
    %p128 = scmp.ne.s32.totalorder %s114, %s115
    %p129 = scmp.eq.s32.totalorder %s18, 1
    %p130 = por %p128, %p129
    %p132 = scmp.ne.s32.totalorder %s115, %s131
    %p133 = scmp.eq.s32.totalorder %s18, 0
    %p134 = por %p132, %p133
    %s135 = ssub.s32 %s19, %s31
    %s136 = ssub.s32 %s20, %s27
    %s137 = sor.u32 %s135, %s136
    %p138 = scmp.eq.s32.totalorder %s137, 0
    %s140 = sadd.s32 %s139, 1
    %s141 = scalar_select %p138, %s139, %s140
    %p144 = pneg %p138
    %p145 = scmp.eq.s32.totalorder %s12, 1
    %p146 = por %p144, %p145
    %p147 = scmp.ne.s32.totalorder %s139, %s142
    %p148 = scmp.eq.s32.totalorder %s12, 0
    %p149 = por %p147, %p148
    %p150 = scmp.ne.s32.totalorder %s139, %s142
    %p151 = scmp.eq.s32.totalorder %s17, 1
    %p152 = por %p150, %p151
    %p153 = scmp.ne.s32.totalorder %s142, %s143
    %p154 = scmp.eq.s32.totalorder %s17, 0
    %p155 = por %p153, %p154
    %p156 = scmp.ne.s32.totalorder %s142, %s143
    %p157 = scmp.eq.s32.totalorder %s18, 1
    %p158 = por %p156, %p157
    %p160 = scmp.ne.s32.totalorder %s143, %s159
    %p161 = scmp.eq.s32.totalorder %s18, 0
    %p162 = por %p160, %p161
    %s163 = ssub.s32 %s19, %s31
    %s164 = ssub.s32 %s20, %s27
    %s165 = sor.u32 %s163, %s164
    %p166 = scmp.eq.s32.totalorder %s165, 0
    %s168 = sadd.s32 %s167, 1
    %s169 = scalar_select %p166, %s167, %s168
    %p172 = pneg %p166
    %p173 = scmp.eq.s32.totalorder %s12, 1
    %p174 = por %p172, %p173
    %p175 = scmp.ne.s32.totalorder %s167, %s170
    %p176 = scmp.eq.s32.totalorder %s12, 0
    %p177 = por %p175, %p176
    %p178 = scmp.ne.s32.totalorder %s167, %s170
    %p179 = scmp.eq.s32.totalorder %s17, 1
    %p180 = por %p178, %p179
    %p181 = scmp.ne.s32.totalorder %s170, %s171
    %p182 = scmp.eq.s32.totalorder %s17, 0
    %p183 = por %p181, %p182
    %p184 = scmp.ne.s32.totalorder %s170, %s171
    %p185 = scmp.eq.s32.totalorder %s18, 1
    %p186 = por %p184, %p185
    %p188 = scmp.ne.s32.totalorder %s171, %s187
    %p189 = scmp.eq.s32.totalorder %s18, 0
    %p190 = por %p188, %p189
    %p191 = scmp.le.s32.totalorder 1, %s12
    %p192 = scmp.lt.s32.totalorder %s12, 3
    %p193 = pnand %p191, %p192
    %p194 = pneg %p193
    // Predicated region
    $region9: #{attnet_forward.4} parent=5 // pred_check
      _
    $region10: #{attnet_forward.4} parent=5 // pred_check_branch
      %196 = sbr.rel (%p193) target = $region12
    $region11: #{attnet_forward.4} parent=5 // pred_region
      %s197 = ssub.s32 %s12, 1
      // Predicated region
      $region13: #{attnet_forward.4} parent=11 // pred_check
        %p198 = pneg %p71
      $region14: #{attnet_forward.4} parent=11 // pred_check_branch
        %200 = sbr.rel (%p198) target = $region16
      $region15: #{attnet_forward.4} parent=11 // pred_region
        _
      $region16: #{attnet_forward.4} parent=11 // pred_fallthru
        _
    $region12: #{attnet_forward.4} parent=5 // pred_fallthru
      _
    %p201 = scmp.lt.s32.totalorder %s12, 2
    // Predicated region
    $region17: #{attnet_forward.4} parent=5 // pred_check
      %p202 = pneg %p201
    $region18: #{attnet_forward.4} parent=5 // pred_check_branch
      %204 = sbr.rel (%p202) target = $region20
    $region19: #{attnet_forward.4} parent=5 // pred_region
      // Predicated region
      $region21: #{attnet_forward.4} parent=19 // pred_check
        %p205 = pneg %p44
      $region22: #{attnet_forward.4} parent=19 // pred_check_branch
        %207 = sbr.rel (%p205) target = $region24
      $region23: #{attnet_forward.4} parent=19 // pred_region
        %p208 = scmp.lt.s32.totalorder %s19, 1
        %s209 = scalar_select %p208, %s19, 1
        %s210 = smul.addr %s209, 2
        %s211 = smul.addr %s210, 8
        %s212 = scalar_lea.vmem %s0, %s211
      $region24: #{attnet_forward.4} parent=19 // pred_fallthru
        _
      // Predicated region
      $region25: #{attnet_forward.4} parent=19 // pred_check
        %p213 = pneg %p93
      $region26: #{attnet_forward.4} parent=19 // pred_check_branch
        %215 = sbr.rel (%p213) target = $region28
      $region27: #{attnet_forward.4} parent=19 // pred_region
        %s216 = smul.u32 2, %s20
        %p217 = scmp.lt.s32.totalorder %s19, 1
        %s218 = scalar_select %p217, %s19, 1
        %p219 = scmp.lt.s32.totalorder %s216, 1
        %s220 = scalar_select %p219, %s216, 1
        %s221 = smul.addr %s218, 4
        %s222 = sadd.s32 %s220, %s221
        %s223 = smul.addr %s222, 8
        %s224 = scalar_lea.vmem %s2, %s223
        %s225 = smul.u32 2, %s20
      $region28: #{attnet_forward.4} parent=19 // pred_fallthru
        _
    $region20: #{attnet_forward.4} parent=5 // pred_fallthru
      _
    %p226 = scmp.le.s32.totalorder 1, %s12
    %p227 = scmp.lt.s32.totalorder %s12, 3
    %p228 = pnand %p226, %p227
    %p229 = pneg %p228
    // Predicated region
    $region29: #{attnet_forward.4} parent=5 // pred_check
      _
    $region30: #{attnet_forward.4} parent=5 // pred_check_branch
      %231 = sbr.rel (%p228) target = $region32
    $region31: #{attnet_forward.4} parent=5 // pred_region
      %s232 = ssub.s32 %s12, 1
      %p233 = scmp.lt.s32.totalorder %s21, 1
      %s234 = scalar_select %p233, %s21, 1
      %s235 = smul.addr %s234, 2
      %s236 = smul.addr %s235, 8
      %s237 = scalar_lea.vmem %s0, %s236
      %p238 = pneg %p50
      %p239 = pneg %p47
      %p240 = pneg %p71
      %p241 = pneg %p68
      %s242 = smul.u32 2, %s22
      %p243 = scmp.lt.s32.totalorder %s21, 1
      %s244 = scalar_select %p243, %s21, 1
      %p245 = scmp.lt.s32.totalorder %s242, 1
      %s246 = scalar_select %p245, %s242, 1
      %s247 = smul.addr %s244, 4
      %s248 = sadd.s32 %s246, %s247
      %s249 = smul.addr %s248, 8
      %s250 = scalar_lea.vmem %s2, %s249
      %p251 = pneg %p99
      %p252 = pneg %p96
      %p253 = pneg %p127
      %p254 = pneg %p124
      %s255 = smul.u32 2, %s22
      %p256 = scmp.lt.s32.totalorder %s21, 1
      %s257 = scalar_select %p256, %s21, 1
      %p258 = scmp.lt.s32.totalorder %s255, 1
      %s259 = scalar_select %p258, %s255, 1
      %s260 = smul.addr %s257, 2
      %s261 = sadd.s32 %s259, %s260
      %s262 = scalar_lea.vmem %s3, %s261
      %p263 = pneg %p155
      %p264 = pneg %p152
      %s265 = smul.u32 2, %s22
      %p266 = scmp.lt.s32.totalorder %s21, 1
      %s267 = scalar_select %p266, %s21, 1
      %p268 = scmp.lt.s32.totalorder %s265, 1
      %s269 = scalar_select %p268, %s265, 1
      %s270 = smul.addr %s267, 2
      %s271 = sadd.s32 %s269, %s270
      %s272 = scalar_lea.vmem %s4, %s271
      %p273 = pneg %p183
      %p274 = pneg %p180
      %s275 = smul.u32 2, %s22
      %p276 = scmp.lt.s32.totalorder %s21, 1
      %s277 = scalar_select %p276, %s21, 1
      %p278 = scmp.lt.s32.totalorder %s275, 1
      %s279 = scalar_select %p278, %s275, 1
      %s280 = smul.addr %s277, 2
      %s281 = sadd.s32 %s279, %s280
      %s282 = scalar_lea.vmem %s5, %s281
      %p283 = scmp.lt.s32.totalorder %s21, 1
      %s284 = scalar_select %p283, %s21, 1
      %s285 = smul.addr %s284, 2
      %s286 = smul.addr %s285, 8
      %s287 = scalar_lea.vmem %s0, %s286
      %s288 = smul.u32 2, %s22
      %p289 = scmp.lt.s32.totalorder %s21, 1
      %s290 = scalar_select %p289, %s21, 1
      %p291 = scmp.lt.s32.totalorder %s288, 1
      %s292 = scalar_select %p291, %s288, 1
      %s293 = smul.addr %s290, 4
      %s294 = sadd.s32 %s292, %s293
      %s295 = smul.addr %s294, 8
      %s296 = scalar_lea.vmem %s2, %s295
      %s297 = smul.u32 2, %s22
      %s298 = smul.u32 2, %s22
      %p299 = scmp.lt.s32.totalorder %s21, 1
      %s300 = scalar_select %p299, %s21, 1
      %p301 = scmp.lt.s32.totalorder %s298, 1
      %s302 = scalar_select %p301, %s298, 1
      %s303 = smul.addr %s300, 2
      %s304 = sadd.s32 %s302, %s303
      %s305 = scalar_lea.vmem %s3, %s304
      %s306 = smul.u32 2, %s22
      %s307 = smul.u32 2, %s22
      %p308 = scmp.lt.s32.totalorder %s21, 1
      %s309 = scalar_select %p308, %s21, 1
      %p310 = scmp.lt.s32.totalorder %s307, 1
      %s311 = scalar_select %p310, %s307, 1
      %s312 = smul.addr %s309, 2
      %s313 = sadd.s32 %s311, %s312
      %s314 = scalar_lea.vmem %s4, %s313
      %s315 = smul.u32 2, %s22
      %s316 = smul.u32 2, %s22
      %p317 = scmp.lt.s32.totalorder %s21, 1
      %s318 = scalar_select %p317, %s21, 1
      %p319 = scmp.lt.s32.totalorder %s316, 1
      %s320 = scalar_select %p319, %s316, 1
      %s321 = smul.addr %s318, 2
      %s322 = sadd.s32 %s320, %s321
      %s323 = scalar_lea.vmem %s5, %s322
      %s324 = smul.u32 2, %s22
      %v325 = vld [vmem:[%s296] sm:$0xff]
      %v326 = vld [vmem:[%s296 + $0x8] sm:$0xff]
      %v327 = vld [vmem:[%s296 + $0x10] sm:$0xff]
      %v328 = vld [vmem:[%s296 + $0x18] sm:$0xff]
      %v329 = vld [vmem:[%s287] sm:$0xff]
      %v330 = vld [vmem:[%s287 + $0x8] sm:$0xff]
      %332 = vset.pattern.permute.xlu0 0
      %333 = vperm.xlu0 %332, %v329
      %v334 = vpop.permute.xlu0 %333
      %337 = vset.pattern.permute.xlu0 0
      %338 = vperm.xlu0 %337, %v330
      %v339 = vpop.permute.xlu0 %338
      %v341 = vmul.f32 %v325, %v334
      %v342 = vmul.f32 %v326, %v334
      %v343 = vmul.f32 %v327, %v339
      %v344 = vmul.f32 %v328, %v339
      %v345 = vadd.f32 %v341, %v343
      %v346 = vrot.slane %v345, 4
      %v347 = vadd.f32 %v345, %v346
      %v348 = vrot.slane %v347, 2
      %v349 = vadd.f32 %v347, %v348
      %v350 = vrot.slane %v349, 1
      %v351 = vadd.f32 %v349, %v350
      %v352 = vadd.f32 %v342, %v344
      %v353 = vrot.slane %v352, 4
      %v354 = vadd.f32 %v352, %v353
      %v355 = vrot.slane %v354, 2
      %v356 = vadd.f32 %v354, %v355
      %v357 = vrot.slane %v356, 1
      %v358 = vadd.f32 %v356, %v357
      %v359 = vmul.f32 %v351, 0.0625
      %v360 = vmul.f32 %v358, 0.0625
      %v363 = vcombine.low %v359, %v360
      %v365 = vunpack.c.l.s4 1966171168
      %v366 = vunpack.c.0.s8 %v365
      %v367 = vlaneseq
      %v368 = vshrl.u32 %v367, 7
      %v369 = vsub.s32 %v366, %v368
      %v370 = vrot.slane %v363, %v369
      %v372 = vunpack.c.l.s4 1966171168
      %v373 = vunpack.c.0.s8 %v372
      %v374 = vlaneseq
      %v375 = vshrl.u32 %v374, 7
      %v376 = vsub.s32 %v373, %v375
      %v377 = vrot.slane %v370, %v376
      %v379 = vlaneseq
      %vm380 = vcmp.ge.s32.totalorder %v379, 0
      %vm381 = vcmp.lt.s32.totalorder %v379, 256
      %vm382 = vmand %vm380, %vm381
      %383 = vst.msk [vmem:[%s305] sm:$0x3] %vm382, %v377
      %v384 = vmax.f32 %v341, %v343
      %v385 = vrot.slane %v384, 4
      %v386 = vmax.f32 %v384, %v385
      %v387 = vrot.slane %v386, 2
      %v388 = vmax.f32 %v386, %v387
      %v389 = vrot.slane %v388, 1
      %v390 = vmax.f32 %v388, %v389
      %v391 = vmax.f32 %v342, %v344
      %v392 = vrot.slane %v391, 4
      %v393 = vmax.f32 %v391, %v392
      %v394 = vrot.slane %v393, 2
      %v395 = vmax.f32 %v393, %v394
      %v396 = vrot.slane %v395, 1
      %v397 = vmax.f32 %v395, %v396
      %v400 = vcombine.low %v390, %v397
      %v402 = vunpack.c.l.s4 1966171168
      %v403 = vunpack.c.0.s8 %v402
      %v404 = vlaneseq
      %v405 = vshrl.u32 %v404, 7
      %v406 = vsub.s32 %v403, %v405
      %v407 = vrot.slane %v400, %v406
      %v409 = vunpack.c.l.s4 1966171168
      %v410 = vunpack.c.0.s8 %v409
      %v411 = vlaneseq
      %v412 = vshrl.u32 %v411, 7
      %v413 = vsub.s32 %v410, %v412
      %v414 = vrot.slane %v407, %v413
      %416 = vst.msk [vmem:[%s314] sm:$0x3] %vm382, %v414
      %v417 = vld [vmem:[%s1] sm:$0x1]
      %vm418 = vcmask 130048
      %v420 = vsel %vm418, %v417, 0
      %422 = vmatprep.subr.mxu0 %v342
      %423 = vmatpush1.msra.mxu0 %v341
      %424 = vmatprep.subr.mxu0 %v344
      %425 = vmatpush1.msra.mxu0 %v343
      %426 = vmatprep.subr.mxu0 0.0
      %427 = vmatpush1.msra.mxu0 0.0
      %428 = vmatprep.subr.mxu0 0.0
      %429 = vmatpush1.msra.mxu0 0.0
      %430 = vmatprep.subr.mxu0 0.0
      %431 = vmatpush1.msra.mxu0 0.0
      %432 = vmatprep.subr.mxu0 0.0
      %433 = vmatpush1.msra.mxu0 0.0
      %434 = vmatprep.subr.mxu0 0.0
      %435 = vmatpush1.msra.mxu0 0.0
      %436 = vmatprep.subr.mxu0 0.0
      %437 = vmatpush1.msra.mxu0 0.0
      %438 = vmatprep.subr.mxu0 0.0
      %439 = vmatpush1.msra.mxu0 0.0
      %440 = vmatprep.subr.mxu0 0.0
      %441 = vmatpush1.msra.mxu0 0.0
      %442 = vmatprep.subr.mxu0 0.0
      %443 = vmatpush1.msra.mxu0 0.0
      %444 = vmatprep.subr.mxu0 0.0
      %445 = vmatpush1.msra.mxu0 0.0
      %446 = vmatprep.subr.mxu0 0.0
      %447 = vmatpush1.msra.mxu0 0.0
      %448 = vmatprep.subr.mxu0 0.0
      %449 = vmatpush1.msra.mxu0 0.0
      %450 = vmatprep.subr.mxu0 0.0
      %451 = vmatpush1.msra.mxu0 0.0
      %452 = vmatprep.subr.mxu0 0.0
      %453 = vmatpush1.msra.mxu0 0.0
      %454 = vmatprep.subr.mxu0 0.0
      %455 = vmatpush1.msra.mxu0 0.0
      %456 = vmatprep.subr.mxu0 0.0
      %457 = vmatpush1.msra.mxu0 0.0
      %458 = vmatprep.subr.mxu0 0.0
      %459 = vmatpush1.msra.mxu0 0.0
      %460 = vmatprep.subr.mxu0 0.0
      %461 = vmatpush1.msra.mxu0 0.0
      %462 = vmatprep.subr.mxu0 0.0
      %463 = vmatpush1.msra.mxu0 0.0
      %464 = vmatprep.subr.mxu0 0.0
      %465 = vmatpush1.msra.mxu0 0.0
      %466 = vmatprep.subr.mxu0 0.0
      %467 = vmatpush1.msra.mxu0 0.0
      %468 = vmatprep.subr.mxu0 0.0
      %469 = vmatpush1.msra.mxu0 0.0
      %470 = vmatprep.subr.mxu0 0.0
      %471 = vmatpush1.msra.mxu0 0.0
      %472 = vmatprep.subr.mxu0 0.0
      %473 = vmatpush1.msra.mxu0 0.0
      %474 = vmatprep.subr.mxu0 0.0
      %475 = vmatpush1.msra.mxu0 0.0
      %476 = vmatprep.subr.mxu0 0.0
      %477 = vmatpush1.msra.mxu0 0.0
      %478 = vmatprep.subr.mxu0 0.0
      %479 = vmatpush1.msra.mxu0 0.0
      %480 = vmatprep.subr.mxu0 0.0
      %481 = vmatpush1.msra.mxu0 0.0
      %482 = vmatprep.subr.mxu0 0.0
      %483 = vmatpush1.msra.mxu0 0.0
      %484 = vmatprep.subr.mxu0 0.0
      %485 = vmatpush1.msra.mxu0 0.0
      %486 = vmatprep.mubr.f32.mxu0 0.0
      %487 = vmatmul.mubr.f32.gmra.mrb[0].mxu0 %v420
      %v488 = vpop.f32.mrb[0].mxu0
      %v489 = vadd.f32 0.0, %v488
      %v490 = vpop.f32.mrb[0].mxu0
      %v491 = vadd.f32 0.0, %v490
      %492 = vdwg.mxu0
      %v495 = vcombine.low %v489, %v491
      %v497 = vunpack.c.l.s4 1966171168
      %v498 = vunpack.c.0.s8 %v497
      %v499 = vlaneseq
      %v500 = vshrl.u32 %v499, 7
      %v501 = vsub.s32 %v498, %v500
      %v502 = vrot.slane %v495, %v501
      %v504 = vunpack.c.l.s4 1966171168
      %v505 = vunpack.c.0.s8 %v504
      %v506 = vlaneseq
      %v507 = vshrl.u32 %v506, 7
      %v508 = vsub.s32 %v505, %v507
      %v509 = vrot.slane %v502, %v508
      %511 = vst.msk [vmem:[%s323] sm:$0x3] %vm382, %v509
      %s512 = smul.u32 2, %s22
      %p513 = scmp.lt.s32.totalorder %s21, 1
      %s514 = scalar_select %p513, %s21, 1
      %p515 = scmp.lt.s32.totalorder %s512, 1
      %s516 = scalar_select %p515, %s512, 1
      %s517 = smul.addr %s514, 2
      %s518 = sadd.s32 %s516, %s517
      %s519 = scalar_lea.vmem %s3, %s518
      %s520 = smul.u32 2, %s22
      %p521 = scmp.lt.s32.totalorder %s21, 1
      %s522 = scalar_select %p521, %s21, 1
      %p523 = scmp.lt.s32.totalorder %s520, 1
      %s524 = scalar_select %p523, %s520, 1
      %s525 = smul.addr %s522, 2
      %s526 = sadd.s32 %s524, %s525
      %s527 = scalar_lea.vmem %s4, %s526
      %s528 = smul.u32 2, %s22
      %p529 = scmp.lt.s32.totalorder %s21, 1
      %s530 = scalar_select %p529, %s21, 1
      %p531 = scmp.lt.s32.totalorder %s528, 1
      %s532 = scalar_select %p531, %s528, 1
      %s533 = smul.addr %s530, 2
      %s534 = sadd.s32 %s532, %s533
      %s535 = scalar_lea.vmem %s5, %s534
      // Predicated region
      $region33: #{attnet_forward.4} parent=31 // pred_check
        %p536 = pneg %p124
      $region34: #{attnet_forward.4} parent=31 // pred_check_branch
        %538 = sbr.rel (%p536) target = $region36
      $region35: #{attnet_forward.4} parent=31 // pred_region
        %s539 = smul.u32 2, %s22
      $region36: #{attnet_forward.4} parent=31 // pred_fallthru
        _
      // Predicated region
      $region37: #{attnet_forward.4} parent=31 // pred_check
        %p540 = pneg %p152
      $region38: #{attnet_forward.4} parent=31 // pred_check_branch
        %542 = sbr.rel (%p540) target = $region40
      $region39: #{attnet_forward.4} parent=31 // pred_region
        %s543 = smul.u32 2, %s22
      $region40: #{attnet_forward.4} parent=31 // pred_fallthru
        _
      // Predicated region
      $region41: #{attnet_forward.4} parent=31 // pred_check
        %p544 = pneg %p180
      $region42: #{attnet_forward.4} parent=31 // pred_check_branch
        %546 = sbr.rel (%p544) target = $region44
      $region43: #{attnet_forward.4} parent=31 // pred_region
        %s547 = smul.u32 2, %s22
      $region44: #{attnet_forward.4} parent=31 // pred_fallthru
        _
    $region32: #{attnet_forward.4} parent=5 // pred_fallthru
      _
    %p548 = scmp.le.s32.totalorder 2, %s12
    // Predicated region
    $region45: #{attnet_forward.4} parent=5 // pred_check
      %p549 = pneg %p548
    $region46: #{attnet_forward.4} parent=5 // pred_check_branch
      %551 = sbr.rel (%p549) target = $region48
    $region47: #{attnet_forward.4} parent=5 // pred_region
      %s552 = ssub.s32 %s12, 2
      // Predicated region
      $region49: #{attnet_forward.4} parent=47 // pred_check
        %p553 = pneg %p130
      $region50: #{attnet_forward.4} parent=47 // pred_check_branch
        %555 = sbr.rel (%p553) target = $region52
      $region51: #{attnet_forward.4} parent=47 // pred_region
        %s556 = smul.u32 2, %s24
        %p557 = scmp.lt.s32.totalorder %s23, 1
        %s558 = scalar_select %p557, %s23, 1
        %p559 = scmp.lt.s32.totalorder %s556, 1
        %s560 = scalar_select %p559, %s556, 1
        %s561 = smul.addr %s558, 2
        %s562 = sadd.s32 %s560, %s561
        %s563 = scalar_lea.vmem %s3, %s562
      $region52: #{attnet_forward.4} parent=47 // pred_fallthru
        _
      // Predicated region
      $region53: #{attnet_forward.4} parent=47 // pred_check
        %p564 = pneg %p158
      $region54: #{attnet_forward.4} parent=47 // pred_check_branch
        %566 = sbr.rel (%p564) target = $region56
      $region55: #{attnet_forward.4} parent=47 // pred_region
        %s567 = smul.u32 2, %s24
        %p568 = scmp.lt.s32.totalorder %s23, 1
        %s569 = scalar_select %p568, %s23, 1
        %p570 = scmp.lt.s32.totalorder %s567, 1
        %s571 = scalar_select %p570, %s567, 1
        %s572 = smul.addr %s569, 2
        %s573 = sadd.s32 %s571, %s572
        %s574 = scalar_lea.vmem %s4, %s573
      $region56: #{attnet_forward.4} parent=47 // pred_fallthru
        _
      // Predicated region
      $region57: #{attnet_forward.4} parent=47 // pred_check
        %p575 = pneg %p186
      $region58: #{attnet_forward.4} parent=47 // pred_check_branch
        %577 = sbr.rel (%p575) target = $region60
      $region59: #{attnet_forward.4} parent=47 // pred_region
        %s578 = smul.u32 2, %s24
        %p579 = scmp.lt.s32.totalorder %s23, 1
        %s580 = scalar_select %p579, %s23, 1
        %p581 = scmp.lt.s32.totalorder %s578, 1
        %s582 = scalar_select %p581, %s578, 1
        %s583 = smul.addr %s580, 2
        %s584 = sadd.s32 %s582, %s583
        %s585 = scalar_lea.vmem %s5, %s584
      $region60: #{attnet_forward.4} parent=47 // pred_fallthru
        _
    $region48: #{attnet_forward.4} parent=5 // pred_fallthru
      _
  $region6: #{attnet_forward.4} parent=0 // loop_footer
    %s16 = sadd.s32 1, %s12
  $region7: #{attnet_forward.4} parent=0 // loop_footer_branch
    %11 = sbr.rel target = $region3
  $region8: #{attnet_forward.4} parent=0 // loop_exit
    _

// kernel: attnet_forward.3
$region0: #{attnet_forward.3}
  #allocation0 [shape = 'u32[]', space=smem, size = 0x4, offset = 0x4, fixed_abs, tag = 'smem constant byte address 0x4 - core index']
  #allocation1 [shape = 'u32[144,128]{1,0:T(1,128)}', space=vmem, size = 0x12000, scoped, tag = 'internal scratch']
  #allocation2 [shape = 'f32[16,1]{1,0:T(8,128)}', space=vmem, size = 0x2000, scoped, tag = 'scratch operand']
  #allocation3 [shape = 'f32[16,1]{1,0:T(8,128)}', space=vmem, size = 0x2000, scoped, tag = 'scratch operand']
  %s0 = inlined_call_operand.vmem [shape: f32[2,16,256], index: 0, kind: input, shape index: {}]
  %s1 = inlined_call_operand.vmem [shape: f32[4,16], index: 1, kind: input, shape index: {}]
  %s2 = inlined_call_operand.vmem [shape: f32[16,4], index: 2, kind: input, shape index: {}]
  %s3 = inlined_call_operand.vmem [shape: f32[2,16,1], index: 3, kind: output, shape index: {}]
  %s4 = sld [smem:[#allocation0]]
  $region53: #{attnet_forward.3} parent=0
    _
  %s6 = ssub.s32 1, %s4
  %s7 = scalar_select 0, %s6, %s4
  loop: start=0, step=1, limit=4
  $region2: #{attnet_forward.3} parent=0 // loop_pre_header
    _
  $region3: #{attnet_forward.3} parent=0 // loop_header
    %s9 = sphi 0, %s13
    %p10 = scmp.ge.s32.totalorder %s9, 4
    %s16 = sphi 0, %s28
    %s17 = sphi 0, %s24
    %s18 = sphi 0, %s16
    %s19 = sphi 0, %s17
    %s20 = sphi 0, %s18
    %s21 = sphi 0, %s19
    %s33 = sphi 0, %s35
    %s36 = sphi 0, %s33
    %s37 = sphi 0, %s36
    %s53 = sphi 0, %s37
    %s57 = sphi 0, %s57
    %s59 = sphi 0, %s57
    %s60 = sphi 0, %s59
    %s74 = sphi 0, %s60
    %s78 = sphi 0, %s78
    %s80 = sphi 0, %s78
    %s81 = sphi 0, %s80
    %s95 = sphi 0, %s81
    %s101 = sphi 0, %s103
    %s104 = sphi 0, %s101
    %s105 = sphi 0, %s104
    %s121 = sphi 0, %s105
  $region4: #{attnet_forward.3} parent=0 // loop_header_branch
    %12 = sbr.rel (%p10) target = $region8
  $region5: #{attnet_forward.3} parent=0 // loop_body
    %s14 = ssub.s32 %s9, 1
    %s15 = ssub.s32 %s9, 2
    %s22 = sadd.s32 1, %s17
    %p23 = scmp.ge.s32.totalorder %s22, 1
    %s24 = scalar_select %p23, 0, %s22
    %s25 = sadd.s32 1, %s16
    %s26 = scalar_select %p23, %s25, %s16
    %p27 = scmp.ge.s32.totalorder %s26, 2
    %s28 = scalar_select %p27, 0, %s26
    %s29 = ssub.s32 %s16, %s28
    %s30 = ssub.s32 %s17, %s24
    %s31 = sor.u32 %s29, %s30
    %p32 = scmp.eq.s32.totalorder %s31, 0
    %s34 = sadd.s32 %s33, 1
    %s35 = scalar_select %p32, %s33, %s34
    %p38 = pneg %p32
    %p39 = scmp.eq.s32.totalorder %s9, 1
    %p40 = por %p38, %p39
    %p41 = scmp.ne.s32.totalorder %s33, %s36
    %p42 = scmp.eq.s32.totalorder %s9, 0
    %p43 = por %p41, %p42
    %p44 = scmp.ne.s32.totalorder %s33, %s36
    %p45 = scmp.eq.s32.totalorder %s14, 1
    %p46 = por %p44, %p45
    %p47 = scmp.ne.s32.totalorder %s36, %s37
    %p48 = scmp.eq.s32.totalorder %s14, 0
    %p49 = por %p47, %p48
    %p50 = scmp.ne.s32.totalorder %s36, %s37
    %p51 = scmp.eq.s32.totalorder %s15, 1
    %p52 = por %p50, %p51
    %p54 = scmp.ne.s32.totalorder %s37, %s53
    %p55 = scmp.eq.s32.totalorder %s15, 0
    %p56 = por %p54, %p55
    %s58 = sadd.s32 %s57, 1
    %p61 = scmp.eq.s32.totalorder %s9, 1
    %p62 = scmp.ne.s32.totalorder %s57, %s59
    %p63 = scmp.eq.s32.totalorder %s9, 0
    %p64 = por %p62, %p63
    %p65 = scmp.ne.s32.totalorder %s57, %s59
    %p66 = scmp.eq.s32.totalorder %s14, 1
    %p67 = por %p65, %p66
    %p68 = scmp.ne.s32.totalorder %s59, %s60
    %p69 = scmp.eq.s32.totalorder %s14, 0
    %p70 = por %p68, %p69
    %p71 = scmp.ne.s32.totalorder %s59, %s60
    %p72 = scmp.eq.s32.totalorder %s15, 1
    %p73 = por %p71, %p72
    %p75 = scmp.ne.s32.totalorder %s60, %s74
    %p76 = scmp.eq.s32.totalorder %s15, 0
    %p77 = por %p75, %p76
    %s79 = sadd.s32 %s78, 1
    %p82 = scmp.eq.s32.totalorder %s9, 1
    %p83 = scmp.ne.s32.totalorder %s78, %s80
    %p84 = scmp.eq.s32.totalorder %s9, 0
    %p85 = por %p83, %p84
    %p86 = scmp.ne.s32.totalorder %s78, %s80
    %p87 = scmp.eq.s32.totalorder %s14, 1
    %p88 = por %p86, %p87
    %p89 = scmp.ne.s32.totalorder %s80, %s81
    %p90 = scmp.eq.s32.totalorder %s14, 0
    %p91 = por %p89, %p90
    %p92 = scmp.ne.s32.totalorder %s80, %s81
    %p93 = scmp.eq.s32.totalorder %s15, 1
    %p94 = por %p92, %p93
    %p96 = scmp.ne.s32.totalorder %s81, %s95
    %p97 = scmp.eq.s32.totalorder %s15, 0
    %p98 = por %p96, %p97
    %s99 = ssub.s32 %s16, %s28
    %p100 = scmp.eq.s32.totalorder %s99, 0
    %s102 = sadd.s32 %s101, 1
    %s103 = scalar_select %p100, %s101, %s102
    %p106 = pneg %p100
    %p107 = scmp.eq.s32.totalorder %s9, 1
    %p108 = por %p106, %p107
    %p109 = scmp.ne.s32.totalorder %s101, %s104
    %p110 = scmp.eq.s32.totalorder %s9, 0
    %p111 = por %p109, %p110
    %p112 = scmp.ne.s32.totalorder %s101, %s104
    %p113 = scmp.eq.s32.totalorder %s14, 1
    %p114 = por %p112, %p113
    %p115 = scmp.ne.s32.totalorder %s104, %s105
    %p116 = scmp.eq.s32.totalorder %s14, 0
    %p117 = por %p115, %p116
    %p118 = scmp.ne.s32.totalorder %s104, %s105
    %p119 = scmp.eq.s32.totalorder %s15, 1
    %p120 = por %p118, %p119
    %p122 = scmp.ne.s32.totalorder %s105, %s121
    %p123 = scmp.eq.s32.totalorder %s15, 0
    %p124 = por %p122, %p123
    %p125 = scmp.le.s32.totalorder 1, %s9
    %p126 = scmp.lt.s32.totalorder %s9, 3
    %p127 = pnand %p125, %p126
    %p128 = pneg %p127
    // Predicated region
    $region9: #{attnet_forward.3} parent=5 // pred_check
      _
    $region10: #{attnet_forward.3} parent=5 // pred_check_branch
      %130 = sbr.rel (%p127) target = $region12
    $region11: #{attnet_forward.3} parent=5 // pred_region
      %s131 = ssub.s32 %s9, 1
      // Predicated region
      $region13: #{attnet_forward.3} parent=11 // pred_check
        %p132 = pneg %p70
      $region14: #{attnet_forward.3} parent=11 // pred_check_branch
        %134 = sbr.rel (%p132) target = $region16
      $region15: #{attnet_forward.3} parent=11 // pred_region
        _
      $region16: #{attnet_forward.3} parent=11 // pred_fallthru
        _
      // Predicated region
      $region17: #{attnet_forward.3} parent=11 // pred_check
        %p135 = pneg %p91
      $region18: #{attnet_forward.3} parent=11 // pred_check_branch
        %137 = sbr.rel (%p135) target = $region20
      $region19: #{attnet_forward.3} parent=11 // pred_region
        _
      $region20: #{attnet_forward.3} parent=11 // pred_fallthru
        _
    $region12: #{attnet_forward.3} parent=5 // pred_fallthru
      _
    %p138 = scmp.lt.s32.totalorder %s9, 2
    // Predicated region
    $region21: #{attnet_forward.3} parent=5 // pred_check
      %p139 = pneg %p138
    $region22: #{attnet_forward.3} parent=5 // pred_check_branch
      %141 = sbr.rel (%p139) target = $region24
    $region23: #{attnet_forward.3} parent=5 // pred_region
      // Predicated region
      $region25: #{attnet_forward.3} parent=23 // pred_check
        %p142 = pneg %p43
      $region26: #{attnet_forward.3} parent=23 // pred_check_branch
        %144 = sbr.rel (%p142) target = $region28
      $region27: #{attnet_forward.3} parent=23 // pred_region
        %s145 = smul.u32 2, %s17
        %p146 = scmp.lt.s32.totalorder %s16, 1
        %s147 = scalar_select %p146, %s16, 1
        %p148 = scmp.lt.s32.totalorder %s145, 1
        %s149 = scalar_select %p148, %s145, 1
        %s150 = smul.addr %s147, 4
        %s151 = sadd.s32 %s149, %s150
        %s152 = smul.addr %s151, 8
        %s153 = scalar_lea.vmem %s0, %s152
        %s154 = smul.u32 2, %s17
      $region28: #{attnet_forward.3} parent=23 // pred_fallthru
        _
    $region24: #{attnet_forward.3} parent=5 // pred_fallthru
      _
    %p155 = scmp.le.s32.totalorder 1, %s9
    %p156 = scmp.lt.s32.totalorder %s9, 3
    %p157 = pnand %p155, %p156
    %p158 = pneg %p157
    // Predicated region
    $region29: #{attnet_forward.3} parent=5 // pred_check
      _
    $region30: #{attnet_forward.3} parent=5 // pred_check_branch
      %160 = sbr.rel (%p157) target = $region32
    $region31: #{attnet_forward.3} parent=5 // pred_region
      %s161 = ssub.s32 %s9, 1
      %s162 = smul.u32 2, %s19
      %p163 = scmp.lt.s32.totalorder %s18, 1
      %s164 = scalar_select %p163, %s18, 1
      %p165 = scmp.lt.s32.totalorder %s162, 1
      %s166 = scalar_select %p165, %s162, 1
      %s167 = smul.addr %s164, 4
      %s168 = sadd.s32 %s166, %s167
      %s169 = smul.addr %s168, 8
      %s170 = scalar_lea.vmem %s0, %s169
      %p171 = pneg %p49
      %p172 = pneg %p46
      %p173 = pneg %p70
      %p174 = pneg %p67
      %p175 = pneg %p91
      %p176 = pneg %p88
      %p177 = pneg %p117
      %p178 = pneg %p114
      %p179 = scmp.lt.s32.totalorder %s18, 1
      %s180 = scalar_select %p179, %s18, 1
      %s181 = smul.addr %s180, 2
      %s182 = smul.addr %s181, 8
      %s183 = scalar_lea.vmem %s3, %s182
      %s184 = smul.u32 2, %s19
      %p185 = scmp.lt.s32.totalorder %s18, 1
      %s186 = scalar_select %p185, %s18, 1
      %p187 = scmp.lt.s32.totalorder %s184, 1
      %s188 = scalar_select %p187, %s184, 1
      %s189 = smul.addr %s186, 4
      %s190 = sadd.s32 %s188, %s189
      %s191 = smul.addr %s190, 8
      %s192 = scalar_lea.vmem %s0, %s191
      %s193 = smul.u32 2, %s19
      %p194 = scmp.lt.s32.totalorder %s18, 1
      %s195 = scalar_select %p194, %s18, 1
      %s196 = smul.addr %s195, 2
      %s197 = smul.addr %s196, 8
      %s198 = scalar_lea.vmem %s3, %s197
      %p199 = scmp.eq.s32.totalorder %s19, 0
      // Predicated region
      $region33: #{attnet_forward.3} parent=31 // pred_check
        %p200 = pneg %p199
      $region34: #{attnet_forward.3} parent=31 // pred_check_branch
        %202 = sbr.rel (%p200) target = $region36
      $region35: #{attnet_forward.3} parent=31 // pred_region
        %vm203 = vcmask 7168
        %204 = vst.msk [vmem:[#allocation2] sm:$0xff] %vm203, 0.0
        %205 = vst.msk [vmem:[#allocation2 + $0x8] sm:$0xff] %vm203, 0.0
        %206 = vst.msk [vmem:[#allocation3] sm:$0xff] %vm203, -inf
        %207 = vst.msk [vmem:[#allocation3 + $0x8] sm:$0xff] %vm203, -inf
      $region36: #{attnet_forward.3} parent=31 // pred_fallthru
        _
      %v208 = vld [vmem:[%s192] sm:$0xff]
      %v209 = vld [vmem:[%s192 + $0x8] sm:$0xff]
      %v210 = vld [vmem:[%s192 + $0x10] sm:$0xff]
      %v211 = vld [vmem:[%s192 + $0x18] sm:$0xff]
      %v212 = vld [vmem:[#allocation2] sm:$0xff]
      %v213 = vld [vmem:[#allocation2 + $0x8] sm:$0xff]
      %v214 = vadd.f32 %v208, %v209
      %215 = vadd.xlane.f32.xlu0 %v214
      %v216 = vpop.xlane.xlu0 %215
      %v217 = vadd.f32 %v210, %v211
      %218 = vadd.xlane.f32.xlu0 %v217
      %v219 = vpop.xlane.xlu0 %218
      %v220 = vadd.f32 %v212, %v216
      %v221 = vadd.f32 %v213, %v219
      %vm222 = vcmask 7168
      %223 = vst.msk [vmem:[#allocation2] sm:$0xff] %vm222, %v220
      %224 = vst.msk [vmem:[#allocation2 + $0x8] sm:$0xff] %vm222, %v221
      %v225 = vld [vmem:[#allocation3] sm:$0xff]
      %v226 = vld [vmem:[#allocation3 + $0x8] sm:$0xff]
      %v227 = vmax.f32 %v208, %v209
      %228 = vmax.xlane.f32.xlu0 %v227
      %v229 = vpop.xlane.xlu0 %228
      %v230 = vmax.f32 %v210, %v211
      %231 = vmax.xlane.f32.xlu0 %v230
      %v232 = vpop.xlane.xlu0 %231
      %v233 = vmax.f32 %v225, %v229
      %v234 = vmax.f32 %v226, %v232
      %235 = vst.msk [vmem:[#allocation3] sm:$0xff] %vm222, %v233
      %236 = vst.msk [vmem:[#allocation3 + $0x8] sm:$0xff] %vm222, %v234
      // Predicated region
      $region37: #{attnet_forward.3} parent=31 // pred_check
        %p237 = pneg %p199
      $region38: #{attnet_forward.3} parent=31 // pred_check_branch
        %239 = sbr.rel (%p237) target = $region40
      $region39: #{attnet_forward.3} parent=31 // pred_region
        %v240 = vld [vmem:[#allocation2] sm:$0xff]
        %v241 = vld [vmem:[#allocation2 + $0x8] sm:$0xff]
        %v242 = vmul.f32 %v240, 0.00390625
        %v243 = vmul.f32 %v241, 0.00390625
        %v244 = vld [vmem:[#allocation3] sm:$0xff]
        %v245 = vld [vmem:[#allocation3 + $0x8] sm:$0xff]
        %v246 = vld [vmem:[%s1] sm:$0xf]
        %v247 = vld [vmem:[%s2] sm:$0xff]
        %v248 = vld [vmem:[%s2 + $0x8] sm:$0xff]
        %vm249 = vcmask 130048
        %v251 = vsel %vm249, %v246, 0
        %253 = vmatprep.subr.mxu0 0.0
        %254 = vmatpush1.msra.mxu0 %v242
        %255 = vmatprep.subr.mxu0 0.0
        %256 = vmatpush1.msra.mxu0 %v243
        %257 = vmatprep.subr.mxu0 0.0
        %258 = vmatpush1.msra.mxu0 0.0
        %259 = vmatprep.subr.mxu0 0.0
        %260 = vmatpush1.msra.mxu0 0.0
        %261 = vmatprep.subr.mxu0 0.0
        %262 = vmatpush1.msra.mxu0 0.0
        %263 = vmatprep.subr.mxu0 0.0
        %264 = vmatpush1.msra.mxu0 0.0
        %265 = vmatprep.subr.mxu0 0.0
        %266 = vmatpush1.msra.mxu0 0.0
        %267 = vmatprep.subr.mxu0 0.0
        %268 = vmatpush1.msra.mxu0 0.0
        %269 = vmatprep.subr.mxu0 0.0
        %270 = vmatpush1.msra.mxu0 0.0
        %271 = vmatprep.subr.mxu0 0.0
        %272 = vmatpush1.msra.mxu0 0.0
        %273 = vmatprep.subr.mxu0 0.0
        %274 = vmatpush1.msra.mxu0 0.0
        %275 = vmatprep.subr.mxu0 0.0
        %276 = vmatpush1.msra.mxu0 0.0
        %277 = vmatprep.subr.mxu0 0.0
        %278 = vmatpush1.msra.mxu0 0.0
        %279 = vmatprep.subr.mxu0 0.0
        %280 = vmatpush1.msra.mxu0 0.0
        %281 = vmatprep.subr.mxu0 0.0
        %282 = vmatpush1.msra.mxu0 0.0
        %283 = vmatprep.subr.mxu0 0.0
        %284 = vmatpush1.msra.mxu0 0.0
        %285 = vmatprep.subr.mxu0 0.0
        %286 = vmatpush1.msra.mxu0 0.0
        %287 = vmatprep.subr.mxu0 0.0
        %288 = vmatpush1.msra.mxu0 0.0
        %289 = vmatprep.subr.mxu0 0.0
        %290 = vmatpush1.msra.mxu0 0.0
        %291 = vmatprep.subr.mxu0 0.0
        %292 = vmatpush1.msra.mxu0 0.0
        %293 = vmatprep.subr.mxu0 0.0
        %294 = vmatpush1.msra.mxu0 0.0
        %295 = vmatprep.subr.mxu0 0.0
        %296 = vmatpush1.msra.mxu0 0.0
        %297 = vmatprep.subr.mxu0 0.0
        %298 = vmatpush1.msra.mxu0 0.0
        %299 = vmatprep.subr.mxu0 0.0
        %300 = vmatpush1.msra.mxu0 0.0
        %301 = vmatprep.subr.mxu0 0.0
        %302 = vmatpush1.msra.mxu0 0.0
        %303 = vmatprep.subr.mxu0 0.0
        %304 = vmatpush1.msra.mxu0 0.0
        %305 = vmatprep.subr.mxu0 0.0
        %306 = vmatpush1.msra.mxu0 0.0
        %307 = vmatprep.subr.mxu0 0.0
        %308 = vmatpush1.msra.mxu0 0.0
        %309 = vmatprep.subr.mxu0 0.0
        %310 = vmatpush1.msra.mxu0 0.0
        %311 = vmatprep.subr.mxu0 0.0
        %312 = vmatpush1.msra.mxu0 0.0
        %313 = vmatprep.subr.mxu0 0.0
        %314 = vmatpush1.msra.mxu0 0.0
        %315 = vmatprep.subr.mxu0 0.0
        %316 = vmatpush1.msra.mxu0 0.0
        %317 = vmatprep.mubr.f32.mxu0 0.0
        %318 = vmatmul.mubr.f32.gmra.mrb[0].mxu0 %v251
        %v319 = vpop.f32.mrb[0].mxu0
        %v320 = vadd.f32 0.0, %v319
        %v321 = vpop.f32.mrb[0].mxu0
        %322 = vdwg.mxu0
        %v323 = vmax.f32 %v320, 0.0
        %324 = vmatprep.subr.mxu0 0.0
        %325 = vmatpush1.msra.mxu0 %v244
        %326 = vmatprep.subr.mxu0 0.0
        %327 = vmatpush1.msra.mxu0 %v245
        %328 = vmatprep.subr.mxu0 0.0
        %329 = vmatpush1.msra.mxu0 0.0
        %330 = vmatprep.subr.mxu0 0.0
        %331 = vmatpush1.msra.mxu0 0.0
        %332 = vmatprep.subr.mxu0 0.0
        %333 = vmatpush1.msra.mxu0 0.0
        %334 = vmatprep.subr.mxu0 0.0
        %335 = vmatpush1.msra.mxu0 0.0
        %336 = vmatprep.subr.mxu0 0.0
        %337 = vmatpush1.msra.mxu0 0.0
        %338 = vmatprep.subr.mxu0 0.0
        %339 = vmatpush1.msra.mxu0 0.0
        %340 = vmatprep.subr.mxu0 0.0
        %341 = vmatpush1.msra.mxu0 0.0
        %342 = vmatprep.subr.mxu0 0.0
        %343 = vmatpush1.msra.mxu0 0.0
        %344 = vmatprep.subr.mxu0 0.0
        %345 = vmatpush1.msra.mxu0 0.0
        %346 = vmatprep.subr.mxu0 0.0
        %347 = vmatpush1.msra.mxu0 0.0
        %348 = vmatprep.subr.mxu0 0.0
        %349 = vmatpush1.msra.mxu0 0.0
        %350 = vmatprep.subr.mxu0 0.0
        %351 = vmatpush1.msra.mxu0 0.0
        %352 = vmatprep.subr.mxu0 0.0
        %353 = vmatpush1.msra.mxu0 0.0
        %354 = vmatprep.subr.mxu0 0.0
        %355 = vmatpush1.msra.mxu0 0.0
        %356 = vmatprep.subr.mxu0 0.0
        %357 = vmatpush1.msra.mxu0 0.0
        %358 = vmatprep.subr.mxu0 0.0
        %359 = vmatpush1.msra.mxu0 0.0
        %360 = vmatprep.subr.mxu0 0.0
        %361 = vmatpush1.msra.mxu0 0.0
        %362 = vmatprep.subr.mxu0 0.0
        %363 = vmatpush1.msra.mxu0 0.0
        %364 = vmatprep.subr.mxu0 0.0
        %365 = vmatpush1.msra.mxu0 0.0
        %366 = vmatprep.subr.mxu0 0.0
        %367 = vmatpush1.msra.mxu0 0.0
        %368 = vmatprep.subr.mxu0 0.0
        %369 = vmatpush1.msra.mxu0 0.0
        %370 = vmatprep.subr.mxu0 0.0
        %371 = vmatpush1.msra.mxu0 0.0
        %372 = vmatprep.subr.mxu0 0.0
        %373 = vmatpush1.msra.mxu0 0.0
        %374 = vmatprep.subr.mxu0 0.0
        %375 = vmatpush1.msra.mxu0 0.0
        %376 = vmatprep.subr.mxu0 0.0
        %377 = vmatpush1.msra.mxu0 0.0
        %378 = vmatprep.subr.mxu0 0.0
        %379 = vmatpush1.msra.mxu0 0.0
        %380 = vmatprep.subr.mxu0 0.0
        %381 = vmatpush1.msra.mxu0 0.0
        %382 = vmatprep.subr.mxu0 0.0
        %383 = vmatpush1.msra.mxu0 0.0
        %384 = vmatprep.subr.mxu0 0.0
        %385 = vmatpush1.msra.mxu0 0.0
        %386 = vmatprep.subr.mxu0 0.0
        %387 = vmatpush1.msra.mxu0 0.0
        %388 = vmatprep.mubr.f32.mxu0 0.0
        %389 = vmatmul.mubr.f32.gmra.mrb[0].mxu0 %v251
        %v390 = vpop.f32.mrb[0].mxu0
        %v391 = vadd.f32 0.0, %v390
        %v392 = vpop.f32.mrb[0].mxu0
        %393 = vdwg.mxu0
        %v394 = vmax.f32 %v391, 0.0
        %vm395 = vcmask 31744
        %v397 = vsel %vm395, %v247, 0
        %v400 = vsel %vm395, %v248, 0
        %vm402 = vcmask 1043456
        %v404 = vsel %vm402, %v394, 0
        %406 = vmatprep.subr.mxu0 0.0
        %407 = vmatpush1.msra.mxu0 %v404
        %408 = vmatprep.subr.mxu0 0.0
        %409 = vmatpush1.msra.mxu0 0.0
        %410 = vmatprep.subr.mxu0 0.0
        %411 = vmatpush1.msra.mxu0 0.0
        %412 = vmatprep.subr.mxu0 0.0
        %413 = vmatpush1.msra.mxu0 0.0
        %414 = vmatprep.subr.mxu0 0.0
        %415 = vmatpush1.msra.mxu0 0.0
        %416 = vmatprep.subr.mxu0 0.0
        %417 = vmatpush1.msra.mxu0 0.0
        %418 = vmatprep.subr.mxu0 0.0
        %419 = vmatpush1.msra.mxu0 0.0
        %420 = vmatprep.subr.mxu0 0.0
        %421 = vmatpush1.msra.mxu0 0.0
        %422 = vmatprep.subr.mxu0 0.0
        %423 = vmatpush1.msra.mxu0 0.0
        %424 = vmatprep.subr.mxu0 0.0
        %425 = vmatpush1.msra.mxu0 0.0
        %426 = vmatprep.subr.mxu0 0.0
        %427 = vmatpush1.msra.mxu0 0.0
        %428 = vmatprep.subr.mxu0 0.0
        %429 = vmatpush1.msra.mxu0 0.0
        %430 = vmatprep.subr.mxu0 0.0
        %431 = vmatpush1.msra.mxu0 0.0
        %432 = vmatprep.subr.mxu0 0.0
        %433 = vmatpush1.msra.mxu0 0.0
        %434 = vmatprep.subr.mxu0 0.0
        %435 = vmatpush1.msra.mxu0 0.0
        %436 = vmatprep.subr.mxu0 0.0
        %437 = vmatpush1.msra.mxu0 0.0
        %438 = vmatprep.subr.mxu0 0.0
        %439 = vmatpush1.msra.mxu0 0.0
        %440 = vmatprep.subr.mxu0 0.0
        %441 = vmatpush1.msra.mxu0 0.0
        %442 = vmatprep.subr.mxu0 0.0
        %443 = vmatpush1.msra.mxu0 0.0
        %444 = vmatprep.subr.mxu0 0.0
        %445 = vmatpush1.msra.mxu0 0.0
        %446 = vmatprep.subr.mxu0 0.0
        %447 = vmatpush1.msra.mxu0 0.0
        %448 = vmatprep.subr.mxu0 0.0
        %449 = vmatpush1.msra.mxu0 0.0
        %450 = vmatprep.subr.mxu0 0.0
        %451 = vmatpush1.msra.mxu0 0.0
        %452 = vmatprep.subr.mxu0 0.0
        %453 = vmatpush1.msra.mxu0 0.0
        %454 = vmatprep.subr.mxu0 0.0
        %455 = vmatpush1.msra.mxu0 0.0
        %456 = vmatprep.subr.mxu0 0.0
        %457 = vmatpush1.msra.mxu0 0.0
        %458 = vmatprep.subr.mxu0 0.0
        %459 = vmatpush1.msra.mxu0 0.0
        %460 = vmatprep.subr.mxu0 0.0
        %461 = vmatpush1.msra.mxu0 0.0
        %462 = vmatprep.subr.mxu0 0.0
        %463 = vmatpush1.msra.mxu0 0.0
        %464 = vmatprep.subr.mxu0 0.0
        %465 = vmatpush1.msra.mxu0 0.0
        %466 = vmatprep.subr.mxu0 0.0
        %467 = vmatpush1.msra.mxu0 0.0
        %468 = vmatprep.subr.mxu0 0.0
        %469 = vmatpush1.msra.mxu0 0.0
        %470 = vmatprep.mubr.f32.mxu0 0.0
        %471 = vmatmul.mubr.f32.gmra.mrb[0].mxu0 %v397
        %v472 = vpop.f32.mrb[0].mxu0
        %v473 = vadd.f32 0.0, %v472
        %v474 = vpop.f32.mrb[0].mxu0
        %475 = vmatprep.mubr.f32.mxu0 0.0
        %476 = vmatmul.mubr.f32.gmra.mrb[0].mxu0 %v400
        %v477 = vpop.f32.mrb[0].mxu0
        %v478 = vadd.f32 0.0, %v477
        %v479 = vpop.f32.mrb[0].mxu0
        %480 = vdwg.mxu0
        %v482 = vsel %vm402, %v323, 0
        %484 = vmatprep.subr.mxu0 0.0
        %485 = vmatpush1.msra.mxu0 %v482
        %486 = vmatprep.subr.mxu0 0.0
        %487 = vmatpush1.msra.mxu0 0.0
        %488 = vmatprep.subr.mxu0 0.0
        %489 = vmatpush1.msra.mxu0 0.0
        %490 = vmatprep.subr.mxu0 0.0
        %491 = vmatpush1.msra.mxu0 0.0
        %492 = vmatprep.subr.mxu0 0.0
        %493 = vmatpush1.msra.mxu0 0.0
        %494 = vmatprep.subr.mxu0 0.0
        %495 = vmatpush1.msra.mxu0 0.0
        %496 = vmatprep.subr.mxu0 0.0
        %497 = vmatpush1.msra.mxu0 0.0
        %498 = vmatprep.subr.mxu0 0.0
        %499 = vmatpush1.msra.mxu0 0.0
        %500 = vmatprep.subr.mxu0 0.0
        %501 = vmatpush1.msra.mxu0 0.0
        %502 = vmatprep.subr.mxu0 0.0
        %503 = vmatpush1.msra.mxu0 0.0
        %504 = vmatprep.subr.mxu0 0.0
        %505 = vmatpush1.msra.mxu0 0.0
        %506 = vmatprep.subr.mxu0 0.0
        %507 = vmatpush1.msra.mxu0 0.0
        %508 = vmatprep.subr.mxu0 0.0
        %509 = vmatpush1.msra.mxu0 0.0
        %510 = vmatprep.subr.mxu0 0.0
        %511 = vmatpush1.msra.mxu0 0.0
        %512 = vmatprep.subr.mxu0 0.0
        %513 = vmatpush1.msra.mxu0 0.0
        %514 = vmatprep.subr.mxu0 0.0
        %515 = vmatpush1.msra.mxu0 0.0
        %516 = vmatprep.subr.mxu0 0.0
        %517 = vmatpush1.msra.mxu0 0.0
        %518 = vmatprep.subr.mxu0 0.0
        %519 = vmatpush1.msra.mxu0 0.0
        %520 = vmatprep.subr.mxu0 0.0
        %521 = vmatpush1.msra.mxu0 0.0
        %522 = vmatprep.subr.mxu0 0.0
        %523 = vmatpush1.msra.mxu0 0.0
        %524 = vmatprep.subr.mxu0 0.0
        %525 = vmatpush1.msra.mxu0 0.0
        %526 = vmatprep.subr.mxu0 0.0
        %527 = vmatpush1.msra.mxu0 0.0
        %528 = vmatprep.subr.mxu0 0.0
        %529 = vmatpush1.msra.mxu0 0.0
        %530 = vmatprep.subr.mxu0 0.0
        %531 = vmatpush1.msra.mxu0 0.0
        %532 = vmatprep.subr.mxu0 0.0
        %533 = vmatpush1.msra.mxu0 0.0
        %534 = vmatprep.subr.mxu0 0.0
        %535 = vmatpush1.msra.mxu0 0.0
        %536 = vmatprep.subr.mxu0 0.0
        %537 = vmatpush1.msra.mxu0 0.0
        %538 = vmatprep.subr.mxu0 0.0
        %539 = vmatpush1.msra.mxu0 0.0
        %540 = vmatprep.subr.mxu0 0.0
        %541 = vmatpush1.msra.mxu0 0.0
        %542 = vmatprep.subr.mxu0 0.0
        %543 = vmatpush1.msra.mxu0 0.0
        %544 = vmatprep.subr.mxu0 0.0
        %545 = vmatpush1.msra.mxu0 0.0
        %546 = vmatprep.subr.mxu0 0.0
        %547 = vmatpush1.msra.mxu0 0.0
        %548 = vmatprep.mubr.f32.mxu0 0.0
        %549 = vmatmul.mubr.f32.gmra.mrb[0].mxu0 %v397
        %v550 = vpop.f32.mrb[0].mxu0
        %v551 = vadd.f32 %v473, %v550
        %v552 = vpop.f32.mrb[0].mxu0
        %553 = vmatprep.mubr.f32.mxu0 0.0
        %554 = vmatmul.mubr.f32.gmra.mrb[0].mxu0 %v400
        %v555 = vpop.f32.mrb[0].mxu0
        %v556 = vadd.f32 %v478, %v555
        %v557 = vpop.f32.mrb[0].mxu0
        %558 = vdwg.mxu0
        %v559 = vxor.u32 %v551, 2147483648
        %v560 = vxor.u32 %v556, 2147483648
        %v561 = vmul.f32 %v559, 1.442695
        %v562 = vpow.pop %v561
        %v563 = vmul.f32 %v560, 1.442695
        %v564 = vpow.pop %v563
        %v565 = vadd.f32 %v562, 1.0
        %v566 = vadd.f32 %v564, 1.0
        %v567 = vrcp.pop %v565
        %v568 = vmul.f32 1.0, %v567
        %v569 = vrcp.pop %v566
        %v570 = vmul.f32 1.0, %v569
        %571 = vst.msk [vmem:[%s198] sm:$0xff] %vm222, %v568
        %572 = vst.msk [vmem:[%s198 + $0x8] sm:$0xff] %vm222, %v570
      $region40: #{attnet_forward.3} parent=31 // pred_fallthru
        _
      %p573 = scmp.lt.s32.totalorder %s18, 1
      %s574 = scalar_select %p573, %s18, 1
      %s575 = smul.addr %s574, 2
      %s576 = smul.addr %s575, 8
      %s577 = scalar_lea.vmem %s3, %s576
      // Predicated region
      $region41: #{attnet_forward.3} parent=31 // pred_check
        %p578 = pneg %p114
      $region42: #{attnet_forward.3} parent=31 // pred_check_branch
        %580 = sbr.rel (%p578) target = $region44
      $region43: #{attnet_forward.3} parent=31 // pred_region
        _
      $region44: #{attnet_forward.3} parent=31 // pred_fallthru
        _
    $region32: #{attnet_forward.3} parent=5 // pred_fallthru
      _
    %p581 = scmp.le.s32.totalorder 2, %s9
    // Predicated region
    $region45: #{attnet_forward.3} parent=5 // pred_check
      %p582 = pneg %p581
    $region46: #{attnet_forward.3} parent=5 // pred_check_branch
      %584 = sbr.rel (%p582) target = $region48
    $region47: #{attnet_forward.3} parent=5 // pred_region
      %s585 = ssub.s32 %s9, 2
      // Predicated region
      $region49: #{attnet_forward.3} parent=47 // pred_check
        %p586 = pneg %p120
      $region50: #{attnet_forward.3} parent=47 // pred_check_branch
        %588 = sbr.rel (%p586) target = $region52
      $region51: #{attnet_forward.3} parent=47 // pred_region
        %p589 = scmp.lt.s32.totalorder %s20, 1
        %s590 = scalar_select %p589, %s20, 1
        %s591 = smul.addr %s590, 2
        %s592 = smul.addr %s591, 8
        %s593 = scalar_lea.vmem %s3, %s592
      $region52: #{attnet_forward.3} parent=47 // pred_fallthru
        _
    $region48: #{attnet_forward.3} parent=5 // pred_fallthru
      _
  $region6: #{attnet_forward.3} parent=0 // loop_footer
    %s13 = sadd.s32 1, %s9
  $region7: #{attnet_forward.3} parent=0 // loop_footer_branch
    %8 = sbr.rel target = $region3
  $region8: #{attnet_forward.3} parent=0 // loop_exit
    _

// kernel: attnet_forward.5
$region0: #{attnet_forward.5}
  #allocation0 [shape = 'u32[]', space=smem, size = 0x4, offset = 0x4, fixed_abs, tag = 'smem constant byte address 0x4 - core index']
  #allocation1 [shape = 'u32[144,128]{1,0:T(1,128)}', space=vmem, size = 0x12000, scoped, tag = 'internal scratch']
  #allocation2 [shape = 'f32[22,22]{1,0:T(8,128)}', space=vmem, size = 0x3000, scoped, tag = 'scratch operand']
  #allocation3 [shape = 'f32[22,22]{1,0:T(8,128)}', space=vmem, size = 0x3000, scoped, tag = 'scratch operand']
  #allocation4 [shape = 'f32[1]{0:T(128)S(6)}', space=smem, size = 0x200, scoped, tag = 'scoped memory for attnet_forward.5']
  %s0 = inlined_call_operand.vmem [shape: f32[98], index: 0, kind: input, shape index: {}]
  %s1 = inlined_call_operand.<no memory space> [shape: f32[1], index: 1, kind: input, shape index: {}]
  %s2 = inlined_call_operand.vmem [shape: f32[2,1,16,16], index: 2, kind: input, shape index: {}]
  %s3 = inlined_call_operand.vmem [shape: f32[2,16,16], index: 3, kind: input, shape index: {}]
  %s4 = inlined_call_operand.vmem [shape: f32[2,16,16], index: 4, kind: input, shape index: {}]
  %s5 = inlined_call_operand.hbm [shape: f32[2,1,16,16], index: 5, kind: output, shape index: {}]
  %s6 = sld [smem:[#allocation0]]
  $region61: #{attnet_forward.5} parent=0
    _
  %s8 = ssub.s32 1, %s6
  %s9 = scalar_select 0, %s8, %s6
  %10 = sst [smem:[#allocation4]] %s1
  $region1: #{attnet_forward.5} parent=0
    #allocation5 [shape = 'u8[512]{0}', space=smem, size = 0x200, scoped, tag = 'input window, operand 0, single buffered']
    #allocation6 [shape = 's32[2]{0}', space=sflag, size = 0x8, scoped, tag = 'scoped memory for attnet_forward.5']
    #allocation7 [shape = 's32[2]{0}', space=sflag, size = 0x8, scoped, tag = 'scoped memory for attnet_forward.5']
    #allocation8 [shape = 'u8[16384]{0}', space=vmem, size = 0x4000, scoped, tag = 'output window, operand 0']
    %11 = vsyncpa [#allocation7], 0
    %12 = vsyncpa [#allocation6], 0
    %s13 = scalar_lea.sflag [#allocation6], 1
    %14 = vsyncpa %s13, 0
    loop: start=0, step=1, limit=4
    $region2: #{attnet_forward.5} parent=1 // loop_pre_header
      _
    $region3: #{attnet_forward.5} parent=1 // loop_header
      %s16 = sphi 0, %s20
      %p17 = scmp.ge.s32.totalorder %s16, 4
      %s23 = sphi 0, %s35
      %s24 = sphi 0, %s31
      %s25 = sphi 0, %s23
      %s26 = sphi 0, %s24
      %s27 = sphi 0, %s25
      %s28 = sphi 0, %s26
      %s36 = sphi 0, %s36
      %s38 = sphi 0, %s36
      %s39 = sphi 0, %s38
      %s53 = sphi 0, %s39
      %s57 = sphi 0, %s57
      %s59 = sphi 0, %s57
      %s60 = sphi 0, %s59
      %s74 = sphi 0, %s60
      %s82 = sphi 0, %s84
      %s85 = sphi 0, %s82
      %s86 = sphi 0, %s85
      %s102 = sphi 0, %s86
      %s108 = sphi 0, %s110
      %s111 = sphi 0, %s108
      %s112 = sphi 0, %s111
      %s128 = sphi 0, %s112
      %s134 = sphi 0, %s136
      %s137 = sphi 0, %s134
      %s138 = sphi 0, %s137
      %s154 = sphi 0, %s138
      %s162 = sphi 0, %s164
      %s165 = sphi 0, %s162
      %s166 = sphi 0, %s165
      %s182 = sphi 0, %s166
    $region4: #{attnet_forward.5} parent=1 // loop_header_branch
      %19 = sbr.rel (%p17) target = $region8
    $region5: #{attnet_forward.5} parent=1 // loop_body
      %s21 = ssub.s32 %s16, 1
      %s22 = ssub.s32 %s16, 2
      %s29 = sadd.s32 1, %s24
      %p30 = scmp.ge.s32.totalorder %s29, 1
      %s31 = scalar_select %p30, 0, %s29
      %s32 = sadd.s32 1, %s23
      %s33 = scalar_select %p30, %s32, %s23
      %p34 = scmp.ge.s32.totalorder %s33, 2
      %s35 = scalar_select %p34, 0, %s33
      %s37 = sadd.s32 %s36, 1
      %p40 = scmp.eq.s32.totalorder %s16, 1
      %p41 = scmp.ne.s32.totalorder %s36, %s38
      %p42 = scmp.eq.s32.totalorder %s16, 0
      %p43 = por %p41, %p42
      %p44 = scmp.ne.s32.totalorder %s36, %s38
      %p45 = scmp.eq.s32.totalorder %s21, 1
      %p46 = por %p44, %p45
      %p47 = scmp.ne.s32.totalorder %s38, %s39
      %p48 = scmp.eq.s32.totalorder %s21, 0
      %p49 = por %p47, %p48
      %p50 = scmp.ne.s32.totalorder %s38, %s39
      %p51 = scmp.eq.s32.totalorder %s22, 1
      %p52 = por %p50, %p51
      %p54 = scmp.ne.s32.totalorder %s39, %s53
      %p55 = scmp.eq.s32.totalorder %s22, 0
      %p56 = por %p54, %p55
      %s58 = sadd.s32 %s57, 1
      %p61 = scmp.eq.s32.totalorder %s16, 1
      %p62 = scmp.ne.s32.totalorder %s57, %s59
      %p63 = scmp.eq.s32.totalorder %s16, 0
      %p64 = por %p62, %p63
      %p65 = scmp.ne.s32.totalorder %s57, %s59
      %p66 = scmp.eq.s32.totalorder %s21, 1
      %p67 = por %p65, %p66
      %p68 = scmp.ne.s32.totalorder %s59, %s60
      %p69 = scmp.eq.s32.totalorder %s21, 0
      %p70 = por %p68, %p69
      %p71 = scmp.ne.s32.totalorder %s59, %s60
      %p72 = scmp.eq.s32.totalorder %s22, 1
      %p73 = por %p71, %p72
      %p75 = scmp.ne.s32.totalorder %s60, %s74
      %p76 = scmp.eq.s32.totalorder %s22, 0
      %p77 = por %p75, %p76
      %s78 = ssub.s32 %s23, %s35
      %s79 = ssub.s32 %s24, %s31
      %s80 = sor.u32 %s78, %s79
      %p81 = scmp.eq.s32.totalorder %s80, 0
      %s83 = sadd.s32 %s82, 1
      %s84 = scalar_select %p81, %s82, %s83
      %p87 = pneg %p81
      %p88 = scmp.eq.s32.totalorder %s16, 1
      %p89 = por %p87, %p88
      %p90 = scmp.ne.s32.totalorder %s82, %s85
      %p91 = scmp.eq.s32.totalorder %s16, 0
      %p92 = por %p90, %p91
      %p93 = scmp.ne.s32.totalorder %s82, %s85
      %p94 = scmp.eq.s32.totalorder %s21, 1
      %p95 = por %p93, %p94
      %p96 = scmp.ne.s32.totalorder %s85, %s86
      %p97 = scmp.eq.s32.totalorder %s21, 0
      %p98 = por %p96, %p97
      %p99 = scmp.ne.s32.totalorder %s85, %s86
      %p100 = scmp.eq.s32.totalorder %s22, 1
      %p101 = por %p99, %p100
      %p103 = scmp.ne.s32.totalorder %s86, %s102
      %p104 = scmp.eq.s32.totalorder %s22, 0
      %p105 = por %p103, %p104
      %s106 = ssub.s32 %s23, %s35
      %p107 = scmp.eq.s32.totalorder %s106, 0
      %s109 = sadd.s32 %s108, 1
      %s110 = scalar_select %p107, %s108, %s109
      %p113 = pneg %p107
      %p114 = scmp.eq.s32.totalorder %s16, 1
      %p115 = por %p113, %p114
      %p116 = scmp.ne.s32.totalorder %s108, %s111
      %p117 = scmp.eq.s32.totalorder %s16, 0
      %p118 = por %p116, %p117
      %p119 = scmp.ne.s32.totalorder %s108, %s111
      %p120 = scmp.eq.s32.totalorder %s21, 1
      %p121 = por %p119, %p120
      %p122 = scmp.ne.s32.totalorder %s111, %s112
      %p123 = scmp.eq.s32.totalorder %s21, 0
      %p124 = por %p122, %p123
      %p125 = scmp.ne.s32.totalorder %s111, %s112
      %p126 = scmp.eq.s32.totalorder %s22, 1
      %p127 = por %p125, %p126
      %p129 = scmp.ne.s32.totalorder %s112, %s128
      %p130 = scmp.eq.s32.totalorder %s22, 0
      %p131 = por %p129, %p130
      %s132 = ssub.s32 %s23, %s35
      %p133 = scmp.eq.s32.totalorder %s132, 0
      %s135 = sadd.s32 %s134, 1
      %s136 = scalar_select %p133, %s134, %s135
      %p139 = pneg %p133
      %p140 = scmp.eq.s32.totalorder %s16, 1
      %p141 = por %p139, %p140
      %p142 = scmp.ne.s32.totalorder %s134, %s137
      %p143 = scmp.eq.s32.totalorder %s16, 0
      %p144 = por %p142, %p143
      %p145 = scmp.ne.s32.totalorder %s134, %s137
      %p146 = scmp.eq.s32.totalorder %s21, 1
      %p147 = por %p145, %p146
      %p148 = scmp.ne.s32.totalorder %s137, %s138
      %p149 = scmp.eq.s32.totalorder %s21, 0
      %p150 = por %p148, %p149
      %p151 = scmp.ne.s32.totalorder %s137, %s138
      %p152 = scmp.eq.s32.totalorder %s22, 1
      %p153 = por %p151, %p152
      %p155 = scmp.ne.s32.totalorder %s138, %s154
      %p156 = scmp.eq.s32.totalorder %s22, 0
      %p157 = por %p155, %p156
      %s158 = ssub.s32 %s23, %s35
      %s159 = ssub.s32 %s24, %s31
      %s160 = sor.u32 %s158, %s159
      %p161 = scmp.eq.s32.totalorder %s160, 0
      %s163 = sadd.s32 %s162, 1
      %s164 = scalar_select %p161, %s162, %s163
      %p167 = pneg %p161
      %p168 = scmp.eq.s32.totalorder %s16, 1
      %p169 = por %p167, %p168
      %p170 = scmp.ne.s32.totalorder %s162, %s165
      %p171 = scmp.eq.s32.totalorder %s16, 0
      %p172 = por %p170, %p171
      %p173 = scmp.ne.s32.totalorder %s162, %s165
      %p174 = scmp.eq.s32.totalorder %s21, 1
      %p175 = por %p173, %p174
      %p176 = scmp.ne.s32.totalorder %s165, %s166
      %p177 = scmp.eq.s32.totalorder %s21, 0
      %p178 = por %p176, %p177
      %p179 = scmp.ne.s32.totalorder %s165, %s166
      %p180 = scmp.eq.s32.totalorder %s22, 1
      %p181 = por %p179, %p180
      %p183 = scmp.ne.s32.totalorder %s166, %s182
      %p184 = scmp.eq.s32.totalorder %s22, 0
      %p185 = por %p183, %p184
      %p186 = scmp.le.s32.totalorder 1, %s16
      %p187 = scmp.lt.s32.totalorder %s16, 3
      %p188 = pnand %p186, %p187
      %p189 = pneg %p188
      // Predicated region
      $region9: #{attnet_forward.5} parent=5 // pred_check
        _
      $region10: #{attnet_forward.5} parent=5 // pred_check_branch
        %191 = sbr.rel (%p188) target = $region12
      $region11: #{attnet_forward.5} parent=5 // pred_region
        %s192 = ssub.s32 %s16, 1
        // Predicated region
        $region13: #{attnet_forward.5} parent=11 // pred_check
          %p193 = pneg %p49
        $region14: #{attnet_forward.5} parent=11 // pred_check_branch
          %195 = sbr.rel (%p193) target = $region16
        $region15: #{attnet_forward.5} parent=11 // pred_region
          %s197 = ssub.s32 16, 16
          %198 = vsyncadd [#allocation7], %s197
          %s200 = sshll.u32 %s0, 4
          %s201 = int_to_ptr.vmem [resolvable:$true] %s200
          %203 = dma.vmem_to_smem %s201, 16, [#allocation5], [#allocation7]
        $region16: #{attnet_forward.5} parent=11 // pred_fallthru
          _
        // Predicated region
        $region17: #{attnet_forward.5} parent=11 // pred_check
          %p204 = pneg %p70
        $region18: #{attnet_forward.5} parent=11 // pred_check_branch
          %206 = sbr.rel (%p204) target = $region20
        $region19: #{attnet_forward.5} parent=11 // pred_region
          _
        $region20: #{attnet_forward.5} parent=11 // pred_fallthru
          _
      $region12: #{attnet_forward.5} parent=5 // pred_fallthru
        _
      %p207 = scmp.lt.s32.totalorder %s16, 2
      // Predicated region
      $region21: #{attnet_forward.5} parent=5 // pred_check
        %p208 = pneg %p207
      $region22: #{attnet_forward.5} parent=5 // pred_check_branch
        %210 = sbr.rel (%p208) target = $region24
      $region23: #{attnet_forward.5} parent=5 // pred_region
        // Predicated region
        $region25: #{attnet_forward.5} parent=23 // pred_check
          %p211 = pneg %p92
        $region26: #{attnet_forward.5} parent=23 // pred_check_branch
          %213 = sbr.rel (%p211) target = $region28
        $region27: #{attnet_forward.5} parent=23 // pred_region
          %s214 = smul.u32 2, %s24
          %p215 = scmp.lt.s32.totalorder %s23, 1
          %s216 = scalar_select %p215, %s23, 1
          %p217 = scmp.lt.s32.totalorder %s214, 1
          %s218 = scalar_select %p217, %s214, 1
          %s219 = smul.addr %s216, 2
          %s220 = sadd.s32 %s218, %s219
          %s221 = smul.addr %s220, 8
          %s222 = scalar_lea.vmem %s2, %s221
          %s223 = smul.u32 2, %s24
        $region28: #{attnet_forward.5} parent=23 // pred_fallthru
          _
        // Predicated region
        $region29: #{attnet_forward.5} parent=23 // pred_check
          %p224 = pneg %p118
        $region30: #{attnet_forward.5} parent=23 // pred_check_branch
          %226 = sbr.rel (%p224) target = $region32
        $region31: #{attnet_forward.5} parent=23 // pred_region
          %p227 = scmp.lt.s32.totalorder %s23, 1
          %s228 = scalar_select %p227, %s23, 1
          %s229 = smul.addr %s228, 2
          %s230 = smul.addr %s229, 8
          %s231 = scalar_lea.vmem %s3, %s230
        $region32: #{attnet_forward.5} parent=23 // pred_fallthru
          _
        // Predicated region
        $region33: #{attnet_forward.5} parent=23 // pred_check
          %p232 = pneg %p144
        $region34: #{attnet_forward.5} parent=23 // pred_check_branch
          %234 = sbr.rel (%p232) target = $region36
        $region35: #{attnet_forward.5} parent=23 // pred_region
          %p235 = scmp.lt.s32.totalorder %s23, 1
          %s236 = scalar_select %p235, %s23, 1
          %s237 = smul.addr %s236, 2
          %s238 = smul.addr %s237, 8
          %s239 = scalar_lea.vmem %s4, %s238
        $region36: #{attnet_forward.5} parent=23 // pred_fallthru
          _
      $region24: #{attnet_forward.5} parent=5 // pred_fallthru
        _
      %p240 = scmp.le.s32.totalorder 1, %s16
      %p241 = scmp.lt.s32.totalorder %s16, 3
      %p242 = pnand %p240, %p241
      %p243 = pneg %p242
      // Predicated region
      $region37: #{attnet_forward.5} parent=5 // pred_check
        _
      $region38: #{attnet_forward.5} parent=5 // pred_check_branch
        %245 = sbr.rel (%p242) target = $region40
      $region39: #{attnet_forward.5} parent=5 // pred_region
        %s246 = ssub.s32 %s16, 1
        // Predicated region
        $region41: #{attnet_forward.5} parent=39 // pred_check
          %p247 = pneg %p49
        $region42: #{attnet_forward.5} parent=39 // pred_check_branch
          %249 = sbr.rel (%p247) target = $region44
        $region43: #{attnet_forward.5} parent=39 // pred_region
          %250 = dma.done [#allocation7], 16
        $region44: #{attnet_forward.5} parent=39 // pred_fallthru
          _
        %251 = sfence
        %p252 = pneg %p49
        %p253 = pneg %p46
        %p254 = pneg %p70
        %p255 = pneg %p67
        %s256 = smul.u32 2, %s26
        %p257 = scmp.lt.s32.totalorder %s25, 1
        %s258 = scalar_select %p257, %s25, 1
        %p259 = scmp.lt.s32.totalorder %s256, 1
        %s260 = scalar_select %p259, %s256, 1
        %s261 = smul.addr %s258, 2
        %s262 = sadd.s32 %s260, %s261
        %s263 = smul.addr %s262, 8
        %s264 = scalar_lea.vmem %s2, %s263
        %p265 = pneg %p98
        %p266 = pneg %p95
        %p267 = scmp.lt.s32.totalorder %s25, 1
        %s268 = scalar_select %p267, %s25, 1
        %s269 = smul.addr %s268, 2
        %s270 = smul.addr %s269, 8
        %s271 = scalar_lea.vmem %s3, %s270
        %p272 = pneg %p124
        %p273 = pneg %p121
        %p274 = scmp.lt.s32.totalorder %s25, 1
        %s275 = scalar_select %p274, %s25, 1
        %s276 = smul.addr %s275, 2
        %s277 = smul.addr %s276, 8
        %s278 = scalar_lea.vmem %s4, %s277
        %p279 = pneg %p150
        %p280 = pneg %p147
        %p281 = pneg %p178
        %p282 = pneg %p175
        %s283 = sand.u32 %s165, 1
        %s284 = scalar_lea.sflag [#allocation6], %s283
        %s285 = sand.u32 %s165, 1
        %s286 = smul.addr %s285, 16
        %s287 = scalar_lea.vmem [#allocation8], %s286
        %s288 = smul.u32 2, %s26
        %p289 = scmp.lt.s32.totalorder %s25, 1
        %s290 = scalar_select %p289, %s25, 1
        %p291 = scmp.lt.s32.totalorder %s288, 1
        %s292 = scalar_select %p291, %s288, 1
        %s293 = smul.addr %s290, 2
        %s294 = sadd.s32 %s292, %s293
        %s295 = smul.addr %s294, 8
        %s296 = scalar_lea.vmem %s2, %s295
        %s297 = smul.u32 2, %s26
        %p298 = scmp.lt.s32.totalorder %s25, 1
        %s299 = scalar_select %p298, %s25, 1
        %s300 = smul.addr %s299, 2
        %s301 = smul.addr %s300, 8
        %s302 = scalar_lea.vmem %s3, %s301
        %p303 = scmp.lt.s32.totalorder %s25, 1
        %s304 = scalar_select %p303, %s25, 1
        %s305 = smul.addr %s304, 2
        %s306 = smul.addr %s305, 8
        %s307 = scalar_lea.vmem %s4, %s306
        %s308 = smul.u32 2, %s26
        %p309 = scmp.eq.s32.totalorder %s26, 0
        // Predicated region
        $region45: #{attnet_forward.5} parent=39 // pred_check
          %p310 = pneg %p309
        $region46: #{attnet_forward.5} parent=39 // pred_check_branch
          %312 = sbr.rel (%p310) target = $region48
        $region47: #{attnet_forward.5} parent=39 // pred_region
          %vm313 = vcmask 179200
          %314 = vst.msk [vmem:[#allocation2] sm:$0xff] %vm313, 0.0
          %315 = vst.msk [vmem:[#allocation2 + $0x8] sm:$0xff] %vm313, 0.0
          %vm316 = vcmask 177152
          %317 = vst.msk [vmem:[#allocation2 + $0x10] sm:$0x3f] %vm316, 0.0
          %318 = vst.msk [vmem:[#allocation3] sm:$0xff] %vm313, 0.0
          %319 = vst.msk [vmem:[#allocation3 + $0x8] sm:$0xff] %vm313, 0.0
          %320 = vst.msk [vmem:[#allocation3 + $0x10] sm:$0x3f] %vm316, 0.0
          %v321 = vld [vmem:[%s302] sm:$0xff]
          %v322 = vld [vmem:[%s302 + $0x8] sm:$0xff]
          %325 = vrot.lane.b32.xlu0 %v321, 3
          %v326 = vpop.permute.xlu0 %325
          %327 = vrot.lane.b32.xlu0 %v322, 3
          %v328 = vpop.permute.xlu0 %327
          %vm331 = vcmask 154648
          %332 = vst.msk [vmem:[#allocation2 + $0x3] sm:$0xff] %vm331, %v326
          %333 = vst.msk [vmem:[#allocation2 + $0xb] sm:$0xff] %vm331, %v328
          %v334 = vld [vmem:[%s307] sm:$0xff]
          %v335 = vld [vmem:[%s307 + $0x8] sm:$0xff]
          %338 = vrot.lane.b32.xlu0 %v334, 3
          %v339 = vpop.permute.xlu0 %338
          %340 = vrot.lane.b32.xlu0 %v335, 3
          %v341 = vpop.permute.xlu0 %340
          %344 = vst.msk [vmem:[#allocation3 + $0x3] sm:$0xff] %vm331, %v339
          %345 = vst.msk [vmem:[#allocation3 + $0xb] sm:$0xff] %vm331, %v341
        $region48: #{attnet_forward.5} parent=39 // pred_fallthru
          _
        %s346 = smul.u32 %s26, 16
        %s347 = scalar_lea.vmem [#allocation2], %s346
        %v348 = vld [vmem:[%s347] sm:$0xff]
        %v349 = vld [vmem:[%s347 + $0x8] sm:$0xff]
        %v350 = vld [vmem:[%s347 + $0x10] sm:$0x3f]
        %s351 = scalar_lea.vmem [#allocation3], %s346
        %v352 = vld [vmem:[%s351] sm:$0xff]
        %v353 = vld [vmem:[%s351 + $0x8] sm:$0xff]
        %v354 = vld [vmem:[%s351 + $0x10] sm:$0x3f]
        %s355 = sld [smem:[#allocation5]]
        %v356 = vstv %s355
        %v357 = vmul.f32 %v356, %v348
        %v358 = vmul.f32 %v356, %v349
        %v359 = vadd.f32 %v357, 0.0
        %v360 = vadd.f32 %v358, 0.0
        %s361 = sld [smem:[#allocation5 + $0x1]]
        %v362 = vstv %s361
        %v363 = vmul.f32 %v362, %v352
        %v364 = vmul.f32 %v362, %v353
        %v365 = vadd.f32 %v363, 0.0
        %v366 = vadd.f32 %v364, 0.0
        %s367 = sld [smem:[#allocation5 + $0xe]]
        %v368 = vstv %s367
        %v369 = vmul.f32 %v368, %v348
        %v370 = vmul.f32 %v368, %v349
        %v371 = vmul.f32 %v368, %v350
        %vm375 = vcmask 1046528
        %v376 = vrot.slane %v369, 1
        %v377 = vrot.slane %v370, 1
        %v378 = vsel %vm375, %v376, %v377
        %v379 = vrot.slane %v371, 1
        %v380 = vsel %vm375, %v377, %v379
        %v383 = vadd.f32 %v359, %v378
        %v384 = vadd.f32 %v360, %v380
        %s385 = sld [smem:[#allocation5 + $0xf]]
        %v386 = vstv %s385
        %v387 = vmul.f32 %v386, %v352
        %v388 = vmul.f32 %v386, %v353
        %v389 = vmul.f32 %v386, %v354
        %v393 = vrot.slane %v387, 1
        %v394 = vrot.slane %v388, 1
        %v395 = vsel %vm375, %v393, %v394
        %v396 = vrot.slane %v389, 1
        %v397 = vsel %vm375, %v394, %v396
        %v400 = vadd.f32 %v365, %v395
        %v401 = vadd.f32 %v366, %v397
        %s402 = sld [smem:[#allocation5 + $0x1c]]
        %v403 = vstv %s402
        %v404 = vmul.f32 %v403, %v348
        %v405 = vmul.f32 %v403, %v349
        %v406 = vmul.f32 %v403, %v350
        %vm410 = vcmask 1045504
        %v411 = vrot.slane %v404, 2
        %v412 = vrot.slane %v405, 2
        %v413 = vsel %vm410, %v411, %v412
        %v414 = vrot.slane %v406, 2
        %v415 = vsel %vm410, %v412, %v414
        %v418 = vadd.f32 %v383, %v413
        %v419 = vadd.f32 %v384, %v415
        %s420 = sld [smem:[#allocation5 + $0x1d]]
        %v421 = vstv %s420
        %v422 = vmul.f32 %v421, %v352
        %v423 = vmul.f32 %v421, %v353
        %v424 = vmul.f32 %v421, %v354
        %v428 = vrot.slane %v422, 2
        %v429 = vrot.slane %v423, 2
        %v430 = vsel %vm410, %v428, %v429
        %v431 = vrot.slane %v424, 2
        %v432 = vsel %vm410, %v429, %v431
        %v435 = vadd.f32 %v400, %v430
        %v436 = vadd.f32 %v401, %v432
        %s437 = sld [smem:[#allocation5 + $0x2a]]
        %v438 = vstv %s437
        %v439 = vmul.f32 %v438, %v348
        %v440 = vmul.f32 %v438, %v349
        %v441 = vmul.f32 %v438, %v350
        %vm445 = vcmask 1044480
        %v446 = vrot.slane %v439, 3
        %v447 = vrot.slane %v440, 3
        %v448 = vsel %vm445, %v446, %v447
        %v449 = vrot.slane %v441, 3
        %v450 = vsel %vm445, %v447, %v449
        %v453 = vadd.f32 %v418, %v448
        %v454 = vadd.f32 %v419, %v450
        %s455 = sld [smem:[#allocation5 + $0x2b]]
        %v456 = vstv %s455
        %v457 = vmul.f32 %v456, %v352
        %v458 = vmul.f32 %v456, %v353
        %v459 = vmul.f32 %v456, %v354
        %v463 = vrot.slane %v457, 3
        %v464 = vrot.slane %v458, 3
        %v465 = vsel %vm445, %v463, %v464
        %v466 = vrot.slane %v459, 3
        %v467 = vsel %vm445, %v464, %v466
        %v470 = vadd.f32 %v435, %v465
        %v471 = vadd.f32 %v436, %v467
        %s472 = sld [smem:[#allocation5 + $0x38]]
        %v473 = vstv %s472
        %v474 = vmul.f32 %v473, %v348
        %v475 = vmul.f32 %v473, %v349
        %v476 = vmul.f32 %v473, %v350
        %vm480 = vcmask 1043456
        %v481 = vrot.slane %v474, 4
        %v482 = vrot.slane %v475, 4
        %v483 = vsel %vm480, %v481, %v482
        %v484 = vrot.slane %v476, 4
        %v485 = vsel %vm480, %v482, %v484
        %v488 = vadd.f32 %v453, %v483
        %v489 = vadd.f32 %v454, %v485
        %s490 = sld [smem:[#allocation5 + $0x39]]
        %v491 = vstv %s490
        %v492 = vmul.f32 %v491, %v352
        %v493 = vmul.f32 %v491, %v353
        %v494 = vmul.f32 %v491, %v354
        %v498 = vrot.slane %v492, 4
        %v499 = vrot.slane %v493, 4
        %v500 = vsel %vm480, %v498, %v499
        %v501 = vrot.slane %v494, 4
        %v502 = vsel %vm480, %v499, %v501
        %v505 = vadd.f32 %v470, %v500
        %v506 = vadd.f32 %v471, %v502
        %s507 = sld [smem:[#allocation5 + $0x46]]
        %v508 = vstv %s507
        %v509 = vmul.f32 %v508, %v348
        %v510 = vmul.f32 %v508, %v349
        %v511 = vmul.f32 %v508, %v350
        %vm515 = vcmask 1042432
        %v516 = vrot.slane %v509, 5
        %v517 = vrot.slane %v510, 5
        %v518 = vsel %vm515, %v516, %v517
        %v519 = vrot.slane %v511, 5
        %v520 = vsel %vm515, %v517, %v519
        %v523 = vadd.f32 %v488, %v518
        %v524 = vadd.f32 %v489, %v520
        %s525 = sld [smem:[#allocation5 + $0x47]]
        %v526 = vstv %s525
        %v527 = vmul.f32 %v526, %v352
        %v528 = vmul.f32 %v526, %v353
        %v529 = vmul.f32 %v526, %v354
        %v533 = vrot.slane %v527, 5
        %v534 = vrot.slane %v528, 5
        %v535 = vsel %vm515, %v533, %v534
        %v536 = vrot.slane %v529, 5
        %v537 = vsel %vm515, %v534, %v536
        %v540 = vadd.f32 %v505, %v535
        %v541 = vadd.f32 %v506, %v537
        %s542 = sld [smem:[#allocation5 + $0x54]]
        %v543 = vstv %s542
        %v544 = vmul.f32 %v543, %v348
        %v545 = vmul.f32 %v543, %v349
        %v546 = vmul.f32 %v543, %v350
        %vm550 = vcmask 1041408
        %v551 = vrot.slane %v544, 6
        %v552 = vrot.slane %v545, 6
        %v553 = vsel %vm550, %v551, %v552
        %v554 = vrot.slane %v546, 6
        %v555 = vsel %vm550, %v552, %v554
        %v558 = vadd.f32 %v523, %v553
        %v559 = vadd.f32 %v524, %v555
        %s560 = sld [smem:[#allocation5 + $0x55]]
        %v561 = vstv %s560
        %v562 = vmul.f32 %v561, %v352
        %v563 = vmul.f32 %v561, %v353
        %v564 = vmul.f32 %v561, %v354
        %v568 = vrot.slane %v562, 6
        %v569 = vrot.slane %v563, 6
        %v570 = vsel %vm550, %v568, %v569
        %v571 = vrot.slane %v564, 6
        %v572 = vsel %vm550, %v569, %v571
        %v575 = vadd.f32 %v540, %v570
        %v576 = vadd.f32 %v541, %v572
        %s577 = sld [smem:[#allocation5 + $0x2]]
        %v578 = vstv %s577
        %v579 = vmul.f32 %v578, %v348
        %v580 = vmul.f32 %v578, %v349
        %583 = vrot.lane.b32.xlu0 %v579, 127
        %v584 = vpop.permute.xlu0 %583
        %585 = vrot.lane.b32.xlu0 %v580, 127
        %v586 = vpop.permute.xlu0 %585
        %v589 = vadd.f32 %v558, %v584
        %v590 = vadd.f32 %v559, %v586
        %s591 = sld [smem:[#allocation5 + $0x3]]
        %v592 = vstv %s591
        %v593 = vmul.f32 %v592, %v352
        %v594 = vmul.f32 %v592, %v353
        %597 = vrot.lane.b32.xlu0 %v593, 127
        %v598 = vpop.permute.xlu0 %597
        %599 = vrot.lane.b32.xlu0 %v594, 127
        %v600 = vpop.permute.xlu0 %599
        %v603 = vadd.f32 %v575, %v598
        %v604 = vadd.f32 %v576, %v600
        %s605 = sld [smem:[#allocation5 + $0x10]]
        %v606 = vstv %s605
        %v607 = vmul.f32 %v606, %v348
        %v608 = vmul.f32 %v606, %v349
        %v609 = vmul.f32 %v606, %v350
        %v613 = vrot.slane %v607, 1
        %v614 = vrot.slane %v608, 1
        %v615 = vsel %vm375, %v613, %v614
        %v616 = vrot.slane %v609, 1
        %v617 = vsel %vm375, %v614, %v616
        %618 = vrot.lane.b32.xlu0 %v615, 127
        %v619 = vpop.permute.xlu0 %618
        %620 = vrot.lane.b32.xlu0 %v617, 127
        %v621 = vpop.permute.xlu0 %620
        %v624 = vadd.f32 %v589, %v619
        %v625 = vadd.f32 %v590, %v621
        %s626 = sld [smem:[#allocation5 + $0x11]]
        %v627 = vstv %s626
        %v628 = vmul.f32 %v627, %v352
        %v629 = vmul.f32 %v627, %v353
        %v630 = vmul.f32 %v627, %v354
        %v634 = vrot.slane %v628, 1
        %v635 = vrot.slane %v629, 1
        %v636 = vsel %vm375, %v634, %v635
        %v637 = vrot.slane %v630, 1
        %v638 = vsel %vm375, %v635, %v637
        %639 = vrot.lane.b32.xlu0 %v636, 127
        %v640 = vpop.permute.xlu0 %639
        %641 = vrot.lane.b32.xlu0 %v638, 127
        %v642 = vpop.permute.xlu0 %641
        %v645 = vadd.f32 %v603, %v640
        %v646 = vadd.f32 %v604, %v642
        %s647 = sld [smem:[#allocation5 + $0x1e]]
        %v648 = vstv %s647
        %v649 = vmul.f32 %v648, %v348
        %v650 = vmul.f32 %v648, %v349
        %v651 = vmul.f32 %v648, %v350
        %v655 = vrot.slane %v649, 2
        %v656 = vrot.slane %v650, 2
        %v657 = vsel %vm410, %v655, %v656
        %v658 = vrot.slane %v651, 2
        %v659 = vsel %vm410, %v656, %v658
        %660 = vrot.lane.b32.xlu0 %v657, 127
        %v661 = vpop.permute.xlu0 %660
        %662 = vrot.lane.b32.xlu0 %v659, 127
        %v663 = vpop.permute.xlu0 %662
        %v666 = vadd.f32 %v624, %v661
        %v667 = vadd.f32 %v625, %v663
        %s668 = sld [smem:[#allocation5 + $0x1f]]
        %v669 = vstv %s668
        %v670 = vmul.f32 %v669, %v352
        %v671 = vmul.f32 %v669, %v353
        %v672 = vmul.f32 %v669, %v354
        %v676 = vrot.slane %v670, 2
        %v677 = vrot.slane %v671, 2
        %v678 = vsel %vm410, %v676, %v677
        %v679 = vrot.slane %v672, 2
        %v680 = vsel %vm410, %v677, %v679
        %681 = vrot.lane.b32.xlu0 %v678, 127
        %v682 = vpop.permute.xlu0 %681
        %683 = vrot.lane.b32.xlu0 %v680, 127
        %v684 = vpop.permute.xlu0 %683
        %v687 = vadd.f32 %v645, %v682
        %v688 = vadd.f32 %v646, %v684
        %s689 = sld [smem:[#allocation5 + $0x2c]]
        %v690 = vstv %s689
        %v691 = vmul.f32 %v690, %v348
        %v692 = vmul.f32 %v690, %v349
        %v693 = vmul.f32 %v690, %v350
        %v697 = vrot.slane %v691, 3
        %v698 = vrot.slane %v692, 3
        %v699 = vsel %vm445, %v697, %v698
        %v700 = vrot.slane %v693, 3
        %v701 = vsel %vm445, %v698, %v700
        %702 = vrot.lane.b32.xlu0 %v699, 127
        %v703 = vpop.permute.xlu0 %702
        %704 = vrot.lane.b32.xlu0 %v701, 127
        %v705 = vpop.permute.xlu0 %704
        %v708 = vadd.f32 %v666, %v703
        %v709 = vadd.f32 %v667, %v705
        %s710 = sld [smem:[#allocation5 + $0x2d]]
        %v711 = vstv %s710
        %v712 = vmul.f32 %v711, %v352
        %v713 = vmul.f32 %v711, %v353
        %v714 = vmul.f32 %v711, %v354
        %v718 = vrot.slane %v712, 3
        %v719 = vrot.slane %v713, 3
        %v720 = vsel %vm445, %v718, %v719
        %v721 = vrot.slane %v714, 3
        %v722 = vsel %vm445, %v719, %v721
        %723 = vrot.lane.b32.xlu0 %v720, 127
        %v724 = vpop.permute.xlu0 %723
        %725 = vrot.lane.b32.xlu0 %v722, 127
        %v726 = vpop.permute.xlu0 %725
        %v729 = vadd.f32 %v687, %v724
        %v730 = vadd.f32 %v688, %v726
        %s731 = sld [smem:[#allocation5 + $0x3a]]
        %v732 = vstv %s731
        %v733 = vmul.f32 %v732, %v348
        %v734 = vmul.f32 %v732, %v349
        %v735 = vmul.f32 %v732, %v350
        %v739 = vrot.slane %v733, 4
        %v740 = vrot.slane %v734, 4
        %v741 = vsel %vm480, %v739, %v740
        %v742 = vrot.slane %v735, 4
        %v743 = vsel %vm480, %v740, %v742
        %744 = vrot.lane.b32.xlu0 %v741, 127
        %v745 = vpop.permute.xlu0 %744
        %746 = vrot.lane.b32.xlu0 %v743, 127
        %v747 = vpop.permute.xlu0 %746
        %v750 = vadd.f32 %v708, %v745
        %v751 = vadd.f32 %v709, %v747
        %s752 = sld [smem:[#allocation5 + $0x3b]]
        %v753 = vstv %s752
        %v754 = vmul.f32 %v753, %v352
        %v755 = vmul.f32 %v753, %v353
        %v756 = vmul.f32 %v753, %v354
        %v760 = vrot.slane %v754, 4
        %v761 = vrot.slane %v755, 4
        %v762 = vsel %vm480, %v760, %v761
        %v763 = vrot.slane %v756, 4
        %v764 = vsel %vm480, %v761, %v763
        %765 = vrot.lane.b32.xlu0 %v762, 127
        %v766 = vpop.permute.xlu0 %765
        %767 = vrot.lane.b32.xlu0 %v764, 127
        %v768 = vpop.permute.xlu0 %767
        %v771 = vadd.f32 %v729, %v766
        %v772 = vadd.f32 %v730, %v768
        %s773 = sld [smem:[#allocation5 + $0x48]]
        %v774 = vstv %s773
        %v775 = vmul.f32 %v774, %v348
        %v776 = vmul.f32 %v774, %v349
        %v777 = vmul.f32 %v774, %v350
        %v781 = vrot.slane %v775, 5
        %v782 = vrot.slane %v776, 5
        %v783 = vsel %vm515, %v781, %v782
        %v784 = vrot.slane %v777, 5
        %v785 = vsel %vm515, %v782, %v784
        %786 = vrot.lane.b32.xlu0 %v783, 127
        %v787 = vpop.permute.xlu0 %786
        %788 = vrot.lane.b32.xlu0 %v785, 127
        %v789 = vpop.permute.xlu0 %788
        %v792 = vadd.f32 %v750, %v787
        %v793 = vadd.f32 %v751, %v789
        %s794 = sld [smem:[#allocation5 + $0x49]]
        %v795 = vstv %s794
        %v796 = vmul.f32 %v795, %v352
        %v797 = vmul.f32 %v795, %v353
        %v798 = vmul.f32 %v795, %v354
        %v802 = vrot.slane %v796, 5
        %v803 = vrot.slane %v797, 5
        %v804 = vsel %vm515, %v802, %v803
        %v805 = vrot.slane %v798, 5
        %v806 = vsel %vm515, %v803, %v805
        %807 = vrot.lane.b32.xlu0 %v804, 127
        %v808 = vpop.permute.xlu0 %807
        %809 = vrot.lane.b32.xlu0 %v806, 127
        %v810 = vpop.permute.xlu0 %809
        %v813 = vadd.f32 %v771, %v808
        %v814 = vadd.f32 %v772, %v810
        %s815 = sld [smem:[#allocation5 + $0x56]]
        %v816 = vstv %s815
        %v817 = vmul.f32 %v816, %v348
        %v818 = vmul.f32 %v816, %v349
        %v819 = vmul.f32 %v816, %v350
        %v823 = vrot.slane %v817, 6
        %v824 = vrot.slane %v818, 6
        %v825 = vsel %vm550, %v823, %v824
        %v826 = vrot.slane %v819, 6
        %v827 = vsel %vm550, %v824, %v826
        %828 = vrot.lane.b32.xlu0 %v825, 127
        %v829 = vpop.permute.xlu0 %828
        %830 = vrot.lane.b32.xlu0 %v827, 127
        %v831 = vpop.permute.xlu0 %830
        %v834 = vadd.f32 %v792, %v829
        %v835 = vadd.f32 %v793, %v831
        %s836 = sld [smem:[#allocation5 + $0x57]]
        %v837 = vstv %s836
        %v838 = vmul.f32 %v837, %v352
        %v839 = vmul.f32 %v837, %v353
        %v840 = vmul.f32 %v837, %v354
        %v844 = vrot.slane %v838, 6
        %v845 = vrot.slane %v839, 6
        %v846 = vsel %vm550, %v844, %v845
        %v847 = vrot.slane %v840, 6
        %v848 = vsel %vm550, %v845, %v847
        %849 = vrot.lane.b32.xlu0 %v846, 127
        %v850 = vpop.permute.xlu0 %849
        %851 = vrot.lane.b32.xlu0 %v848, 127
        %v852 = vpop.permute.xlu0 %851
        %v855 = vadd.f32 %v813, %v850
        %v856 = vadd.f32 %v814, %v852
        %s857 = sld [smem:[#allocation5 + $0x4]]
        %v858 = vstv %s857
        %v859 = vmul.f32 %v858, %v348
        %v860 = vmul.f32 %v858, %v349
        %863 = vrot.lane.b32.xlu0 %v859, 126
        %v864 = vpop.permute.xlu0 %863
        %865 = vrot.lane.b32.xlu0 %v860, 126
        %v866 = vpop.permute.xlu0 %865
        %v869 = vadd.f32 %v834, %v864
        %v870 = vadd.f32 %v835, %v866
        %s871 = sld [smem:[#allocation5 + $0x5]]
        %v872 = vstv %s871
        %v873 = vmul.f32 %v872, %v352
        %v874 = vmul.f32 %v872, %v353
        %877 = vrot.lane.b32.xlu0 %v873, 126
        %v878 = vpop.permute.xlu0 %877
        %879 = vrot.lane.b32.xlu0 %v874, 126
        %v880 = vpop.permute.xlu0 %879
        %v883 = vadd.f32 %v855, %v878
        %v884 = vadd.f32 %v856, %v880
        %s885 = sld [smem:[#allocation5 + $0x12]]
        %v886 = vstv %s885
        %v887 = vmul.f32 %v886, %v348
        %v888 = vmul.f32 %v886, %v349
        %v889 = vmul.f32 %v886, %v350
        %v893 = vrot.slane %v887, 1
        %v894 = vrot.slane %v888, 1
        %v895 = vsel %vm375, %v893, %v894
        %v896 = vrot.slane %v889, 1
        %v897 = vsel %vm375, %v894, %v896
        %898 = vrot.lane.b32.xlu0 %v895, 126
        %v899 = vpop.permute.xlu0 %898
        %900 = vrot.lane.b32.xlu0 %v897, 126
        %v901 = vpop.permute.xlu0 %900
        %v904 = vadd.f32 %v869, %v899
        %v905 = vadd.f32 %v870, %v901
        %s906 = sld [smem:[#allocation5 + $0x13]]
        %v907 = vstv %s906
        %v908 = vmul.f32 %v907, %v352
        %v909 = vmul.f32 %v907, %v353
        %v910 = vmul.f32 %v907, %v354
        %v914 = vrot.slane %v908, 1
        %v915 = vrot.slane %v909, 1
        %v916 = vsel %vm375, %v914, %v915
        %v917 = vrot.slane %v910, 1
        %v918 = vsel %vm375, %v915, %v917
        %919 = vrot.lane.b32.xlu0 %v916, 126
        %v920 = vpop.permute.xlu0 %919
        %921 = vrot.lane.b32.xlu0 %v918, 126
        %v922 = vpop.permute.xlu0 %921
        %v925 = vadd.f32 %v883, %v920
        %v926 = vadd.f32 %v884, %v922
        %s927 = sld [smem:[#allocation5 + $0x20]]
        %v928 = vstv %s927
        %v929 = vmul.f32 %v928, %v348
        %v930 = vmul.f32 %v928, %v349
        %v931 = vmul.f32 %v928, %v350
        %v935 = vrot.slane %v929, 2
        %v936 = vrot.slane %v930, 2
        %v937 = vsel %vm410, %v935, %v936
        %v938 = vrot.slane %v931, 2
        %v939 = vsel %vm410, %v936, %v938
        %940 = vrot.lane.b32.xlu0 %v937, 126
        %v941 = vpop.permute.xlu0 %940
        %942 = vrot.lane.b32.xlu0 %v939, 126
        %v943 = vpop.permute.xlu0 %942
        %v946 = vadd.f32 %v904, %v941
        %v947 = vadd.f32 %v905, %v943
        %s948 = sld [smem:[#allocation5 + $0x21]]
        %v949 = vstv %s948
        %v950 = vmul.f32 %v949, %v352
        %v951 = vmul.f32 %v949, %v353
        %v952 = vmul.f32 %v949, %v354
        %v956 = vrot.slane %v950, 2
        %v957 = vrot.slane %v951, 2
        %v958 = vsel %vm410, %v956, %v957
        %v959 = vrot.slane %v952, 2
        %v960 = vsel %vm410, %v957, %v959
        %961 = vrot.lane.b32.xlu0 %v958, 126
        %v962 = vpop.permute.xlu0 %961
        %963 = vrot.lane.b32.xlu0 %v960, 126
        %v964 = vpop.permute.xlu0 %963
        %v967 = vadd.f32 %v925, %v962
        %v968 = vadd.f32 %v926, %v964
        %s969 = sld [smem:[#allocation5 + $0x2e]]
        %v970 = vstv %s969
        %v971 = vmul.f32 %v970, %v348
        %v972 = vmul.f32 %v970, %v349
        %v973 = vmul.f32 %v970, %v350
        %v977 = vrot.slane %v971, 3
        %v978 = vrot.slane %v972, 3
        %v979 = vsel %vm445, %v977, %v978
        %v980 = vrot.slane %v973, 3
        %v981 = vsel %vm445, %v978, %v980
        %982 = vrot.lane.b32.xlu0 %v979, 126
        %v983 = vpop.permute.xlu0 %982
        %984 = vrot.lane.b32.xlu0 %v981, 126
        %v985 = vpop.permute.xlu0 %984
        %v988 = vadd.f32 %v946, %v983
        %v989 = vadd.f32 %v947, %v985
        %s990 = sld [smem:[#allocation5 + $0x2f]]
        %v991 = vstv %s990
        %v992 = vmul.f32 %v991, %v352
        %v993 = vmul.f32 %v991, %v353
        %v994 = vmul.f32 %v991, %v354
        %v998 = vrot.slane %v992, 3
        %v999 = vrot.slane %v993, 3
        %v1000 = vsel %vm445, %v998, %v999
        %v1001 = vrot.slane %v994, 3
        %v1002 = vsel %vm445, %v999, %v1001
        %1003 = vrot.lane.b32.xlu0 %v1000, 126
        %v1004 = vpop.permute.xlu0 %1003
        %1005 = vrot.lane.b32.xlu0 %v1002, 126
        %v1006 = vpop.permute.xlu0 %1005
        %v1009 = vadd.f32 %v967, %v1004
        %v1010 = vadd.f32 %v968, %v1006
        %s1011 = sld [smem:[#allocation5 + $0x3c]]
        %v1012 = vstv %s1011
        %v1013 = vmul.f32 %v1012, %v348
        %v1014 = vmul.f32 %v1012, %v349
        %v1015 = vmul.f32 %v1012, %v350
        %v1019 = vrot.slane %v1013, 4
        %v1020 = vrot.slane %v1014, 4
        %v1021 = vsel %vm480, %v1019, %v1020
        %v1022 = vrot.slane %v1015, 4
        %v1023 = vsel %vm480, %v1020, %v1022
        %1024 = vrot.lane.b32.xlu0 %v1021, 126
        %v1025 = vpop.permute.xlu0 %1024
        %1026 = vrot.lane.b32.xlu0 %v1023, 126
        %v1027 = vpop.permute.xlu0 %1026
        %v1030 = vadd.f32 %v988, %v1025
        %v1031 = vadd.f32 %v989, %v1027
        %s1032 = sld [smem:[#allocation5 + $0x3d]]
        %v1033 = vstv %s1032
        %v1034 = vmul.f32 %v1033, %v352
        %v1035 = vmul.f32 %v1033, %v353
        %v1036 = vmul.f32 %v1033, %v354
        %v1040 = vrot.slane %v1034, 4
        %v1041 = vrot.slane %v1035, 4
        %v1042 = vsel %vm480, %v1040, %v1041
        %v1043 = vrot.slane %v1036, 4
        %v1044 = vsel %vm480, %v1041, %v1043
        %1045 = vrot.lane.b32.xlu0 %v1042, 126
        %v1046 = vpop.permute.xlu0 %1045
        %1047 = vrot.lane.b32.xlu0 %v1044, 126
        %v1048 = vpop.permute.xlu0 %1047
        %v1051 = vadd.f32 %v1009, %v1046
        %v1052 = vadd.f32 %v1010, %v1048
        %s1053 = sld [smem:[#allocation5 + $0x4a]]
        %v1054 = vstv %s1053
        %v1055 = vmul.f32 %v1054, %v348
        %v1056 = vmul.f32 %v1054, %v349
        %v1057 = vmul.f32 %v1054, %v350
        %v1061 = vrot.slane %v1055, 5
        %v1062 = vrot.slane %v1056, 5
        %v1063 = vsel %vm515, %v1061, %v1062
        %v1064 = vrot.slane %v1057, 5
        %v1065 = vsel %vm515, %v1062, %v1064
        %1066 = vrot.lane.b32.xlu0 %v1063, 126
        %v1067 = vpop.permute.xlu0 %1066
        %1068 = vrot.lane.b32.xlu0 %v1065, 126
        %v1069 = vpop.permute.xlu0 %1068
        %v1072 = vadd.f32 %v1030, %v1067
        %v1073 = vadd.f32 %v1031, %v1069
        %s1074 = sld [smem:[#allocation5 + $0x4b]]
        %v1075 = vstv %s1074
        %v1076 = vmul.f32 %v1075, %v352
        %v1077 = vmul.f32 %v1075, %v353
        %v1078 = vmul.f32 %v1075, %v354
        %v1082 = vrot.slane %v1076, 5
        %v1083 = vrot.slane %v1077, 5
        %v1084 = vsel %vm515, %v1082, %v1083
        %v1085 = vrot.slane %v1078, 5
        %v1086 = vsel %vm515, %v1083, %v1085
        %1087 = vrot.lane.b32.xlu0 %v1084, 126
        %v1088 = vpop.permute.xlu0 %1087
        %1089 = vrot.lane.b32.xlu0 %v1086, 126
        %v1090 = vpop.permute.xlu0 %1089
        %v1093 = vadd.f32 %v1051, %v1088
        %v1094 = vadd.f32 %v1052, %v1090
        %s1095 = sld [smem:[#allocation5 + $0x58]]
        %v1096 = vstv %s1095
        %v1097 = vmul.f32 %v1096, %v348
        %v1098 = vmul.f32 %v1096, %v349
        %v1099 = vmul.f32 %v1096, %v350
        %v1103 = vrot.slane %v1097, 6
        %v1104 = vrot.slane %v1098, 6
        %v1105 = vsel %vm550, %v1103, %v1104
        %v1106 = vrot.slane %v1099, 6
        %v1107 = vsel %vm550, %v1104, %v1106
        %1108 = vrot.lane.b32.xlu0 %v1105, 126
        %v1109 = vpop.permute.xlu0 %1108
        %1110 = vrot.lane.b32.xlu0 %v1107, 126
        %v1111 = vpop.permute.xlu0 %1110
        %v1114 = vadd.f32 %v1072, %v1109
        %v1115 = vadd.f32 %v1073, %v1111
        %s1116 = sld [smem:[#allocation5 + $0x59]]
        %v1117 = vstv %s1116
        %v1118 = vmul.f32 %v1117, %v352
        %v1119 = vmul.f32 %v1117, %v353
        %v1120 = vmul.f32 %v1117, %v354
        %v1124 = vrot.slane %v1118, 6
        %v1125 = vrot.slane %v1119, 6
        %v1126 = vsel %vm550, %v1124, %v1125
        %v1127 = vrot.slane %v1120, 6
        %v1128 = vsel %vm550, %v1125, %v1127
        %1129 = vrot.lane.b32.xlu0 %v1126, 126
        %v1130 = vpop.permute.xlu0 %1129
        %1131 = vrot.lane.b32.xlu0 %v1128, 126
        %v1132 = vpop.permute.xlu0 %1131
        %v1135 = vadd.f32 %v1093, %v1130
        %v1136 = vadd.f32 %v1094, %v1132
        %s1137 = sld [smem:[#allocation5 + $0x6]]
        %v1138 = vstv %s1137
        %v1139 = vmul.f32 %v1138, %v348
        %v1140 = vmul.f32 %v1138, %v349
        %1143 = vrot.lane.b32.xlu0 %v1139, 125
        %v1144 = vpop.permute.xlu0 %1143
        %1145 = vrot.lane.b32.xlu0 %v1140, 125
        %v1146 = vpop.permute.xlu0 %1145
        %v1149 = vadd.f32 %v1114, %v1144
        %v1150 = vadd.f32 %v1115, %v1146
        %s1151 = sld [smem:[#allocation5 + $0x7]]
        %v1152 = vstv %s1151
        %v1153 = vmul.f32 %v1152, %v352
        %v1154 = vmul.f32 %v1152, %v353
        %1157 = vrot.lane.b32.xlu0 %v1153, 125
        %v1158 = vpop.permute.xlu0 %1157
        %1159 = vrot.lane.b32.xlu0 %v1154, 125
        %v1160 = vpop.permute.xlu0 %1159
        %v1163 = vadd.f32 %v1135, %v1158
        %v1164 = vadd.f32 %v1136, %v1160
        %s1165 = sld [smem:[#allocation5 + $0x14]]
        %v1166 = vstv %s1165
        %v1167 = vmul.f32 %v1166, %v348
        %v1168 = vmul.f32 %v1166, %v349
        %v1169 = vmul.f32 %v1166, %v350
        %v1173 = vrot.slane %v1167, 1
        %v1174 = vrot.slane %v1168, 1
        %v1175 = vsel %vm375, %v1173, %v1174
        %v1176 = vrot.slane %v1169, 1
        %v1177 = vsel %vm375, %v1174, %v1176
        %1178 = vrot.lane.b32.xlu0 %v1175, 125
        %v1179 = vpop.permute.xlu0 %1178
        %1180 = vrot.lane.b32.xlu0 %v1177, 125
        %v1181 = vpop.permute.xlu0 %1180
        %v1184 = vadd.f32 %v1149, %v1179
        %v1185 = vadd.f32 %v1150, %v1181
        %s1186 = sld [smem:[#allocation5 + $0x15]]
        %v1187 = vstv %s1186
        %v1188 = vmul.f32 %v1187, %v352
        %v1189 = vmul.f32 %v1187, %v353
        %v1190 = vmul.f32 %v1187, %v354
        %v1194 = vrot.slane %v1188, 1
        %v1195 = vrot.slane %v1189, 1
        %v1196 = vsel %vm375, %v1194, %v1195
        %v1197 = vrot.slane %v1190, 1
        %v1198 = vsel %vm375, %v1195, %v1197
        %1199 = vrot.lane.b32.xlu0 %v1196, 125
        %v1200 = vpop.permute.xlu0 %1199
        %1201 = vrot.lane.b32.xlu0 %v1198, 125
        %v1202 = vpop.permute.xlu0 %1201
        %v1205 = vadd.f32 %v1163, %v1200
        %v1206 = vadd.f32 %v1164, %v1202
        %s1207 = sld [smem:[#allocation5 + $0x22]]
        %v1208 = vstv %s1207
        %v1209 = vmul.f32 %v1208, %v348
        %v1210 = vmul.f32 %v1208, %v349
        %v1211 = vmul.f32 %v1208, %v350
        %v1215 = vrot.slane %v1209, 2
        %v1216 = vrot.slane %v1210, 2
        %v1217 = vsel %vm410, %v1215, %v1216
        %v1218 = vrot.slane %v1211, 2
        %v1219 = vsel %vm410, %v1216, %v1218
        %1220 = vrot.lane.b32.xlu0 %v1217, 125
        %v1221 = vpop.permute.xlu0 %1220
        %1222 = vrot.lane.b32.xlu0 %v1219, 125
        %v1223 = vpop.permute.xlu0 %1222
        %v1226 = vadd.f32 %v1184, %v1221
        %v1227 = vadd.f32 %v1185, %v1223
        %s1228 = sld [smem:[#allocation5 + $0x23]]
        %v1229 = vstv %s1228
        %v1230 = vmul.f32 %v1229, %v352
        %v1231 = vmul.f32 %v1229, %v353
        %v1232 = vmul.f32 %v1229, %v354
        %v1236 = vrot.slane %v1230, 2
        %v1237 = vrot.slane %v1231, 2
        %v1238 = vsel %vm410, %v1236, %v1237
        %v1239 = vrot.slane %v1232, 2
        %v1240 = vsel %vm410, %v1237, %v1239
        %1241 = vrot.lane.b32.xlu0 %v1238, 125
        %v1242 = vpop.permute.xlu0 %1241
        %1243 = vrot.lane.b32.xlu0 %v1240, 125
        %v1244 = vpop.permute.xlu0 %1243
        %v1247 = vadd.f32 %v1205, %v1242
        %v1248 = vadd.f32 %v1206, %v1244
        %s1249 = sld [smem:[#allocation5 + $0x30]]
        %v1250 = vstv %s1249
        %v1251 = vmul.f32 %v1250, %v348
        %v1252 = vmul.f32 %v1250, %v349
        %v1253 = vmul.f32 %v1250, %v350
        %v1257 = vrot.slane %v1251, 3
        %v1258 = vrot.slane %v1252, 3
        %v1259 = vsel %vm445, %v1257, %v1258
        %v1260 = vrot.slane %v1253, 3
        %v1261 = vsel %vm445, %v1258, %v1260
        %1262 = vrot.lane.b32.xlu0 %v1259, 125
        %v1263 = vpop.permute.xlu0 %1262
        %1264 = vrot.lane.b32.xlu0 %v1261, 125
        %v1265 = vpop.permute.xlu0 %1264
        %v1268 = vadd.f32 %v1226, %v1263
        %v1269 = vadd.f32 %v1227, %v1265
        %s1270 = sld [smem:[#allocation5 + $0x31]]
        %v1271 = vstv %s1270
        %v1272 = vmul.f32 %v1271, %v352
        %v1273 = vmul.f32 %v1271, %v353
        %v1274 = vmul.f32 %v1271, %v354
        %v1278 = vrot.slane %v1272, 3
        %v1279 = vrot.slane %v1273, 3
        %v1280 = vsel %vm445, %v1278, %v1279
        %v1281 = vrot.slane %v1274, 3
        %v1282 = vsel %vm445, %v1279, %v1281
        %1283 = vrot.lane.b32.xlu0 %v1280, 125
        %v1284 = vpop.permute.xlu0 %1283
        %1285 = vrot.lane.b32.xlu0 %v1282, 125
        %v1286 = vpop.permute.xlu0 %1285
        %v1289 = vadd.f32 %v1247, %v1284
        %v1290 = vadd.f32 %v1248, %v1286
        %s1291 = sld [smem:[#allocation5 + $0x3e]]
        %v1292 = vstv %s1291
        %v1293 = vmul.f32 %v1292, %v348
        %v1294 = vmul.f32 %v1292, %v349
        %v1295 = vmul.f32 %v1292, %v350
        %v1299 = vrot.slane %v1293, 4
        %v1300 = vrot.slane %v1294, 4
        %v1301 = vsel %vm480, %v1299, %v1300
        %v1302 = vrot.slane %v1295, 4
        %v1303 = vsel %vm480, %v1300, %v1302
        %1304 = vrot.lane.b32.xlu0 %v1301, 125
        %v1305 = vpop.permute.xlu0 %1304
        %1306 = vrot.lane.b32.xlu0 %v1303, 125
        %v1307 = vpop.permute.xlu0 %1306
        %v1310 = vadd.f32 %v1268, %v1305
        %v1311 = vadd.f32 %v1269, %v1307
        %s1312 = sld [smem:[#allocation5 + $0x3f]]
        %v1313 = vstv %s1312
        %v1314 = vmul.f32 %v1313, %v352
        %v1315 = vmul.f32 %v1313, %v353
        %v1316 = vmul.f32 %v1313, %v354
        %v1320 = vrot.slane %v1314, 4
        %v1321 = vrot.slane %v1315, 4
        %v1322 = vsel %vm480, %v1320, %v1321
        %v1323 = vrot.slane %v1316, 4
        %v1324 = vsel %vm480, %v1321, %v1323
        %1325 = vrot.lane.b32.xlu0 %v1322, 125
        %v1326 = vpop.permute.xlu0 %1325
        %1327 = vrot.lane.b32.xlu0 %v1324, 125
        %v1328 = vpop.permute.xlu0 %1327
        %v1331 = vadd.f32 %v1289, %v1326
        %v1332 = vadd.f32 %v1290, %v1328
        %s1333 = sld [smem:[#allocation5 + $0x4c]]
        %v1334 = vstv %s1333
        %v1335 = vmul.f32 %v1334, %v348
        %v1336 = vmul.f32 %v1334, %v349
        %v1337 = vmul.f32 %v1334, %v350
        %v1341 = vrot.slane %v1335, 5
        %v1342 = vrot.slane %v1336, 5
        %v1343 = vsel %vm515, %v1341, %v1342
        %v1344 = vrot.slane %v1337, 5
        %v1345 = vsel %vm515, %v1342, %v1344
        %1346 = vrot.lane.b32.xlu0 %v1343, 125
        %v1347 = vpop.permute.xlu0 %1346
        %1348 = vrot.lane.b32.xlu0 %v1345, 125
        %v1349 = vpop.permute.xlu0 %1348
        %v1352 = vadd.f32 %v1310, %v1347
        %v1353 = vadd.f32 %v1311, %v1349
        %s1354 = sld [smem:[#allocation5 + $0x4d]]
        %v1355 = vstv %s1354
        %v1356 = vmul.f32 %v1355, %v352
        %v1357 = vmul.f32 %v1355, %v353
        %v1358 = vmul.f32 %v1355, %v354
        %v1362 = vrot.slane %v1356, 5
        %v1363 = vrot.slane %v1357, 5
        %v1364 = vsel %vm515, %v1362, %v1363
        %v1365 = vrot.slane %v1358, 5
        %v1366 = vsel %vm515, %v1363, %v1365
        %1367 = vrot.lane.b32.xlu0 %v1364, 125
        %v1368 = vpop.permute.xlu0 %1367
        %1369 = vrot.lane.b32.xlu0 %v1366, 125
        %v1370 = vpop.permute.xlu0 %1369
        %v1373 = vadd.f32 %v1331, %v1368
        %v1374 = vadd.f32 %v1332, %v1370
        %s1375 = sld [smem:[#allocation5 + $0x5a]]
        %v1376 = vstv %s1375
        %v1377 = vmul.f32 %v1376, %v348
        %v1378 = vmul.f32 %v1376, %v349
        %v1379 = vmul.f32 %v1376, %v350
        %v1383 = vrot.slane %v1377, 6
        %v1384 = vrot.slane %v1378, 6
        %v1385 = vsel %vm550, %v1383, %v1384
        %v1386 = vrot.slane %v1379, 6
        %v1387 = vsel %vm550, %v1384, %v1386
        %1388 = vrot.lane.b32.xlu0 %v1385, 125
        %v1389 = vpop.permute.xlu0 %1388
        %1390 = vrot.lane.b32.xlu0 %v1387, 125
        %v1391 = vpop.permute.xlu0 %1390
        %v1394 = vadd.f32 %v1352, %v1389
        %v1395 = vadd.f32 %v1353, %v1391
        %s1396 = sld [smem:[#allocation5 + $0x5b]]
        %v1397 = vstv %s1396
        %v1398 = vmul.f32 %v1397, %v352
        %v1399 = vmul.f32 %v1397, %v353
        %v1400 = vmul.f32 %v1397, %v354
        %v1404 = vrot.slane %v1398, 6
        %v1405 = vrot.slane %v1399, 6
        %v1406 = vsel %vm550, %v1404, %v1405
        %v1407 = vrot.slane %v1400, 6
        %v1408 = vsel %vm550, %v1405, %v1407
        %1409 = vrot.lane.b32.xlu0 %v1406, 125
        %v1410 = vpop.permute.xlu0 %1409
        %1411 = vrot.lane.b32.xlu0 %v1408, 125
        %v1412 = vpop.permute.xlu0 %1411
        %v1415 = vadd.f32 %v1373, %v1410
        %v1416 = vadd.f32 %v1374, %v1412
        %s1417 = sld [smem:[#allocation5 + $0x8]]
        %v1418 = vstv %s1417
        %v1419 = vmul.f32 %v1418, %v348
        %v1420 = vmul.f32 %v1418, %v349
        %1423 = vrot.lane.b32.xlu0 %v1419, 124
        %v1424 = vpop.permute.xlu0 %1423
        %1425 = vrot.lane.b32.xlu0 %v1420, 124
        %v1426 = vpop.permute.xlu0 %1425
        %v1429 = vadd.f32 %v1394, %v1424
        %v1430 = vadd.f32 %v1395, %v1426
        %s1431 = sld [smem:[#allocation5 + $0x9]]
        %v1432 = vstv %s1431
        %v1433 = vmul.f32 %v1432, %v352
        %v1434 = vmul.f32 %v1432, %v353
        %1437 = vrot.lane.b32.xlu0 %v1433, 124
        %v1438 = vpop.permute.xlu0 %1437
        %1439 = vrot.lane.b32.xlu0 %v1434, 124
        %v1440 = vpop.permute.xlu0 %1439
        %v1443 = vadd.f32 %v1415, %v1438
        %v1444 = vadd.f32 %v1416, %v1440
        %s1445 = sld [smem:[#allocation5 + $0x16]]
        %v1446 = vstv %s1445
        %v1447 = vmul.f32 %v1446, %v348
        %v1448 = vmul.f32 %v1446, %v349
        %v1449 = vmul.f32 %v1446, %v350
        %v1453 = vrot.slane %v1447, 1
        %v1454 = vrot.slane %v1448, 1
        %v1455 = vsel %vm375, %v1453, %v1454
        %v1456 = vrot.slane %v1449, 1
        %v1457 = vsel %vm375, %v1454, %v1456
        %1458 = vrot.lane.b32.xlu0 %v1455, 124
        %v1459 = vpop.permute.xlu0 %1458
        %1460 = vrot.lane.b32.xlu0 %v1457, 124
        %v1461 = vpop.permute.xlu0 %1460
        %v1464 = vadd.f32 %v1429, %v1459
        %v1465 = vadd.f32 %v1430, %v1461
        %s1466 = sld [smem:[#allocation5 + $0x17]]
        %v1467 = vstv %s1466
        %v1468 = vmul.f32 %v1467, %v352
        %v1469 = vmul.f32 %v1467, %v353
        %v1470 = vmul.f32 %v1467, %v354
        %v1474 = vrot.slane %v1468, 1
        %v1475 = vrot.slane %v1469, 1
        %v1476 = vsel %vm375, %v1474, %v1475
        %v1477 = vrot.slane %v1470, 1
        %v1478 = vsel %vm375, %v1475, %v1477
        %1479 = vrot.lane.b32.xlu0 %v1476, 124
        %v1480 = vpop.permute.xlu0 %1479
        %1481 = vrot.lane.b32.xlu0 %v1478, 124
        %v1482 = vpop.permute.xlu0 %1481
        %v1485 = vadd.f32 %v1443, %v1480
        %v1486 = vadd.f32 %v1444, %v1482
        %s1487 = sld [smem:[#allocation5 + $0x24]]
        %v1488 = vstv %s1487
        %v1489 = vmul.f32 %v1488, %v348
        %v1490 = vmul.f32 %v1488, %v349
        %v1491 = vmul.f32 %v1488, %v350
        %v1495 = vrot.slane %v1489, 2
        %v1496 = vrot.slane %v1490, 2
        %v1497 = vsel %vm410, %v1495, %v1496
        %v1498 = vrot.slane %v1491, 2
        %v1499 = vsel %vm410, %v1496, %v1498
        %1500 = vrot.lane.b32.xlu0 %v1497, 124
        %v1501 = vpop.permute.xlu0 %1500
        %1502 = vrot.lane.b32.xlu0 %v1499, 124
        %v1503 = vpop.permute.xlu0 %1502
        %v1506 = vadd.f32 %v1464, %v1501
        %v1507 = vadd.f32 %v1465, %v1503
        %s1508 = sld [smem:[#allocation5 + $0x25]]
        %v1509 = vstv %s1508
        %v1510 = vmul.f32 %v1509, %v352
        %v1511 = vmul.f32 %v1509, %v353
        %v1512 = vmul.f32 %v1509, %v354
        %v1516 = vrot.slane %v1510, 2
        %v1517 = vrot.slane %v1511, 2
        %v1518 = vsel %vm410, %v1516, %v1517
        %v1519 = vrot.slane %v1512, 2
        %v1520 = vsel %vm410, %v1517, %v1519
        %1521 = vrot.lane.b32.xlu0 %v1518, 124
        %v1522 = vpop.permute.xlu0 %1521
        %1523 = vrot.lane.b32.xlu0 %v1520, 124
        %v1524 = vpop.permute.xlu0 %1523
        %v1527 = vadd.f32 %v1485, %v1522
        %v1528 = vadd.f32 %v1486, %v1524
        %s1529 = sld [smem:[#allocation5 + $0x32]]
        %v1530 = vstv %s1529
        %v1531 = vmul.f32 %v1530, %v348
        %v1532 = vmul.f32 %v1530, %v349
        %v1533 = vmul.f32 %v1530, %v350
        %v1537 = vrot.slane %v1531, 3
        %v1538 = vrot.slane %v1532, 3
        %v1539 = vsel %vm445, %v1537, %v1538
        %v1540 = vrot.slane %v1533, 3
        %v1541 = vsel %vm445, %v1538, %v1540
        %1542 = vrot.lane.b32.xlu0 %v1539, 124
        %v1543 = vpop.permute.xlu0 %1542
        %1544 = vrot.lane.b32.xlu0 %v1541, 124
        %v1545 = vpop.permute.xlu0 %1544
        %v1548 = vadd.f32 %v1506, %v1543
        %v1549 = vadd.f32 %v1507, %v1545
        %s1550 = sld [smem:[#allocation5 + $0x33]]
        %v1551 = vstv %s1550
        %v1552 = vmul.f32 %v1551, %v352
        %v1553 = vmul.f32 %v1551, %v353
        %v1554 = vmul.f32 %v1551, %v354
        %v1558 = vrot.slane %v1552, 3
        %v1559 = vrot.slane %v1553, 3
        %v1560 = vsel %vm445, %v1558, %v1559
        %v1561 = vrot.slane %v1554, 3
        %v1562 = vsel %vm445, %v1559, %v1561
        %1563 = vrot.lane.b32.xlu0 %v1560, 124
        %v1564 = vpop.permute.xlu0 %1563
        %1565 = vrot.lane.b32.xlu0 %v1562, 124
        %v1566 = vpop.permute.xlu0 %1565
        %v1569 = vadd.f32 %v1527, %v1564
        %v1570 = vadd.f32 %v1528, %v1566
        %s1571 = sld [smem:[#allocation5 + $0x40]]
        %v1572 = vstv %s1571
        %v1573 = vmul.f32 %v1572, %v348
        %v1574 = vmul.f32 %v1572, %v349
        %v1575 = vmul.f32 %v1572, %v350
        %v1579 = vrot.slane %v1573, 4
        %v1580 = vrot.slane %v1574, 4
        %v1581 = vsel %vm480, %v1579, %v1580
        %v1582 = vrot.slane %v1575, 4
        %v1583 = vsel %vm480, %v1580, %v1582
        %1584 = vrot.lane.b32.xlu0 %v1581, 124
        %v1585 = vpop.permute.xlu0 %1584
        %1586 = vrot.lane.b32.xlu0 %v1583, 124
        %v1587 = vpop.permute.xlu0 %1586
        %v1590 = vadd.f32 %v1548, %v1585
        %v1591 = vadd.f32 %v1549, %v1587
        %s1592 = sld [smem:[#allocation5 + $0x41]]
        %v1593 = vstv %s1592
        %v1594 = vmul.f32 %v1593, %v352
        %v1595 = vmul.f32 %v1593, %v353
        %v1596 = vmul.f32 %v1593, %v354
        %v1600 = vrot.slane %v1594, 4
        %v1601 = vrot.slane %v1595, 4
        %v1602 = vsel %vm480, %v1600, %v1601
        %v1603 = vrot.slane %v1596, 4
        %v1604 = vsel %vm480, %v1601, %v1603
        %1605 = vrot.lane.b32.xlu0 %v1602, 124
        %v1606 = vpop.permute.xlu0 %1605
        %1607 = vrot.lane.b32.xlu0 %v1604, 124
        %v1608 = vpop.permute.xlu0 %1607
        %v1611 = vadd.f32 %v1569, %v1606
        %v1612 = vadd.f32 %v1570, %v1608
        %s1613 = sld [smem:[#allocation5 + $0x4e]]
        %v1614 = vstv %s1613
        %v1615 = vmul.f32 %v1614, %v348
        %v1616 = vmul.f32 %v1614, %v349
        %v1617 = vmul.f32 %v1614, %v350
        %v1621 = vrot.slane %v1615, 5
        %v1622 = vrot.slane %v1616, 5
        %v1623 = vsel %vm515, %v1621, %v1622
        %v1624 = vrot.slane %v1617, 5
        %v1625 = vsel %vm515, %v1622, %v1624
        %1626 = vrot.lane.b32.xlu0 %v1623, 124
        %v1627 = vpop.permute.xlu0 %1626
        %1628 = vrot.lane.b32.xlu0 %v1625, 124
        %v1629 = vpop.permute.xlu0 %1628
        %v1632 = vadd.f32 %v1590, %v1627
        %v1633 = vadd.f32 %v1591, %v1629
        %s1634 = sld [smem:[#allocation5 + $0x4f]]
        %v1635 = vstv %s1634
        %v1636 = vmul.f32 %v1635, %v352
        %v1637 = vmul.f32 %v1635, %v353
        %v1638 = vmul.f32 %v1635, %v354
        %v1642 = vrot.slane %v1636, 5
        %v1643 = vrot.slane %v1637, 5
        %v1644 = vsel %vm515, %v1642, %v1643
        %v1645 = vrot.slane %v1638, 5
        %v1646 = vsel %vm515, %v1643, %v1645
        %1647 = vrot.lane.b32.xlu0 %v1644, 124
        %v1648 = vpop.permute.xlu0 %1647
        %1649 = vrot.lane.b32.xlu0 %v1646, 124
        %v1650 = vpop.permute.xlu0 %1649
        %v1653 = vadd.f32 %v1611, %v1648
        %v1654 = vadd.f32 %v1612, %v1650
        %s1655 = sld [smem:[#allocation5 + $0x5c]]
        %v1656 = vstv %s1655
        %v1657 = vmul.f32 %v1656, %v348
        %v1658 = vmul.f32 %v1656, %v349
        %v1659 = vmul.f32 %v1656, %v350
        %v1663 = vrot.slane %v1657, 6
        %v1664 = vrot.slane %v1658, 6
        %v1665 = vsel %vm550, %v1663, %v1664
        %v1666 = vrot.slane %v1659, 6
        %v1667 = vsel %vm550, %v1664, %v1666
        %1668 = vrot.lane.b32.xlu0 %v1665, 124
        %v1669 = vpop.permute.xlu0 %1668
        %1670 = vrot.lane.b32.xlu0 %v1667, 124
        %v1671 = vpop.permute.xlu0 %1670
        %v1674 = vadd.f32 %v1632, %v1669
        %v1675 = vadd.f32 %v1633, %v1671
        %s1676 = sld [smem:[#allocation5 + $0x5d]]
        %v1677 = vstv %s1676
        %v1678 = vmul.f32 %v1677, %v352
        %v1679 = vmul.f32 %v1677, %v353
        %v1680 = vmul.f32 %v1677, %v354
        %v1684 = vrot.slane %v1678, 6
        %v1685 = vrot.slane %v1679, 6
        %v1686 = vsel %vm550, %v1684, %v1685
        %v1687 = vrot.slane %v1680, 6
        %v1688 = vsel %vm550, %v1685, %v1687
        %1689 = vrot.lane.b32.xlu0 %v1686, 124
        %v1690 = vpop.permute.xlu0 %1689
        %1691 = vrot.lane.b32.xlu0 %v1688, 124
        %v1692 = vpop.permute.xlu0 %1691
        %v1695 = vadd.f32 %v1653, %v1690
        %v1696 = vadd.f32 %v1654, %v1692
        %s1697 = sld [smem:[#allocation5 + $0xa]]
        %v1698 = vstv %s1697
        %v1699 = vmul.f32 %v1698, %v348
        %v1700 = vmul.f32 %v1698, %v349
        %1703 = vrot.lane.b32.xlu0 %v1699, 123
        %v1704 = vpop.permute.xlu0 %1703
        %1705 = vrot.lane.b32.xlu0 %v1700, 123
        %v1706 = vpop.permute.xlu0 %1705
        %v1709 = vadd.f32 %v1674, %v1704
        %v1710 = vadd.f32 %v1675, %v1706
        %s1711 = sld [smem:[#allocation5 + $0xb]]
        %v1712 = vstv %s1711
        %v1713 = vmul.f32 %v1712, %v352
        %v1714 = vmul.f32 %v1712, %v353
        %1717 = vrot.lane.b32.xlu0 %v1713, 123
        %v1718 = vpop.permute.xlu0 %1717
        %1719 = vrot.lane.b32.xlu0 %v1714, 123
        %v1720 = vpop.permute.xlu0 %1719
        %v1723 = vadd.f32 %v1695, %v1718
        %v1724 = vadd.f32 %v1696, %v1720
        %s1725 = sld [smem:[#allocation5 + $0x18]]
        %v1726 = vstv %s1725
        %v1727 = vmul.f32 %v1726, %v348
        %v1728 = vmul.f32 %v1726, %v349
        %v1729 = vmul.f32 %v1726, %v350
        %v1733 = vrot.slane %v1727, 1
        %v1734 = vrot.slane %v1728, 1
        %v1735 = vsel %vm375, %v1733, %v1734
        %v1736 = vrot.slane %v1729, 1
        %v1737 = vsel %vm375, %v1734, %v1736
        %1738 = vrot.lane.b32.xlu0 %v1735, 123
        %v1739 = vpop.permute.xlu0 %1738
        %1740 = vrot.lane.b32.xlu0 %v1737, 123
        %v1741 = vpop.permute.xlu0 %1740
        %v1744 = vadd.f32 %v1709, %v1739
        %v1745 = vadd.f32 %v1710, %v1741
        %s1746 = sld [smem:[#allocation5 + $0x19]]
        %v1747 = vstv %s1746
        %v1748 = vmul.f32 %v1747, %v352
        %v1749 = vmul.f32 %v1747, %v353
        %v1750 = vmul.f32 %v1747, %v354
        %v1754 = vrot.slane %v1748, 1
        %v1755 = vrot.slane %v1749, 1
        %v1756 = vsel %vm375, %v1754, %v1755
        %v1757 = vrot.slane %v1750, 1
        %v1758 = vsel %vm375, %v1755, %v1757
        %1759 = vrot.lane.b32.xlu0 %v1756, 123
        %v1760 = vpop.permute.xlu0 %1759
        %1761 = vrot.lane.b32.xlu0 %v1758, 123
        %v1762 = vpop.permute.xlu0 %1761
        %v1765 = vadd.f32 %v1723, %v1760
        %v1766 = vadd.f32 %v1724, %v1762
        %s1767 = sld [smem:[#allocation5 + $0x26]]
        %v1768 = vstv %s1767
        %v1769 = vmul.f32 %v1768, %v348
        %v1770 = vmul.f32 %v1768, %v349
        %v1771 = vmul.f32 %v1768, %v350
        %v1775 = vrot.slane %v1769, 2
        %v1776 = vrot.slane %v1770, 2
        %v1777 = vsel %vm410, %v1775, %v1776
        %v1778 = vrot.slane %v1771, 2
        %v1779 = vsel %vm410, %v1776, %v1778
        %1780 = vrot.lane.b32.xlu0 %v1777, 123
        %v1781 = vpop.permute.xlu0 %1780
        %1782 = vrot.lane.b32.xlu0 %v1779, 123
        %v1783 = vpop.permute.xlu0 %1782
        %v1786 = vadd.f32 %v1744, %v1781
        %v1787 = vadd.f32 %v1745, %v1783
        %s1788 = sld [smem:[#allocation5 + $0x27]]
        %v1789 = vstv %s1788
        %v1790 = vmul.f32 %v1789, %v352
        %v1791 = vmul.f32 %v1789, %v353
        %v1792 = vmul.f32 %v1789, %v354
        %v1796 = vrot.slane %v1790, 2
        %v1797 = vrot.slane %v1791, 2
        %v1798 = vsel %vm410, %v1796, %v1797
        %v1799 = vrot.slane %v1792, 2
        %v1800 = vsel %vm410, %v1797, %v1799
        %1801 = vrot.lane.b32.xlu0 %v1798, 123
        %v1802 = vpop.permute.xlu0 %1801
        %1803 = vrot.lane.b32.xlu0 %v1800, 123
        %v1804 = vpop.permute.xlu0 %1803
        %v1807 = vadd.f32 %v1765, %v1802
        %v1808 = vadd.f32 %v1766, %v1804
        %s1809 = sld [smem:[#allocation5 + $0x34]]
        %v1810 = vstv %s1809
        %v1811 = vmul.f32 %v1810, %v348
        %v1812 = vmul.f32 %v1810, %v349
        %v1813 = vmul.f32 %v1810, %v350
        %v1817 = vrot.slane %v1811, 3
        %v1818 = vrot.slane %v1812, 3
        %v1819 = vsel %vm445, %v1817, %v1818
        %v1820 = vrot.slane %v1813, 3
        %v1821 = vsel %vm445, %v1818, %v1820
        %1822 = vrot.lane.b32.xlu0 %v1819, 123
        %v1823 = vpop.permute.xlu0 %1822
        %1824 = vrot.lane.b32.xlu0 %v1821, 123
        %v1825 = vpop.permute.xlu0 %1824
        %v1828 = vadd.f32 %v1786, %v1823
        %v1829 = vadd.f32 %v1787, %v1825
        %s1830 = sld [smem:[#allocation5 + $0x35]]
        %v1831 = vstv %s1830
        %v1832 = vmul.f32 %v1831, %v352
        %v1833 = vmul.f32 %v1831, %v353
        %v1834 = vmul.f32 %v1831, %v354
        %v1838 = vrot.slane %v1832, 3
        %v1839 = vrot.slane %v1833, 3
        %v1840 = vsel %vm445, %v1838, %v1839
        %v1841 = vrot.slane %v1834, 3
        %v1842 = vsel %vm445, %v1839, %v1841
        %1843 = vrot.lane.b32.xlu0 %v1840, 123
        %v1844 = vpop.permute.xlu0 %1843
        %1845 = vrot.lane.b32.xlu0 %v1842, 123
        %v1846 = vpop.permute.xlu0 %1845
        %v1849 = vadd.f32 %v1807, %v1844
        %v1850 = vadd.f32 %v1808, %v1846
        %s1851 = sld [smem:[#allocation5 + $0x42]]
        %v1852 = vstv %s1851
        %v1853 = vmul.f32 %v1852, %v348
        %v1854 = vmul.f32 %v1852, %v349
        %v1855 = vmul.f32 %v1852, %v350
        %v1859 = vrot.slane %v1853, 4
        %v1860 = vrot.slane %v1854, 4
        %v1861 = vsel %vm480, %v1859, %v1860
        %v1862 = vrot.slane %v1855, 4
        %v1863 = vsel %vm480, %v1860, %v1862
        %1864 = vrot.lane.b32.xlu0 %v1861, 123
        %v1865 = vpop.permute.xlu0 %1864
        %1866 = vrot.lane.b32.xlu0 %v1863, 123
        %v1867 = vpop.permute.xlu0 %1866
        %v1870 = vadd.f32 %v1828, %v1865
        %v1871 = vadd.f32 %v1829, %v1867
        %s1872 = sld [smem:[#allocation5 + $0x43]]
        %v1873 = vstv %s1872
        %v1874 = vmul.f32 %v1873, %v352
        %v1875 = vmul.f32 %v1873, %v353
        %v1876 = vmul.f32 %v1873, %v354
        %v1880 = vrot.slane %v1874, 4
        %v1881 = vrot.slane %v1875, 4
        %v1882 = vsel %vm480, %v1880, %v1881
        %v1883 = vrot.slane %v1876, 4
        %v1884 = vsel %vm480, %v1881, %v1883
        %1885 = vrot.lane.b32.xlu0 %v1882, 123
        %v1886 = vpop.permute.xlu0 %1885
        %1887 = vrot.lane.b32.xlu0 %v1884, 123
        %v1888 = vpop.permute.xlu0 %1887
        %v1891 = vadd.f32 %v1849, %v1886
        %v1892 = vadd.f32 %v1850, %v1888
        %s1893 = sld [smem:[#allocation5 + $0x50]]
        %v1894 = vstv %s1893
        %v1895 = vmul.f32 %v1894, %v348
        %v1896 = vmul.f32 %v1894, %v349
        %v1897 = vmul.f32 %v1894, %v350
        %v1901 = vrot.slane %v1895, 5
        %v1902 = vrot.slane %v1896, 5
        %v1903 = vsel %vm515, %v1901, %v1902
        %v1904 = vrot.slane %v1897, 5
        %v1905 = vsel %vm515, %v1902, %v1904
        %1906 = vrot.lane.b32.xlu0 %v1903, 123
        %v1907 = vpop.permute.xlu0 %1906
        %1908 = vrot.lane.b32.xlu0 %v1905, 123
        %v1909 = vpop.permute.xlu0 %1908
        %v1912 = vadd.f32 %v1870, %v1907
        %v1913 = vadd.f32 %v1871, %v1909
        %s1914 = sld [smem:[#allocation5 + $0x51]]
        %v1915 = vstv %s1914
        %v1916 = vmul.f32 %v1915, %v352
        %v1917 = vmul.f32 %v1915, %v353
        %v1918 = vmul.f32 %v1915, %v354
        %v1922 = vrot.slane %v1916, 5
        %v1923 = vrot.slane %v1917, 5
        %v1924 = vsel %vm515, %v1922, %v1923
        %v1925 = vrot.slane %v1918, 5
        %v1926 = vsel %vm515, %v1923, %v1925
        %1927 = vrot.lane.b32.xlu0 %v1924, 123
        %v1928 = vpop.permute.xlu0 %1927
        %1929 = vrot.lane.b32.xlu0 %v1926, 123
        %v1930 = vpop.permute.xlu0 %1929
        %v1933 = vadd.f32 %v1891, %v1928
        %v1934 = vadd.f32 %v1892, %v1930
        %s1935 = sld [smem:[#allocation5 + $0x5e]]
        %v1936 = vstv %s1935
        %v1937 = vmul.f32 %v1936, %v348
        %v1938 = vmul.f32 %v1936, %v349
        %v1939 = vmul.f32 %v1936, %v350
        %v1943 = vrot.slane %v1937, 6
        %v1944 = vrot.slane %v1938, 6
        %v1945 = vsel %vm550, %v1943, %v1944
        %v1946 = vrot.slane %v1939, 6
        %v1947 = vsel %vm550, %v1944, %v1946
        %1948 = vrot.lane.b32.xlu0 %v1945, 123
        %v1949 = vpop.permute.xlu0 %1948
        %1950 = vrot.lane.b32.xlu0 %v1947, 123
        %v1951 = vpop.permute.xlu0 %1950
        %v1954 = vadd.f32 %v1912, %v1949
        %v1955 = vadd.f32 %v1913, %v1951
        %s1956 = sld [smem:[#allocation5 + $0x5f]]
        %v1957 = vstv %s1956
        %v1958 = vmul.f32 %v1957, %v352
        %v1959 = vmul.f32 %v1957, %v353
        %v1960 = vmul.f32 %v1957, %v354
        %v1964 = vrot.slane %v1958, 6
        %v1965 = vrot.slane %v1959, 6
        %v1966 = vsel %vm550, %v1964, %v1965
        %v1967 = vrot.slane %v1960, 6
        %v1968 = vsel %vm550, %v1965, %v1967
        %1969 = vrot.lane.b32.xlu0 %v1966, 123
        %v1970 = vpop.permute.xlu0 %1969
        %1971 = vrot.lane.b32.xlu0 %v1968, 123
        %v1972 = vpop.permute.xlu0 %1971
        %v1975 = vadd.f32 %v1933, %v1970
        %v1976 = vadd.f32 %v1934, %v1972
        %s1977 = sld [smem:[#allocation5 + $0xc]]
        %v1978 = vstv %s1977
        %v1979 = vmul.f32 %v1978, %v348
        %v1980 = vmul.f32 %v1978, %v349
        %1983 = vrot.lane.b32.xlu0 %v1979, 122
        %v1984 = vpop.permute.xlu0 %1983
        %1985 = vrot.lane.b32.xlu0 %v1980, 122
        %v1986 = vpop.permute.xlu0 %1985
        %v1989 = vadd.f32 %v1954, %v1984
        %v1990 = vadd.f32 %v1955, %v1986
        %s1991 = sld [smem:[#allocation5 + $0xd]]
        %v1992 = vstv %s1991
        %v1993 = vmul.f32 %v1992, %v352
        %v1994 = vmul.f32 %v1992, %v353
        %1997 = vrot.lane.b32.xlu0 %v1993, 122
        %v1998 = vpop.permute.xlu0 %1997
        %1999 = vrot.lane.b32.xlu0 %v1994, 122
        %v2000 = vpop.permute.xlu0 %1999
        %v2003 = vadd.f32 %v1975, %v1998
        %v2004 = vadd.f32 %v1976, %v2000
        %s2005 = sld [smem:[#allocation5 + $0x1a]]
        %v2006 = vstv %s2005
        %v2007 = vmul.f32 %v2006, %v348
        %v2008 = vmul.f32 %v2006, %v349
        %v2009 = vmul.f32 %v2006, %v350
        %v2013 = vrot.slane %v2007, 1
        %v2014 = vrot.slane %v2008, 1
        %v2015 = vsel %vm375, %v2013, %v2014
        %v2016 = vrot.slane %v2009, 1
        %v2017 = vsel %vm375, %v2014, %v2016
        %2018 = vrot.lane.b32.xlu0 %v2015, 122
        %v2019 = vpop.permute.xlu0 %2018
        %2020 = vrot.lane.b32.xlu0 %v2017, 122
        %v2021 = vpop.permute.xlu0 %2020
        %v2024 = vadd.f32 %v1989, %v2019
        %v2025 = vadd.f32 %v1990, %v2021
        %s2026 = sld [smem:[#allocation5 + $0x1b]]
        %v2027 = vstv %s2026
        %v2028 = vmul.f32 %v2027, %v352
        %v2029 = vmul.f32 %v2027, %v353
        %v2030 = vmul.f32 %v2027, %v354
        %v2034 = vrot.slane %v2028, 1
        %v2035 = vrot.slane %v2029, 1
        %v2036 = vsel %vm375, %v2034, %v2035
        %v2037 = vrot.slane %v2030, 1
        %v2038 = vsel %vm375, %v2035, %v2037
        %2039 = vrot.lane.b32.xlu0 %v2036, 122
        %v2040 = vpop.permute.xlu0 %2039
        %2041 = vrot.lane.b32.xlu0 %v2038, 122
        %v2042 = vpop.permute.xlu0 %2041
        %v2045 = vadd.f32 %v2003, %v2040
        %v2046 = vadd.f32 %v2004, %v2042
        %s2047 = sld [smem:[#allocation5 + $0x28]]
        %v2048 = vstv %s2047
        %v2049 = vmul.f32 %v2048, %v348
        %v2050 = vmul.f32 %v2048, %v349
        %v2051 = vmul.f32 %v2048, %v350
        %v2055 = vrot.slane %v2049, 2
        %v2056 = vrot.slane %v2050, 2
        %v2057 = vsel %vm410, %v2055, %v2056
        %v2058 = vrot.slane %v2051, 2
        %v2059 = vsel %vm410, %v2056, %v2058
        %2060 = vrot.lane.b32.xlu0 %v2057, 122
        %v2061 = vpop.permute.xlu0 %2060
        %2062 = vrot.lane.b32.xlu0 %v2059, 122
        %v2063 = vpop.permute.xlu0 %2062
        %v2066 = vadd.f32 %v2024, %v2061
        %v2067 = vadd.f32 %v2025, %v2063
        %s2068 = sld [smem:[#allocation5 + $0x29]]
        %v2069 = vstv %s2068
        %v2070 = vmul.f32 %v2069, %v352
        %v2071 = vmul.f32 %v2069, %v353
        %v2072 = vmul.f32 %v2069, %v354
        %v2076 = vrot.slane %v2070, 2
        %v2077 = vrot.slane %v2071, 2
        %v2078 = vsel %vm410, %v2076, %v2077
        %v2079 = vrot.slane %v2072, 2
        %v2080 = vsel %vm410, %v2077, %v2079
        %2081 = vrot.lane.b32.xlu0 %v2078, 122
        %v2082 = vpop.permute.xlu0 %2081
        %2083 = vrot.lane.b32.xlu0 %v2080, 122
        %v2084 = vpop.permute.xlu0 %2083
        %v2087 = vadd.f32 %v2045, %v2082
        %v2088 = vadd.f32 %v2046, %v2084
        %s2089 = sld [smem:[#allocation5 + $0x36]]
        %v2090 = vstv %s2089
        %v2091 = vmul.f32 %v2090, %v348
        %v2092 = vmul.f32 %v2090, %v349
        %v2093 = vmul.f32 %v2090, %v350
        %v2097 = vrot.slane %v2091, 3
        %v2098 = vrot.slane %v2092, 3
        %v2099 = vsel %vm445, %v2097, %v2098
        %v2100 = vrot.slane %v2093, 3
        %v2101 = vsel %vm445, %v2098, %v2100
        %2102 = vrot.lane.b32.xlu0 %v2099, 122
        %v2103 = vpop.permute.xlu0 %2102
        %2104 = vrot.lane.b32.xlu0 %v2101, 122
        %v2105 = vpop.permute.xlu0 %2104
        %v2108 = vadd.f32 %v2066, %v2103
        %v2109 = vadd.f32 %v2067, %v2105
        %s2110 = sld [smem:[#allocation5 + $0x37]]
        %v2111 = vstv %s2110
        %v2112 = vmul.f32 %v2111, %v352
        %v2113 = vmul.f32 %v2111, %v353
        %v2114 = vmul.f32 %v2111, %v354
        %v2118 = vrot.slane %v2112, 3
        %v2119 = vrot.slane %v2113, 3
        %v2120 = vsel %vm445, %v2118, %v2119
        %v2121 = vrot.slane %v2114, 3
        %v2122 = vsel %vm445, %v2119, %v2121
        %2123 = vrot.lane.b32.xlu0 %v2120, 122
        %v2124 = vpop.permute.xlu0 %2123
        %2125 = vrot.lane.b32.xlu0 %v2122, 122
        %v2126 = vpop.permute.xlu0 %2125
        %v2129 = vadd.f32 %v2087, %v2124
        %v2130 = vadd.f32 %v2088, %v2126
        %s2131 = sld [smem:[#allocation5 + $0x44]]
        %v2132 = vstv %s2131
        %v2133 = vmul.f32 %v2132, %v348
        %v2134 = vmul.f32 %v2132, %v349
        %v2135 = vmul.f32 %v2132, %v350
        %v2139 = vrot.slane %v2133, 4
        %v2140 = vrot.slane %v2134, 4
        %v2141 = vsel %vm480, %v2139, %v2140
        %v2142 = vrot.slane %v2135, 4
        %v2143 = vsel %vm480, %v2140, %v2142
        %2144 = vrot.lane.b32.xlu0 %v2141, 122
        %v2145 = vpop.permute.xlu0 %2144
        %2146 = vrot.lane.b32.xlu0 %v2143, 122
        %v2147 = vpop.permute.xlu0 %2146
        %v2150 = vadd.f32 %v2108, %v2145
        %v2151 = vadd.f32 %v2109, %v2147
        %s2152 = sld [smem:[#allocation5 + $0x45]]
        %v2153 = vstv %s2152
        %v2154 = vmul.f32 %v2153, %v352
        %v2155 = vmul.f32 %v2153, %v353
        %v2156 = vmul.f32 %v2153, %v354
        %v2160 = vrot.slane %v2154, 4
        %v2161 = vrot.slane %v2155, 4
        %v2162 = vsel %vm480, %v2160, %v2161
        %v2163 = vrot.slane %v2156, 4
        %v2164 = vsel %vm480, %v2161, %v2163
        %2165 = vrot.lane.b32.xlu0 %v2162, 122
        %v2166 = vpop.permute.xlu0 %2165
        %2167 = vrot.lane.b32.xlu0 %v2164, 122
        %v2168 = vpop.permute.xlu0 %2167
        %v2171 = vadd.f32 %v2129, %v2166
        %v2172 = vadd.f32 %v2130, %v2168
        %s2173 = sld [smem:[#allocation5 + $0x52]]
        %v2174 = vstv %s2173
        %v2175 = vmul.f32 %v2174, %v348
        %v2176 = vmul.f32 %v2174, %v349
        %v2177 = vmul.f32 %v2174, %v350
        %v2181 = vrot.slane %v2175, 5
        %v2182 = vrot.slane %v2176, 5
        %v2183 = vsel %vm515, %v2181, %v2182
        %v2184 = vrot.slane %v2177, 5
        %v2185 = vsel %vm515, %v2182, %v2184
        %2186 = vrot.lane.b32.xlu0 %v2183, 122
        %v2187 = vpop.permute.xlu0 %2186
        %2188 = vrot.lane.b32.xlu0 %v2185, 122
        %v2189 = vpop.permute.xlu0 %2188
        %v2192 = vadd.f32 %v2150, %v2187
        %v2193 = vadd.f32 %v2151, %v2189
        %s2194 = sld [smem:[#allocation5 + $0x53]]
        %v2195 = vstv %s2194
        %v2196 = vmul.f32 %v2195, %v352
        %v2197 = vmul.f32 %v2195, %v353
        %v2198 = vmul.f32 %v2195, %v354
        %v2202 = vrot.slane %v2196, 5
        %v2203 = vrot.slane %v2197, 5
        %v2204 = vsel %vm515, %v2202, %v2203
        %v2205 = vrot.slane %v2198, 5
        %v2206 = vsel %vm515, %v2203, %v2205
        %2207 = vrot.lane.b32.xlu0 %v2204, 122
        %v2208 = vpop.permute.xlu0 %2207
        %2209 = vrot.lane.b32.xlu0 %v2206, 122
        %v2210 = vpop.permute.xlu0 %2209
        %v2213 = vadd.f32 %v2171, %v2208
        %v2214 = vadd.f32 %v2172, %v2210
        %s2215 = sld [smem:[#allocation5 + $0x60]]
        %v2216 = vstv %s2215
        %v2217 = vmul.f32 %v2216, %v348
        %v2218 = vmul.f32 %v2216, %v349
        %v2219 = vmul.f32 %v2216, %v350
        %v2223 = vrot.slane %v2217, 6
        %v2224 = vrot.slane %v2218, 6
        %v2225 = vsel %vm550, %v2223, %v2224
        %v2226 = vrot.slane %v2219, 6
        %v2227 = vsel %vm550, %v2224, %v2226
        %2228 = vrot.lane.b32.xlu0 %v2225, 122
        %v2229 = vpop.permute.xlu0 %2228
        %2230 = vrot.lane.b32.xlu0 %v2227, 122
        %v2231 = vpop.permute.xlu0 %2230
        %v2234 = vadd.f32 %v2192, %v2229
        %v2235 = vadd.f32 %v2193, %v2231
        %s2236 = sld [smem:[#allocation5 + $0x61]]
        %v2237 = vstv %s2236
        %v2238 = vmul.f32 %v2237, %v352
        %v2239 = vmul.f32 %v2237, %v353
        %v2240 = vmul.f32 %v2237, %v354
        %v2244 = vrot.slane %v2238, 6
        %v2245 = vrot.slane %v2239, 6
        %v2246 = vsel %vm550, %v2244, %v2245
        %v2247 = vrot.slane %v2240, 6
        %v2248 = vsel %vm550, %v2245, %v2247
        %2249 = vrot.lane.b32.xlu0 %v2246, 122
        %v2250 = vpop.permute.xlu0 %2249
        %2251 = vrot.lane.b32.xlu0 %v2248, 122
        %v2252 = vpop.permute.xlu0 %2251
        %v2255 = vadd.f32 %v2213, %v2250
        %v2256 = vadd.f32 %v2214, %v2252
        %v2257 = vadd.f32 %v2234, %v2255
        %v2258 = vadd.f32 %v2235, %v2256
        %v2259 = vxor.u32 %v2257, 2147483648
        %v2260 = vxor.u32 %v2258, 2147483648
        %v2261 = vmul.f32 %v2259, 1.442695
        %v2262 = vpow.pop %v2261
        %v2263 = vmul.f32 %v2260, 1.442695
        %v2264 = vpow.pop %v2263
        %v2265 = vadd.f32 %v2262, 1.0
        %v2266 = vadd.f32 %v2264, 1.0
        %v2267 = vrcp.pop %v2265
        %v2268 = vmul.f32 1.0, %v2267
        %v2269 = vrcp.pop %v2266
        %v2270 = vmul.f32 1.0, %v2269
        %v2271 = vld [vmem:[%s296] sm:$0xff]
        %v2272 = vld [vmem:[%s296 + $0x8] sm:$0xff]
        %v2273 = vmul.f32 %v2268, %v2271
        %v2274 = vmul.f32 %v2270, %v2272
        %s2275 = sld [smem:[#allocation4]]
        %v2276 = vstv %s2275
        %v2277 = vadd.f32 %v2273, %v2276
        %v2278 = vadd.f32 %v2274, %v2276
        %v2279 = vxor.u32 %v2277, 2147483648
        %v2280 = vxor.u32 %v2278, 2147483648
        %v2281 = vmul.f32 %v2279, 1.442695
        %v2282 = vpow.pop %v2281
        %v2283 = vmul.f32 %v2280, 1.442695
        %v2284 = vpow.pop %v2283
        %v2285 = vadd.f32 %v2282, 1.0
        %v2286 = vadd.f32 %v2284, 1.0
        %v2287 = vrcp.pop %v2285
        %v2288 = vmul.f32 1.0, %v2287
        %v2289 = vrcp.pop %v2286
        %v2290 = vmul.f32 1.0, %v2289
        %vm2291 = vcmask 130048
        %2292 = vst.msk [vmem:[%s287] sm:$0xff] %vm2291, %v2288
        %2293 = vst.msk [vmem:[%s287 + $0x8] sm:$0xff] %vm2291, %v2290
        %s2294 = sand.u32 %s165, 1
        %s2295 = scalar_lea.sflag [#allocation6], %s2294
        %s2296 = sand.u32 %s165, 1
        %s2297 = smul.addr %s2296, 16
        %s2298 = scalar_lea.vmem [#allocation8], %s2297
        // Predicated region
        $region49: #{attnet_forward.5} parent=39 // pred_check
          %p2299 = pneg %p175
        $region50: #{attnet_forward.5} parent=39 // pred_check_branch
          %2301 = sbr.rel (%p2299) target = $region52
        $region51: #{attnet_forward.5} parent=39 // pred_region
          %s2302 = smul.u32 2, %s26
          %s2304 = ssub.s32 256, 256
          %2305 = vsyncadd %s2295, %s2304
          %s2306 = smul.addr %s25, 2
          %s2307 = sadd.s32 %s2302, %s2306
          %s2308 = smul.addr %s2307, 128
          %s2309 = scalar_lea.hbm %s5, %s2308
          %s2310 = sshll.u32 %s2298, 4
          %s2311 = int_to_ptr.vmem [resolvable:$true] %s2310
          %2316 = dma.vmem_to_hbm [thread:$0]  %s2311, 256, %s2309, %s2295, 128, 128, 8
        $region52: #{attnet_forward.5} parent=39 // pred_fallthru
          _
      $region40: #{attnet_forward.5} parent=5 // pred_fallthru
        _
      %p2317 = scmp.le.s32.totalorder 2, %s16
      // Predicated region
      $region53: #{attnet_forward.5} parent=5 // pred_check
        %p2318 = pneg %p2317
      $region54: #{attnet_forward.5} parent=5 // pred_check_branch
        %2320 = sbr.rel (%p2318) target = $region56
      $region55: #{attnet_forward.5} parent=5 // pred_region
        %s2321 = ssub.s32 %s16, 2
        // Predicated region
        $region57: #{attnet_forward.5} parent=55 // pred_check
          %p2322 = pneg %p181
        $region58: #{attnet_forward.5} parent=55 // pred_check_branch
          %2324 = sbr.rel (%p2322) target = $region60
        $region59: #{attnet_forward.5} parent=55 // pred_region
          %s2325 = sand.u32 %s166, 1
          %s2326 = scalar_lea.sflag [#allocation6], %s2325
          %s2327 = sand.u32 %s166, 1
          %s2328 = smul.addr %s2327, 16
          %s2329 = scalar_lea.vmem [#allocation8], %s2328
          %2330 = dma.done %s2326, 256
        $region60: #{attnet_forward.5} parent=55 // pred_fallthru
          _
      $region56: #{attnet_forward.5} parent=5 // pred_fallthru
        _
    $region6: #{attnet_forward.5} parent=1 // loop_footer
      %s20 = sadd.s32 1, %s16
    $region7: #{attnet_forward.5} parent=1 // loop_footer_branch
      %15 = sbr.rel target = $region3
    $region8: #{attnet_forward.5} parent=1 // loop_exit
      _
    %2331 = vsyncpa [#allocation6], 1
    %s2332 = scalar_lea.sflag [#allocation6], 1
    %2333 = vsyncpa %s2332, 1
    %2334 = vsyncpa [#allocation7], 1
    %s2335 = scalar_lea.sflag [#allocation7], 1
    %2336 = vsyncpa %s2335, 1

</llo_original>
